<compile_context>
chip_gen: v6e
topology: v6e:2x2x1
jax: 0.10.0
libtpu: 0.0.40
codegen_flags: <defaults>
</compile_context>

<pallas_src>
import math

import jax
import jax.numpy as jnp
from jax import lax
from jax.experimental import pallas as pl
from jax.experimental.pallas import tpu as pltpu

# ----------------------------- model config (small, synthetic) -----------------------------
CATEGORICAL_DIMS = [10, 20]
EMBEDDING_DIMS = [8, 12]          # already <= 50, matches min(50, dim)
NUMERICAL_DIM = 4
TRANSFORMER_DIM = 32
FF_DIM = 64
HEAD_HIDDEN_DIMS = [32, 16]
BATCH = 8
TOURED_K, APPLIED_K, RENTED_K = 4, 2, 1
BN_EPS = 1e-5
LN_EPS = 1e-5

NUM_BLOCKS = 9                    # 2 shared + 3 toured + 2 applied + 2 rented
D = TRANSFORMER_DIM               # 32
F = FF_DIM                        # 64
H1 = HEAD_HIDDEN_DIMS[0]          # 32
H2 = HEAD_HIDDEN_DIMS[1]          # 16
HCAT = 3 * H1                     # 96  (three heads packed along lanes)
OUT_LANES = 128                   # lane-dense output slab width

EMB_TOTAL = sum(EMBEDDING_DIMS)   # 20
TOTAL_IN = EMB_TOTAL + NUMERICAL_DIM  # 24

# packed-buffer row layouts
BLK_ROWS = 2 * D + F + 8          # 136 = WA(32) + W1(32) + W2(64) + VEC(8)
MISC_ROWS = TOTAL_IN + D + F + 8  # 128 = proj_w(24) + enh_w1(32) + enh_w2(64) + vec(8)
HEAD_ROWS = 296                   # 3*96 weight rows + 3 bias rows + pad to mult of 8


# ----------------------------- in-kernel helpers -----------------------------
def _layernorm(h, g, b):
    # single-pass: two independent cross-lane reductions -> XLU ops issue back-to-back
    mu = jnp.mean(h, axis=-1, keepdims=True)
    m2 = jnp.mean(h * h, axis=-1, keepdims=True)
    var = jnp.maximum(m2 - mu * mu, 0.0)
    return (h - mu) * lax.rsqrt(var + LN_EPS) * g + b


def _gelu(x):
    # TODO(synk): PyTorch nn.GELU defaults to the exact erf form; tanh approximation is used
    # for a Mosaic-friendly lowering (max abs deviation ~1e-3).
    return jax.nn.gelu(x, approximate=True)


# ----------------------------- the single fused Pallas kernel -----------------------------
def fused_forward_kernel(x_ref, blk_ref, misc_ref, head_ref, o_ref):
    misc = misc_ref[...]                                # (128, 64) packed misc slab
    proj_w = misc[0:TOTAL_IN, 0:D]
    enh_w1 = misc[TOTAL_IN:TOTAL_IN + D, :]             # (32, 64)
    enh_w2 = misc[TOTAL_IN + D:TOTAL_IN + D + F, 0:D]   # (64, 32)
    mvec = misc[TOTAL_IN + D + F:MISC_ROWS, :]          # (8, 64) misc vectors

    def transformer_block(h, idx):
        blk = blk_ref[idx]                              # (136, 64) per-block slab
        wa = blk[0:D, 0:D]                              # folded Wv @ Wo (exact)
        w1 = blk[D:2 * D, :]                            # (32, 64)
        w2 = blk[2 * D:2 * D + F, 0:D]                  # (64, 32)
        vec = blk[2 * D + F:BLK_ROWS, :]                # (8, 64) per-block vectors
        ba = vec[0:1, 0:D]                              # folded bv @ Wo + bo
        g1, be1 = vec[1:2, 0:D], vec[2:3, 0:D]
        b1 = vec[3:4, :]
        b2 = vec[4:5, 0:D]
        g2, be2 = vec[5:6, 0:D], vec[6:7, 0:D]

        # TODO(synk): torch.nan_to_num at block input/output skipped (all values finite here).
        h = jnp.clip(h, -100.0, 100.0)
        # seq_len == 1 MHA collapses to out_proj(v_proj(h)); Wv·Wo folded at init (exact).
        attn = jnp.dot(h, wa, preferred_element_type=jnp.float32) + ba
        attn = jnp.clip(attn, -100.0, 100.0)
        h1 = _layernorm(h + attn, g1, be1)
        u = _gelu(jnp.dot(h1, w1, preferred_element_type=jnp.float32) + b1)
        f = jnp.dot(u, w2, preferred_element_type=jnp.float32) + b2
        f = jnp.clip(f, -100.0, 100.0)
        out = _layernorm(h1 + f, g2, be2)
        # mean over the length-1 sequence dim is the identity
        return jnp.clip(out, -100.0, 100.0)

    # projection (the eval-mode numerical BatchNorm affine is pre-folded into proj_w)
    x = jnp.dot(x_ref[...], proj_w, preferred_element_type=jnp.float32) + mvec[0:1, 0:D]

    # shared transformer: blocks 0..1
    for i in range(2):
        x = transformer_block(x, i)
    shared = x

    # toured branch: blocks 2..4, toured_attention_norm, feature enhancement MLP
    t = shared
    for i in range(2, 5):
        t = transformer_block(t, i)
    t = jnp.clip(t, -10.0, 10.0)
    t = _layernorm(t, mvec[1:2, 0:D], mvec[2:3, 0:D])
    u = jnp.dot(t, enh_w1, preferred_element_type=jnp.float32) + mvec[3:4, :]
    u = _gelu(_layernorm(u, mvec[4:5, :], mvec[5:6, :]))
    t = jnp.dot(u, enh_w2, preferred_element_type=jnp.float32) + mvec[6:7, 0:D]
    t = jnp.clip(t, -10.0, 10.0)                        # nan_to_num skipped: values finite

    # applied branch: blocks 5..6 (training path: all leads)
    a = shared
    for i in range(5, 7):
        a = transformer_block(a, i)

    # rented branch: blocks 7..8
    r = shared
    for i in range(7, 9):
        r = transformer_block(r, i)

    # ---- three prediction heads, block-diagonal packed (exact: ReLU/bias are per-lane) ----
    head = head_ref[...]                                # (296, 128) packed head slab
    hw1 = head[0:HCAT, 0:HCAT]
    hw2 = head[HCAT:2 * HCAT, 0:HCAT]
    wfin = head[2 * HCAT:3 * HCAT, :]                   # (96, 128): head h -> column h
    hb1 = head[3 * HCAT:3 * HCAT + 1, 0:HCAT]
    hb2 = head[3 * HCAT + 1:3 * HCAT + 2, 0:HCAT]
    bfin = head[3 * HCAT + 2:3 * HCAT + 3, :]

    cat = jnp.concatenate([t, a, r], axis=-1)           # (B, 96)
    hh = jnp.maximum(jnp.dot(cat, hw1, preferred_element_type=jnp.float32) + hb1, 0.0)
    hh = jnp.maximum(jnp.dot(hh, hw2, preferred_element_type=jnp.float32) + hb2, 0.0)
    logits = jnp.dot(hh, wfin, preferred_element_type=jnp.float32) + bfin
    preds = jnp.clip(jax.nn.sigmoid(logits), 1e-6, 1.0 - 1e-6)
    o_ref[...] = preds                                  # single unmasked (B, 128) store


# ----------------------------- pallas_call plumbing -----------------------------
def _vmem_spec():
    return pl.BlockSpec(memory_space=pltpu.MemorySpace.VMEM)


def fused_forward(x_in, p):
    args = (x_in, p["blocks_buf"], p["misc_buf"], p["head_buf"])
    return pl.pallas_call(
        fused_forward_kernel,
        out_shape=jax.ShapeDtypeStruct((x_in.shape[0], OUT_LANES), jnp.float32),
        in_specs=[_vmem_spec() for _ in args],
        out_specs=_vmem_spec(),
    )(*args)


# ----------------------------- deterministic parameter init & packing -----------------------------
def _xavier(key, shape, gain):
    fan_in, fan_out = shape[0], shape[1]
    a = gain * math.sqrt(6.0 / (fan_in + fan_out))
    return jax.random.uniform(key, shape, jnp.float32, -a, a)


def _pad_lanes(m, width):
    return jnp.pad(m, ((0, 0), (0, width - m.shape[1])))


def _pad_row(v, width):
    return jnp.pad(v, (0, width - v.shape[0]))


def _init_block_slab(key):
    ks = jax.random.split(key, 4)
    wv = _xavier(ks[0], (D, D), 0.05)
    bv = jnp.zeros((D,), jnp.float32)
    wo = _xavier(ks[1], (D, D), 0.05)
    bo = jnp.zeros((D,), jnp.float32)
    w1 = _xavier(ks[2], (D, F), 0.1)
    b1 = jnp.zeros((F,), jnp.float32)
    w2 = _xavier(ks[3], (F, D), 0.1)
    b2 = jnp.zeros((D,), jnp.float32)
    g1 = jnp.ones((D,), jnp.float32); be1 = jnp.zeros((D,), jnp.float32)
    g2 = jnp.ones((D,), jnp.float32); be2 = jnp.zeros((D,), jnp.float32)
    # exact fold: out_proj(v_proj(h)) = h @ (Wv @ Wo) + (bv @ Wo + bo)
    wa = wv @ wo
    ba = bv @ wo + bo
    vec = jnp.stack([
        _pad_row(ba, F), _pad_row(g1, F), _pad_row(be1, F), b1,
        _pad_row(b2, F), _pad_row(g2, F), _pad_row(be2, F),
        jnp.zeros((F,), jnp.float32),
    ])                                                   # (8, 64)
    return jnp.concatenate(
        [_pad_lanes(wa, F), w1, _pad_lanes(w2, F), vec], axis=0)   # (136, 64)


def _init_misc_buf(kproj, kenh1, kenh2):
    bn = (1.0 + BN_EPS) ** -0.5
    proj_w = _xavier(kproj, (TOTAL_IN, D), 0.1)
    # Fold the eval-mode numerical BatchNorm affine (running_mean=0, running_var=1,
    # gamma=1, beta=0) into the projection rows consuming the numerical features (exact).
    proj_w = proj_w.at[EMB_TOTAL:, :].multiply(bn)
    proj_b = jnp.zeros((D,), jnp.float32)
    enh_w1 = _xavier(kenh1, (D, 2 * D), 0.1)             # (32, 64)
    enh_w2 = _xavier(kenh2, (2 * D, D), 0.1)             # (64, 32)
    mvec = jnp.stack([
        _pad_row(proj_b, F),                             # row 0: projection bias
        _pad_row(jnp.ones((D,), jnp.float32), F),        # row 1: toured_attention_norm gamma
        _pad_row(jnp.zeros((D,), jnp.float32), F),       # row 2: toured_attention_norm beta
        jnp.zeros((F,), jnp.float32),                    # row 3: enhancement Linear1 bias
        jnp.ones((F,), jnp.float32),                     # row 4: enhancement LayerNorm gamma
        jnp.zeros((F,), jnp.float32),                    # row 5: enhancement LayerNorm beta
        _pad_row(jnp.zeros((D,), jnp.float32), F),       # row 6: enhancement Linear2 bias
        jnp.zeros((F,), jnp.float32),                    # row 7: unused padding
    ])                                                   # (8, 64)
    return jnp.concatenate(
        [_pad_lanes(proj_w, F), enh_w1, _pad_lanes(enh_w2, F), mvec], axis=0)  # (128, 64)


def _init_head_buf(keys):
    # Each PredictionHead: Linear(32->32)+BN+ReLU+Dropout, Linear(32->16)+BN+ReLU+Dropout,
    # Linear(16->1)+Sigmoid. Eval BN (mean=0, var=1, gamma=1, beta=0) folded into the Linears.
    bn = (1.0 + BN_EPS) ** -0.5
    hw1 = jnp.zeros((HCAT, HCAT), jnp.float32)
    hw2 = jnp.zeros((HCAT, HCAT), jnp.float32)
    wfin = jnp.zeros((HCAT, OUT_LANES), jnp.float32)
    for h, k in enumerate(keys):
        k1, k2, k3 = jax.random.split(k, 3)
        w1 = _xavier(k1, (D, H1), 0.1) * bn
        w2 = _xavier(k2, (H1, H2), 0.1) * bn
        wf = _xavier(k3, (H2, 1), 0.1)
        hw1 = hw1.at[H1 * h:H1 * h + H1, H1 * h:H1 * h + H1].set(w1)
        hw2 = hw2.at[H1 * h:H1 * h + H1, H1 * h:H1 * h + H2].set(w2)
        wfin = wfin.at[H1 * h:H1 * h + H2, h].set(wf[:, 0])
    hb1 = jnp.zeros((1, OUT_LANES), jnp.float32)         # head biases (zero at init)
    hb2 = jnp.zeros((1, OUT_LANES), jnp.float32)
    bfin = jnp.zeros((1, OUT_LANES), jnp.float32)
    pad = jnp.zeros((HEAD_ROWS - 3 * HCAT - 3, OUT_LANES), jnp.float32)
    return jnp.concatenate(
        [_pad_lanes(hw1, OUT_LANES), _pad_lanes(hw2, OUT_LANES), wfin,
         hb1, hb2, bfin, pad], axis=0)                   # (296, 128)


def init_params(key):
    ks = jax.random.split(key, 6)
    embeddings = [
        0.01 * jax.random.normal(k, (vocab, e), jnp.float32)
        for k, vocab, e in zip(jax.random.split(ks[0], len(CATEGORICAL_DIMS)),
                               CATEGORICAL_DIMS, EMBEDDING_DIMS)
    ]
    # block order: shared x2, toured x3, applied x2, rented x2
    blocks_buf = jnp.stack(
        [_init_block_slab(k) for k in jax.random.split(ks[1], NUM_BLOCKS)])   # (9, 136, 64)
    misc_buf = _init_misc_buf(ks[2], ks[3], ks[4])                            # (128, 64)
    head_buf = _init_head_buf(jax.random.split(ks[5], 3))                     # (296, 128)
    # Note: the PyTorch module also defines `toured_attention` (MultiheadAttention) but never
    # calls it in forward, so it is not instantiated here.
    return dict(embeddings=embeddings, blocks_buf=blocks_buf,
                misc_buf=misc_buf, head_buf=head_buf)


# ----------------------------- forward (is_training=True cascade path) -----------------------------
def forward(params, categorical_inputs, numerical_inputs):
    batch = categorical_inputs.shape[0]

    # EmbeddingLayer gathers stay in XLA (data-dependent lookup); the numerical BatchNorm
    # affine is folded into the projection weights consumed by the fused kernel.
    feats = []
    for i, table in enumerate(params["embeddings"]):
        idx = jnp.clip(categorical_inputs[:, i].astype(jnp.int32), 0, table.shape[0] - 1)
        feats.append(table[idx])
    feats.append(numerical_inputs.astype(jnp.float32))
    x_in = jnp.concatenate(feats, axis=1)

    preds = fused_forward(x_in, params)                 # (batch, 128) lane-dense slab
    toured_pred = preds[:, 0:1]
    applied_pred = preds[:, 1:2]
    rented_pred = preds[:, 2:3]

    # Cascaded top-k selection (is_training=True branch of the reference forward).
    # TODO(synk): the ~1e-6 Gaussian tie-break noise before topk is omitted (deterministic).
    k_toured = min(TOURED_K, batch)
    _, toured_indices = lax.top_k(toured_pred[:, 0], k_toured)
    k_applied = min(APPLIED_K, k_toured)
    _, applied_local = lax.top_k(applied_pred[toured_indices, 0], k_applied)
    applied_indices = toured_indices[applied_local]
    k_rented = min(RENTED_K, k_applied)
    _, rented_local = lax.top_k(rented_pred[applied_indices, 0], k_rented)
    rented_indices = applied_indices[rented_local]

    return (toured_pred, applied_pred, rented_pred,
            toured_indices, applied_indices, rented_indices)


# ----------------------------- main -----------------------------
if __name__ == "__main__":
    key = jax.random.PRNGKey(0)
    kp, kc, kn = jax.random.split(key, 3)
    params = init_params(kp)

    categorical_inputs = jax.random.randint(
        kc, (BATCH, len(CATEGORICAL_DIMS)), 0, max(CATEGORICAL_DIMS), dtype=jnp.int32)
    numerical_inputs = jax.random.normal(kn, (BATCH, NUMERICAL_DIM), dtype=jnp.float32)

    fwd = jax.jit(forward)
    outs = fwd(params, categorical_inputs, numerical_inputs)
    outs = jax.tree_util.tree_map(lambda a: a.block_until_ready(), outs)

    toured_pred, applied_pred, rented_pred, ti, ai, ri = outs
    assert toured_pred.shape == (BATCH, 1)
    assert applied_pred.shape == (BATCH, 1)
    assert rented_pred.shape == (BATCH, 1)
    assert ti.shape == (min(TOURED_K, BATCH),)
    assert ai.shape == (min(APPLIED_K, TOURED_K),)
    assert ri.shape == (min(RENTED_K, APPLIED_K),)
    assert bool(jnp.all(jnp.isfinite(toured_pred)))
    assert bool(jnp.all((toured_pred >= 1e-6) & (toured_pred <= 1.0 - 1e-6)))
    print("KERNEL_OK")
</pallas_src>

<mosaic_0001>
module attributes {stable_mosaic.version = 11 : i64} {
  func.func @fused_forward_kernel(%arg0: memref<8x24xf32, #tpu.memory_space<vmem>>, %arg1: memref<9x136x64xf32, #tpu.memory_space<vmem>>, %arg2: memref<128x64xf32, #tpu.memory_space<vmem>>, %arg3: memref<296x128xf32, #tpu.memory_space<vmem>>, %arg4: memref<8x128xf32, #tpu.memory_space<vmem>>) attributes {dimension_semantics = [], scalar_prefetch = 0 : i64, scratch_operands = 0 : i64, tpu.core_type = #tpu.core_type<tc>} {
    %c0 = arith.constant 0 : index
    %c0_0 = arith.constant 0 : index
    %0 = vector.load %arg2[%c0, %c0_0] : memref<128x64xf32, #tpu.memory_space<vmem>>, vector<128x64xf32>
    %1 = vector.extract_strided_slice %0 {offsets = [0, 0], sizes = [24, 32], strides = [1, 1]} : vector<128x64xf32> to vector<24x32xf32>
    %2 = vector.extract_strided_slice %0 {offsets = [24, 0], sizes = [32, 64], strides = [1, 1]} : vector<128x64xf32> to vector<32x64xf32>
    %3 = vector.extract_strided_slice %0 {offsets = [56, 0], sizes = [64, 32], strides = [1, 1]} : vector<128x64xf32> to vector<64x32xf32>
    %4 = vector.extract_strided_slice %0 {offsets = [120, 0], sizes = [8, 64], strides = [1, 1]} : vector<128x64xf32> to vector<8x64xf32>
    %c0_1 = arith.constant 0 : index
    %c0_2 = arith.constant 0 : index
    %5 = vector.load %arg0[%c0_1, %c0_2] : memref<8x24xf32, #tpu.memory_space<vmem>>, vector<8x24xf32>
    %cst = arith.constant dense<0.000000e+00> : vector<8x32xf32>
    %6 = tpu.matmul %5, %1, %cst {dimension_numbers = #tpu.dot_dimension_numbers<[1], [0], [0], [1], [0, 0, 1, 1], [], []>} : vector<8x24xf32>, vector<24x32xf32>, vector<8x32xf32> -> vector<8x32xf32>
    %7 = vector.extract_strided_slice %4 {offsets = [0, 0], sizes = [1, 32], strides = [1, 1]} : vector<8x64xf32> to vector<1x32xf32>
    %8 = vector.broadcast %7 : vector<1x32xf32> to vector<8x32xf32>
    %9 = arith.addf %6, %8 : vector<8x32xf32>
    %c0_3 = arith.constant 0 : index
    %c0_4 = arith.constant 0 : index
    %c0_5 = arith.constant 0 : index
    %10 = vector.load %arg1[%c0_3, %c0_4, %c0_5] : memref<9x136x64xf32, #tpu.memory_space<vmem>>, vector<1x136x64xf32>
    %11 = vector.shape_cast %10 : vector<1x136x64xf32> to vector<136x64xf32>
    %12 = vector.extract_strided_slice %11 {offsets = [0, 0], sizes = [32, 32], strides = [1, 1]} : vector<136x64xf32> to vector<32x32xf32>
    %13 = vector.extract_strided_slice %11 {offsets = [32, 0], sizes = [32, 64], strides = [1, 1]} : vector<136x64xf32> to vector<32x64xf32>
    %14 = vector.extract_strided_slice %11 {offsets = [64, 0], sizes = [64, 32], strides = [1, 1]} : vector<136x64xf32> to vector<64x32xf32>
    %15 = vector.extract_strided_slice %11 {offsets = [128, 0], sizes = [8, 64], strides = [1, 1]} : vector<136x64xf32> to vector<8x64xf32>
    %16 = vector.extract_strided_slice %15 {offsets = [0, 0], sizes = [1, 32], strides = [1, 1]} : vector<8x64xf32> to vector<1x32xf32>
    %17 = vector.extract_strided_slice %15 {offsets = [1, 0], sizes = [1, 32], strides = [1, 1]} : vector<8x64xf32> to vector<1x32xf32>
    %18 = vector.extract_strided_slice %15 {offsets = [2, 0], sizes = [1, 32], strides = [1, 1]} : vector<8x64xf32> to vector<1x32xf32>
    %19 = vector.extract_strided_slice %15 {offsets = [3, 0], sizes = [1, 64], strides = [1, 1]} : vector<8x64xf32> to vector<1x64xf32>
    %20 = vector.extract_strided_slice %15 {offsets = [4, 0], sizes = [1, 32], strides = [1, 1]} : vector<8x64xf32> to vector<1x32xf32>
    %21 = vector.extract_strided_slice %15 {offsets = [5, 0], sizes = [1, 32], strides = [1, 1]} : vector<8x64xf32> to vector<1x32xf32>
    %22 = vector.extract_strided_slice %15 {offsets = [6, 0], sizes = [1, 32], strides = [1, 1]} : vector<8x64xf32> to vector<1x32xf32>
    %cst_6 = arith.constant -1.000000e+02 : f32
    %cst_7 = arith.constant 1.000000e+02 : f32
    %23 = vector.broadcast %cst_6 : f32 to vector<8x32xf32>
    %24 = arith.maximumf %23, %9 : vector<8x32xf32>
    %25 = vector.broadcast %cst_7 : f32 to vector<8x32xf32>
    %26 = arith.minimumf %25, %24 : vector<8x32xf32>
    %cst_8 = arith.constant dense<0.000000e+00> : vector<8x32xf32>
    %27 = tpu.matmul %26, %12, %cst_8 {dimension_numbers = #tpu.dot_dimension_numbers<[1], [0], [0], [1], [0, 0, 1, 1], [], []>} : vector<8x32xf32>, vector<32x32xf32>, vector<8x32xf32> -> vector<8x32xf32>
    %28 = vector.broadcast %16 : vector<1x32xf32> to vector<8x32xf32>
    %29 = arith.addf %27, %28 : vector<8x32xf32>
    %cst_9 = arith.constant -1.000000e+02 : f32
    %cst_10 = arith.constant 1.000000e+02 : f32
    %30 = vector.broadcast %cst_9 : f32 to vector<8x32xf32>
    %31 = arith.maximumf %30, %29 : vector<8x32xf32>
    %32 = vector.broadcast %cst_10 : f32 to vector<8x32xf32>
    %33 = arith.minimumf %32, %31 : vector<8x32xf32>
    %34 = arith.addf %26, %33 : vector<8x32xf32>
    %cst_11 = arith.constant dense<0.000000e+00> : vector<8xf32>
    %35 = vector.multi_reduction <add>, %34, %cst_11 [1] : vector<8x32xf32> to vector<8xf32>
    %36 = vector.shape_cast %35 : vector<8xf32> to vector<8x1xf32>
    %cst_12 = arith.constant 3.200000e+01 : f32
    %37 = vector.broadcast %cst_12 : f32 to vector<8x1xf32>
    %38 = arith.divf %36, %37 : vector<8x1xf32>
    %39 = arith.mulf %34, %34 : vector<8x32xf32>
    %cst_13 = arith.constant dense<0.000000e+00> : vector<8xf32>
    %40 = vector.multi_reduction <add>, %39, %cst_13 [1] : vector<8x32xf32> to vector<8xf32>
    %41 = vector.shape_cast %40 : vector<8xf32> to vector<8x1xf32>
    %cst_14 = arith.constant 3.200000e+01 : f32
    %42 = vector.broadcast %cst_14 : f32 to vector<8x1xf32>
    %43 = arith.divf %41, %42 : vector<8x1xf32>
    %44 = arith.mulf %38, %38 : vector<8x1xf32>
    %45 = arith.subf %43, %44 : vector<8x1xf32>
    %cst_15 = arith.constant 0.000000e+00 : f32
    %46 = vector.broadcast %cst_15 : f32 to vector<8x1xf32>
    %47 = arith.maximumf %45, %46 : vector<8x1xf32>
    %48 = vector.broadcast %38 : vector<8x1xf32> to vector<8x32xf32>
    %49 = arith.subf %34, %48 : vector<8x32xf32>
    %cst_16 = arith.constant 9.99999974E-6 : f32
    %50 = vector.broadcast %cst_16 : f32 to vector<8x1xf32>
    %51 = arith.addf %47, %50 : vector<8x1xf32>
    %52 = math.rsqrt %51 : vector<8x1xf32>
    %53 = vector.broadcast %52 : vector<8x1xf32> to vector<8x32xf32>
    %54 = arith.mulf %49, %53 : vector<8x32xf32>
    %55 = vector.broadcast %17 : vector<1x32xf32> to vector<8x32xf32>
    %56 = arith.mulf %54, %55 : vector<8x32xf32>
    %57 = vector.broadcast %18 : vector<1x32xf32> to vector<8x32xf32>
    %58 = arith.addf %56, %57 : vector<8x32xf32>
    %cst_17 = arith.constant dense<0.000000e+00> : vector<8x64xf32>
    %59 = tpu.matmul %58, %13, %cst_17 {dimension_numbers = #tpu.dot_dimension_numbers<[1], [0], [0], [1], [0, 0, 1, 1], [], []>} : vector<8x32xf32>, vector<32x64xf32>, vector<8x64xf32> -> vector<8x64xf32>
    %60 = vector.broadcast %19 : vector<1x64xf32> to vector<8x64xf32>
    %61 = arith.addf %59, %60 : vector<8x64xf32>
    %62 = arith.mulf %61, %61 : vector<8x64xf32>
    %63 = arith.mulf %61, %62 : vector<8x64xf32>
    %cst_18 = arith.constant 4.471500e-02 : f32
    %64 = vector.broadcast %cst_18 : f32 to vector<8x64xf32>
    %65 = arith.mulf %64, %63 : vector<8x64xf32>
    %66 = arith.addf %61, %65 : vector<8x64xf32>
    %cst_19 = arith.constant 0.797884583 : f32
    %67 = vector.broadcast %cst_19 : f32 to vector<8x64xf32>
    %68 = arith.mulf %67, %66 : vector<8x64xf32>
    %69 = math.tanh %68 : vector<8x64xf32>
    %cst_20 = arith.constant 1.000000e+00 : f32
    %70 = vector.broadcast %cst_20 : f32 to vector<8x64xf32>
    %71 = arith.addf %70, %69 : vector<8x64xf32>
    %cst_21 = arith.constant 5.000000e-01 : f32
    %72 = vector.broadcast %cst_21 : f32 to vector<8x64xf32>
    %73 = arith.mulf %72, %71 : vector<8x64xf32>
    %74 = arith.mulf %61, %73 : vector<8x64xf32>
    %cst_22 = arith.constant dense<0.000000e+00> : vector<8x32xf32>
    %75 = tpu.matmul %74, %14, %cst_22 {dimension_numbers = #tpu.dot_dimension_numbers<[1], [0], [0], [1], [0, 0, 1, 1], [], []>} : vector<8x64xf32>, vector<64x32xf32>, vector<8x32xf32> -> vector<8x32xf32>
    %76 = vector.broadcast %20 : vector<1x32xf32> to vector<8x32xf32>
    %77 = arith.addf %75, %76 : vector<8x32xf32>
    %cst_23 = arith.constant -1.000000e+02 : f32
    %cst_24 = arith.constant 1.000000e+02 : f32
    %78 = vector.broadcast %cst_23 : f32 to vector<8x32xf32>
    %79 = arith.maximumf %78, %77 : vector<8x32xf32>
    %80 = vector.broadcast %cst_24 : f32 to vector<8x32xf32>
    %81 = arith.minimumf %80, %79 : vector<8x32xf32>
    %82 = arith.addf %58, %81 : vector<8x32xf32>
    %cst_25 = arith.constant dense<0.000000e+00> : vector<8xf32>
    %83 = vector.multi_reduction <add>, %82, %cst_25 [1] : vector<8x32xf32> to vector<8xf32>
    %84 = vector.shape_cast %83 : vector<8xf32> to vector<8x1xf32>
    %cst_26 = arith.constant 3.200000e+01 : f32
    %85 = vector.broadcast %cst_26 : f32 to vector<8x1xf32>
    %86 = arith.divf %84, %85 : vector<8x1xf32>
    %87 = arith.mulf %82, %82 : vector<8x32xf32>
    %cst_27 = arith.constant dense<0.000000e+00> : vector<8xf32>
    %88 = vector.multi_reduction <add>, %87, %cst_27 [1] : vector<8x32xf32> to vector<8xf32>
    %89 = vector.shape_cast %88 : vector<8xf32> to vector<8x1xf32>
    %cst_28 = arith.constant 3.200000e+01 : f32
    %90 = vector.broadcast %cst_28 : f32 to vector<8x1xf32>
    %91 = arith.divf %89, %90 : vector<8x1xf32>
    %92 = arith.mulf %86, %86 : vector<8x1xf32>
    %93 = arith.subf %91, %92 : vector<8x1xf32>
    %cst_29 = arith.constant 0.000000e+00 : f32
    %94 = vector.broadcast %cst_29 : f32 to vector<8x1xf32>
    %95 = arith.maximumf %93, %94 : vector<8x1xf32>
    %96 = vector.broadcast %86 : vector<8x1xf32> to vector<8x32xf32>
    %97 = arith.subf %82, %96 : vector<8x32xf32>
    %cst_30 = arith.constant 9.99999974E-6 : f32
    %98 = vector.broadcast %cst_30 : f32 to vector<8x1xf32>
    %99 = arith.addf %95, %98 : vector<8x1xf32>
    %100 = math.rsqrt %99 : vector<8x1xf32>
    %101 = vector.broadcast %100 : vector<8x1xf32> to vector<8x32xf32>
    %102 = arith.mulf %97, %101 : vector<8x32xf32>
    %103 = vector.broadcast %21 : vector<1x32xf32> to vector<8x32xf32>
    %104 = arith.mulf %102, %103 : vector<8x32xf32>
    %105 = vector.broadcast %22 : vector<1x32xf32> to vector<8x32xf32>
    %106 = arith.addf %104, %105 : vector<8x32xf32>
    %cst_31 = arith.constant -1.000000e+02 : f32
    %cst_32 = arith.constant 1.000000e+02 : f32
    %107 = vector.broadcast %cst_31 : f32 to vector<8x32xf32>
    %108 = arith.maximumf %107, %106 : vector<8x32xf32>
    %109 = vector.broadcast %cst_32 : f32 to vector<8x32xf32>
    %110 = arith.minimumf %109, %108 : vector<8x32xf32>
    %c1 = arith.constant 1 : index
    %c0_33 = arith.constant 0 : index
    %c0_34 = arith.constant 0 : index
    %111 = vector.load %arg1[%c1, %c0_33, %c0_34] : memref<9x136x64xf32, #tpu.memory_space<vmem>>, vector<1x136x64xf32>
    %112 = vector.shape_cast %111 : vector<1x136x64xf32> to vector<136x64xf32>
    %113 = vector.extract_strided_slice %112 {offsets = [0, 0], sizes = [32, 32], strides = [1, 1]} : vector<136x64xf32> to vector<32x32xf32>
    %114 = vector.extract_strided_slice %112 {offsets = [32, 0], sizes = [32, 64], strides = [1, 1]} : vector<136x64xf32> to vector<32x64xf32>
    %115 = vector.extract_strided_slice %112 {offsets = [64, 0], sizes = [64, 32], strides = [1, 1]} : vector<136x64xf32> to vector<64x32xf32>
    %116 = vector.extract_strided_slice %112 {offsets = [128, 0], sizes = [8, 64], strides = [1, 1]} : vector<136x64xf32> to vector<8x64xf32>
    %117 = vector.extract_strided_slice %116 {offsets = [0, 0], sizes = [1, 32], strides = [1, 1]} : vector<8x64xf32> to vector<1x32xf32>
    %118 = vector.extract_strided_slice %116 {offsets = [1, 0], sizes = [1, 32], strides = [1, 1]} : vector<8x64xf32> to vector<1x32xf32>
    %119 = vector.extract_strided_slice %116 {offsets = [2, 0], sizes = [1, 32], strides = [1, 1]} : vector<8x64xf32> to vector<1x32xf32>
    %120 = vector.extract_strided_slice %116 {offsets = [3, 0], sizes = [1, 64], strides = [1, 1]} : vector<8x64xf32> to vector<1x64xf32>
    %121 = vector.extract_strided_slice %116 {offsets = [4, 0], sizes = [1, 32], strides = [1, 1]} : vector<8x64xf32> to vector<1x32xf32>
    %122 = vector.extract_strided_slice %116 {offsets = [5, 0], sizes = [1, 32], strides = [1, 1]} : vector<8x64xf32> to vector<1x32xf32>
    %123 = vector.extract_strided_slice %116 {offsets = [6, 0], sizes = [1, 32], strides = [1, 1]} : vector<8x64xf32> to vector<1x32xf32>
    %cst_35 = arith.constant -1.000000e+02 : f32
    %cst_36 = arith.constant 1.000000e+02 : f32
    %124 = vector.broadcast %cst_35 : f32 to vector<8x32xf32>
    %125 = arith.maximumf %124, %110 : vector<8x32xf32>
    %126 = vector.broadcast %cst_36 : f32 to vector<8x32xf32>
    %127 = arith.minimumf %126, %125 : vector<8x32xf32>
    %cst_37 = arith.constant dense<0.000000e+00> : vector<8x32xf32>
    %128 = tpu.matmul %127, %113, %cst_37 {dimension_numbers = #tpu.dot_dimension_numbers<[1], [0], [0], [1], [0, 0, 1, 1], [], []>} : vector<8x32xf32>, vector<32x32xf32>, vector<8x32xf32> -> vector<8x32xf32>
    %129 = vector.broadcast %117 : vector<1x32xf32> to vector<8x32xf32>
    %130 = arith.addf %128, %129 : vector<8x32xf32>
    %cst_38 = arith.constant -1.000000e+02 : f32
    %cst_39 = arith.constant 1.000000e+02 : f32
    %131 = vector.broadcast %cst_38 : f32 to vector<8x32xf32>
    %132 = arith.maximumf %131, %130 : vector<8x32xf32>
    %133 = vector.broadcast %cst_39 : f32 to vector<8x32xf32>
    %134 = arith.minimumf %133, %132 : vector<8x32xf32>
    %135 = arith.addf %127, %134 : vector<8x32xf32>
    %cst_40 = arith.constant dense<0.000000e+00> : vector<8xf32>
    %136 = vector.multi_reduction <add>, %135, %cst_40 [1] : vector<8x32xf32> to vector<8xf32>
    %137 = vector.shape_cast %136 : vector<8xf32> to vector<8x1xf32>
    %cst_41 = arith.constant 3.200000e+01 : f32
    %138 = vector.broadcast %cst_41 : f32 to vector<8x1xf32>
    %139 = arith.divf %137, %138 : vector<8x1xf32>
    %140 = arith.mulf %135, %135 : vector<8x32xf32>
    %cst_42 = arith.constant dense<0.000000e+00> : vector<8xf32>
    %141 = vector.multi_reduction <add>, %140, %cst_42 [1] : vector<8x32xf32> to vector<8xf32>
    %142 = vector.shape_cast %141 : vector<8xf32> to vector<8x1xf32>
    %cst_43 = arith.constant 3.200000e+01 : f32
    %143 = vector.broadcast %cst_43 : f32 to vector<8x1xf32>
    %144 = arith.divf %142, %143 : vector<8x1xf32>
    %145 = arith.mulf %139, %139 : vector<8x1xf32>
    %146 = arith.subf %144, %145 : vector<8x1xf32>
    %cst_44 = arith.constant 0.000000e+00 : f32
    %147 = vector.broadcast %cst_44 : f32 to vector<8x1xf32>
    %148 = arith.maximumf %146, %147 : vector<8x1xf32>
    %149 = vector.broadcast %139 : vector<8x1xf32> to vector<8x32xf32>
    %150 = arith.subf %135, %149 : vector<8x32xf32>
    %cst_45 = arith.constant 9.99999974E-6 : f32
    %151 = vector.broadcast %cst_45 : f32 to vector<8x1xf32>
    %152 = arith.addf %148, %151 : vector<8x1xf32>
    %153 = math.rsqrt %152 : vector<8x1xf32>
    %154 = vector.broadcast %153 : vector<8x1xf32> to vector<8x32xf32>
    %155 = arith.mulf %150, %154 : vector<8x32xf32>
    %156 = vector.broadcast %118 : vector<1x32xf32> to vector<8x32xf32>
    %157 = arith.mulf %155, %156 : vector<8x32xf32>
    %158 = vector.broadcast %119 : vector<1x32xf32> to vector<8x32xf32>
    %159 = arith.addf %157, %158 : vector<8x32xf32>
    %cst_46 = arith.constant dense<0.000000e+00> : vector<8x64xf32>
    %160 = tpu.matmul %159, %114, %cst_46 {dimension_numbers = #tpu.dot_dimension_numbers<[1], [0], [0], [1], [0, 0, 1, 1], [], []>} : vector<8x32xf32>, vector<32x64xf32>, vector<8x64xf32> -> vector<8x64xf32>
    %161 = vector.broadcast %120 : vector<1x64xf32> to vector<8x64xf32>
    %162 = arith.addf %160, %161 : vector<8x64xf32>
    %163 = arith.mulf %162, %162 : vector<8x64xf32>
    %164 = arith.mulf %162, %163 : vector<8x64xf32>
    %cst_47 = arith.constant 4.471500e-02 : f32
    %165 = vector.broadcast %cst_47 : f32 to vector<8x64xf32>
    %166 = arith.mulf %165, %164 : vector<8x64xf32>
    %167 = arith.addf %162, %166 : vector<8x64xf32>
    %cst_48 = arith.constant 0.797884583 : f32
    %168 = vector.broadcast %cst_48 : f32 to vector<8x64xf32>
    %169 = arith.mulf %168, %167 : vector<8x64xf32>
    %170 = math.tanh %169 : vector<8x64xf32>
    %cst_49 = arith.constant 1.000000e+00 : f32
    %171 = vector.broadcast %cst_49 : f32 to vector<8x64xf32>
    %172 = arith.addf %171, %170 : vector<8x64xf32>
    %cst_50 = arith.constant 5.000000e-01 : f32
    %173 = vector.broadcast %cst_50 : f32 to vector<8x64xf32>
    %174 = arith.mulf %173, %172 : vector<8x64xf32>
    %175 = arith.mulf %162, %174 : vector<8x64xf32>
    %cst_51 = arith.constant dense<0.000000e+00> : vector<8x32xf32>
    %176 = tpu.matmul %175, %115, %cst_51 {dimension_numbers = #tpu.dot_dimension_numbers<[1], [0], [0], [1], [0, 0, 1, 1], [], []>} : vector<8x64xf32>, vector<64x32xf32>, vector<8x32xf32> -> vector<8x32xf32>
    %177 = vector.broadcast %121 : vector<1x32xf32> to vector<8x32xf32>
    %178 = arith.addf %176, %177 : vector<8x32xf32>
    %cst_52 = arith.constant -1.000000e+02 : f32
    %cst_53 = arith.constant 1.000000e+02 : f32
    %179 = vector.broadcast %cst_52 : f32 to vector<8x32xf32>
    %180 = arith.maximumf %179, %178 : vector<8x32xf32>
    %181 = vector.broadcast %cst_53 : f32 to vector<8x32xf32>
    %182 = arith.minimumf %181, %180 : vector<8x32xf32>
    %183 = arith.addf %159, %182 : vector<8x32xf32>
    %cst_54 = arith.constant dense<0.000000e+00> : vector<8xf32>
    %184 = vector.multi_reduction <add>, %183, %cst_54 [1] : vector<8x32xf32> to vector<8xf32>
    %185 = vector.shape_cast %184 : vector<8xf32> to vector<8x1xf32>
    %cst_55 = arith.constant 3.200000e+01 : f32
    %186 = vector.broadcast %cst_55 : f32 to vector<8x1xf32>
    %187 = arith.divf %185, %186 : vector<8x1xf32>
    %188 = arith.mulf %183, %183 : vector<8x32xf32>
    %cst_56 = arith.constant dense<0.000000e+00> : vector<8xf32>
    %189 = vector.multi_reduction <add>, %188, %cst_56 [1] : vector<8x32xf32> to vector<8xf32>
    %190 = vector.shape_cast %189 : vector<8xf32> to vector<8x1xf32>
    %cst_57 = arith.constant 3.200000e+01 : f32
    %191 = vector.broadcast %cst_57 : f32 to vector<8x1xf32>
    %192 = arith.divf %190, %191 : vector<8x1xf32>
    %193 = arith.mulf %187, %187 : vector<8x1xf32>
    %194 = arith.subf %192, %193 : vector<8x1xf32>
    %cst_58 = arith.constant 0.000000e+00 : f32
    %195 = vector.broadcast %cst_58 : f32 to vector<8x1xf32>
    %196 = arith.maximumf %194, %195 : vector<8x1xf32>
    %197 = vector.broadcast %187 : vector<8x1xf32> to vector<8x32xf32>
    %198 = arith.subf %183, %197 : vector<8x32xf32>
    %cst_59 = arith.constant 9.99999974E-6 : f32
    %199 = vector.broadcast %cst_59 : f32 to vector<8x1xf32>
    %200 = arith.addf %196, %199 : vector<8x1xf32>
    %201 = math.rsqrt %200 : vector<8x1xf32>
    %202 = vector.broadcast %201 : vector<8x1xf32> to vector<8x32xf32>
    %203 = arith.mulf %198, %202 : vector<8x32xf32>
    %204 = vector.broadcast %122 : vector<1x32xf32> to vector<8x32xf32>
    %205 = arith.mulf %203, %204 : vector<8x32xf32>
    %206 = vector.broadcast %123 : vector<1x32xf32> to vector<8x32xf32>
    %207 = arith.addf %205, %206 : vector<8x32xf32>
    %cst_60 = arith.constant -1.000000e+02 : f32
    %cst_61 = arith.constant 1.000000e+02 : f32
    %208 = vector.broadcast %cst_60 : f32 to vector<8x32xf32>
    %209 = arith.maximumf %208, %207 : vector<8x32xf32>
    %210 = vector.broadcast %cst_61 : f32 to vector<8x32xf32>
    %211 = arith.minimumf %210, %209 : vector<8x32xf32>
    %c2 = arith.constant 2 : index
    %c0_62 = arith.constant 0 : index
    %c0_63 = arith.constant 0 : index
    %212 = vector.load %arg1[%c2, %c0_62, %c0_63] : memref<9x136x64xf32, #tpu.memory_space<vmem>>, vector<1x136x64xf32>
    %213 = vector.shape_cast %212 : vector<1x136x64xf32> to vector<136x64xf32>
    %214 = vector.extract_strided_slice %213 {offsets = [0, 0], sizes = [32, 32], strides = [1, 1]} : vector<136x64xf32> to vector<32x32xf32>
    %215 = vector.extract_strided_slice %213 {offsets = [32, 0], sizes = [32, 64], strides = [1, 1]} : vector<136x64xf32> to vector<32x64xf32>
    %216 = vector.extract_strided_slice %213 {offsets = [64, 0], sizes = [64, 32], strides = [1, 1]} : vector<136x64xf32> to vector<64x32xf32>
    %217 = vector.extract_strided_slice %213 {offsets = [128, 0], sizes = [8, 64], strides = [1, 1]} : vector<136x64xf32> to vector<8x64xf32>
    %218 = vector.extract_strided_slice %217 {offsets = [0, 0], sizes = [1, 32], strides = [1, 1]} : vector<8x64xf32> to vector<1x32xf32>
    %219 = vector.extract_strided_slice %217 {offsets = [1, 0], sizes = [1, 32], strides = [1, 1]} : vector<8x64xf32> to vector<1x32xf32>
    %220 = vector.extract_strided_slice %217 {offsets = [2, 0], sizes = [1, 32], strides = [1, 1]} : vector<8x64xf32> to vector<1x32xf32>
    %221 = vector.extract_strided_slice %217 {offsets = [3, 0], sizes = [1, 64], strides = [1, 1]} : vector<8x64xf32> to vector<1x64xf32>
    %222 = vector.extract_strided_slice %217 {offsets = [4, 0], sizes = [1, 32], strides = [1, 1]} : vector<8x64xf32> to vector<1x32xf32>
    %223 = vector.extract_strided_slice %217 {offsets = [5, 0], sizes = [1, 32], strides = [1, 1]} : vector<8x64xf32> to vector<1x32xf32>
    %224 = vector.extract_strided_slice %217 {offsets = [6, 0], sizes = [1, 32], strides = [1, 1]} : vector<8x64xf32> to vector<1x32xf32>
    %cst_64 = arith.constant -1.000000e+02 : f32
    %cst_65 = arith.constant 1.000000e+02 : f32
    %225 = vector.broadcast %cst_64 : f32 to vector<8x32xf32>
    %226 = arith.maximumf %225, %211 : vector<8x32xf32>
    %227 = vector.broadcast %cst_65 : f32 to vector<8x32xf32>
    %228 = arith.minimumf %227, %226 : vector<8x32xf32>
    %cst_66 = arith.constant dense<0.000000e+00> : vector<8x32xf32>
    %229 = tpu.matmul %228, %214, %cst_66 {dimension_numbers = #tpu.dot_dimension_numbers<[1], [0], [0], [1], [0, 0, 1, 1], [], []>} : vector<8x32xf32>, vector<32x32xf32>, vector<8x32xf32> -> vector<8x32xf32>
    %230 = vector.broadcast %218 : vector<1x32xf32> to vector<8x32xf32>
    %231 = arith.addf %229, %230 : vector<8x32xf32>
    %cst_67 = arith.constant -1.000000e+02 : f32
    %cst_68 = arith.constant 1.000000e+02 : f32
    %232 = vector.broadcast %cst_67 : f32 to vector<8x32xf32>
    %233 = arith.maximumf %232, %231 : vector<8x32xf32>
    %234 = vector.broadcast %cst_68 : f32 to vector<8x32xf32>
    %235 = arith.minimumf %234, %233 : vector<8x32xf32>
    %236 = arith.addf %228, %235 : vector<8x32xf32>
    %cst_69 = arith.constant dense<0.000000e+00> : vector<8xf32>
    %237 = vector.multi_reduction <add>, %236, %cst_69 [1] : vector<8x32xf32> to vector<8xf32>
    %238 = vector.shape_cast %237 : vector<8xf32> to vector<8x1xf32>
    %cst_70 = arith.constant 3.200000e+01 : f32
    %239 = vector.broadcast %cst_70 : f32 to vector<8x1xf32>
    %240 = arith.divf %238, %239 : vector<8x1xf32>
    %241 = arith.mulf %236, %236 : vector<8x32xf32>
    %cst_71 = arith.constant dense<0.000000e+00> : vector<8xf32>
    %242 = vector.multi_reduction <add>, %241, %cst_71 [1] : vector<8x32xf32> to vector<8xf32>
    %243 = vector.shape_cast %242 : vector<8xf32> to vector<8x1xf32>
    %cst_72 = arith.constant 3.200000e+01 : f32
    %244 = vector.broadcast %cst_72 : f32 to vector<8x1xf32>
    %245 = arith.divf %243, %244 : vector<8x1xf32>
    %246 = arith.mulf %240, %240 : vector<8x1xf32>
    %247 = arith.subf %245, %246 : vector<8x1xf32>
    %cst_73 = arith.constant 0.000000e+00 : f32
    %248 = vector.broadcast %cst_73 : f32 to vector<8x1xf32>
    %249 = arith.maximumf %247, %248 : vector<8x1xf32>
    %250 = vector.broadcast %240 : vector<8x1xf32> to vector<8x32xf32>
    %251 = arith.subf %236, %250 : vector<8x32xf32>
    %cst_74 = arith.constant 9.99999974E-6 : f32
    %252 = vector.broadcast %cst_74 : f32 to vector<8x1xf32>
    %253 = arith.addf %249, %252 : vector<8x1xf32>
    %254 = math.rsqrt %253 : vector<8x1xf32>
    %255 = vector.broadcast %254 : vector<8x1xf32> to vector<8x32xf32>
    %256 = arith.mulf %251, %255 : vector<8x32xf32>
    %257 = vector.broadcast %219 : vector<1x32xf32> to vector<8x32xf32>
    %258 = arith.mulf %256, %257 : vector<8x32xf32>
    %259 = vector.broadcast %220 : vector<1x32xf32> to vector<8x32xf32>
    %260 = arith.addf %258, %259 : vector<8x32xf32>
    %cst_75 = arith.constant dense<0.000000e+00> : vector<8x64xf32>
    %261 = tpu.matmul %260, %215, %cst_75 {dimension_numbers = #tpu.dot_dimension_numbers<[1], [0], [0], [1], [0, 0, 1, 1], [], []>} : vector<8x32xf32>, vector<32x64xf32>, vector<8x64xf32> -> vector<8x64xf32>
    %262 = vector.broadcast %221 : vector<1x64xf32> to vector<8x64xf32>
    %263 = arith.addf %261, %262 : vector<8x64xf32>
    %264 = arith.mulf %263, %263 : vector<8x64xf32>
    %265 = arith.mulf %263, %264 : vector<8x64xf32>
    %cst_76 = arith.constant 4.471500e-02 : f32
    %266 = vector.broadcast %cst_76 : f32 to vector<8x64xf32>
    %267 = arith.mulf %266, %265 : vector<8x64xf32>
    %268 = arith.addf %263, %267 : vector<8x64xf32>
    %cst_77 = arith.constant 0.797884583 : f32
    %269 = vector.broadcast %cst_77 : f32 to vector<8x64xf32>
    %270 = arith.mulf %269, %268 : vector<8x64xf32>
    %271 = math.tanh %270 : vector<8x64xf32>
    %cst_78 = arith.constant 1.000000e+00 : f32
    %272 = vector.broadcast %cst_78 : f32 to vector<8x64xf32>
    %273 = arith.addf %272, %271 : vector<8x64xf32>
    %cst_79 = arith.constant 5.000000e-01 : f32
    %274 = vector.broadcast %cst_79 : f32 to vector<8x64xf32>
    %275 = arith.mulf %274, %273 : vector<8x64xf32>
    %276 = arith.mulf %263, %275 : vector<8x64xf32>
    %cst_80 = arith.constant dense<0.000000e+00> : vector<8x32xf32>
    %277 = tpu.matmul %276, %216, %cst_80 {dimension_numbers = #tpu.dot_dimension_numbers<[1], [0], [0], [1], [0, 0, 1, 1], [], []>} : vector<8x64xf32>, vector<64x32xf32>, vector<8x32xf32> -> vector<8x32xf32>
    %278 = vector.broadcast %222 : vector<1x32xf32> to vector<8x32xf32>
    %279 = arith.addf %277, %278 : vector<8x32xf32>
    %cst_81 = arith.constant -1.000000e+02 : f32
    %cst_82 = arith.constant 1.000000e+02 : f32
    %280 = vector.broadcast %cst_81 : f32 to vector<8x32xf32>
    %281 = arith.maximumf %280, %279 : vector<8x32xf32>
    %282 = vector.broadcast %cst_82 : f32 to vector<8x32xf32>
    %283 = arith.minimumf %282, %281 : vector<8x32xf32>
    %284 = arith.addf %260, %283 : vector<8x32xf32>
    %cst_83 = arith.constant dense<0.000000e+00> : vector<8xf32>
    %285 = vector.multi_reduction <add>, %284, %cst_83 [1] : vector<8x32xf32> to vector<8xf32>
    %286 = vector.shape_cast %285 : vector<8xf32> to vector<8x1xf32>
    %cst_84 = arith.constant 3.200000e+01 : f32
    %287 = vector.broadcast %cst_84 : f32 to vector<8x1xf32>
    %288 = arith.divf %286, %287 : vector<8x1xf32>
    %289 = arith.mulf %284, %284 : vector<8x32xf32>
    %cst_85 = arith.constant dense<0.000000e+00> : vector<8xf32>
    %290 = vector.multi_reduction <add>, %289, %cst_85 [1] : vector<8x32xf32> to vector<8xf32>
    %291 = vector.shape_cast %290 : vector<8xf32> to vector<8x1xf32>
    %cst_86 = arith.constant 3.200000e+01 : f32
    %292 = vector.broadcast %cst_86 : f32 to vector<8x1xf32>
    %293 = arith.divf %291, %292 : vector<8x1xf32>
    %294 = arith.mulf %288, %288 : vector<8x1xf32>
    %295 = arith.subf %293, %294 : vector<8x1xf32>
    %cst_87 = arith.constant 0.000000e+00 : f32
    %296 = vector.broadcast %cst_87 : f32 to vector<8x1xf32>
    %297 = arith.maximumf %295, %296 : vector<8x1xf32>
    %298 = vector.broadcast %288 : vector<8x1xf32> to vector<8x32xf32>
    %299 = arith.subf %284, %298 : vector<8x32xf32>
    %cst_88 = arith.constant 9.99999974E-6 : f32
    %300 = vector.broadcast %cst_88 : f32 to vector<8x1xf32>
    %301 = arith.addf %297, %300 : vector<8x1xf32>
    %302 = math.rsqrt %301 : vector<8x1xf32>
    %303 = vector.broadcast %302 : vector<8x1xf32> to vector<8x32xf32>
    %304 = arith.mulf %299, %303 : vector<8x32xf32>
    %305 = vector.broadcast %223 : vector<1x32xf32> to vector<8x32xf32>
    %306 = arith.mulf %304, %305 : vector<8x32xf32>
    %307 = vector.broadcast %224 : vector<1x32xf32> to vector<8x32xf32>
    %308 = arith.addf %306, %307 : vector<8x32xf32>
    %cst_89 = arith.constant -1.000000e+02 : f32
    %cst_90 = arith.constant 1.000000e+02 : f32
    %309 = vector.broadcast %cst_89 : f32 to vector<8x32xf32>
    %310 = arith.maximumf %309, %308 : vector<8x32xf32>
    %311 = vector.broadcast %cst_90 : f32 to vector<8x32xf32>
    %312 = arith.minimumf %311, %310 : vector<8x32xf32>
    %c3 = arith.constant 3 : index
    %c0_91 = arith.constant 0 : index
    %c0_92 = arith.constant 0 : index
    %313 = vector.load %arg1[%c3, %c0_91, %c0_92] : memref<9x136x64xf32, #tpu.memory_space<vmem>>, vector<1x136x64xf32>
    %314 = vector.shape_cast %313 : vector<1x136x64xf32> to vector<136x64xf32>
    %315 = vector.extract_strided_slice %314 {offsets = [0, 0], sizes = [32, 32], strides = [1, 1]} : vector<136x64xf32> to vector<32x32xf32>
    %316 = vector.extract_strided_slice %314 {offsets = [32, 0], sizes = [32, 64], strides = [1, 1]} : vector<136x64xf32> to vector<32x64xf32>
    %317 = vector.extract_strided_slice %314 {offsets = [64, 0], sizes = [64, 32], strides = [1, 1]} : vector<136x64xf32> to vector<64x32xf32>
    %318 = vector.extract_strided_slice %314 {offsets = [128, 0], sizes = [8, 64], strides = [1, 1]} : vector<136x64xf32> to vector<8x64xf32>
    %319 = vector.extract_strided_slice %318 {offsets = [0, 0], sizes = [1, 32], strides = [1, 1]} : vector<8x64xf32> to vector<1x32xf32>
    %320 = vector.extract_strided_slice %318 {offsets = [1, 0], sizes = [1, 32], strides = [1, 1]} : vector<8x64xf32> to vector<1x32xf32>
    %321 = vector.extract_strided_slice %318 {offsets = [2, 0], sizes = [1, 32], strides = [1, 1]} : vector<8x64xf32> to vector<1x32xf32>
    %322 = vector.extract_strided_slice %318 {offsets = [3, 0], sizes = [1, 64], strides = [1, 1]} : vector<8x64xf32> to vector<1x64xf32>
    %323 = vector.extract_strided_slice %318 {offsets = [4, 0], sizes = [1, 32], strides = [1, 1]} : vector<8x64xf32> to vector<1x32xf32>
    %324 = vector.extract_strided_slice %318 {offsets = [5, 0], sizes = [1, 32], strides = [1, 1]} : vector<8x64xf32> to vector<1x32xf32>
    %325 = vector.extract_strided_slice %318 {offsets = [6, 0], sizes = [1, 32], strides = [1, 1]} : vector<8x64xf32> to vector<1x32xf32>
    %cst_93 = arith.constant -1.000000e+02 : f32
    %cst_94 = arith.constant 1.000000e+02 : f32
    %326 = vector.broadcast %cst_93 : f32 to vector<8x32xf32>
    %327 = arith.maximumf %326, %312 : vector<8x32xf32>
    %328 = vector.broadcast %cst_94 : f32 to vector<8x32xf32>
    %329 = arith.minimumf %328, %327 : vector<8x32xf32>
    %cst_95 = arith.constant dense<0.000000e+00> : vector<8x32xf32>
    %330 = tpu.matmul %329, %315, %cst_95 {dimension_numbers = #tpu.dot_dimension_numbers<[1], [0], [0], [1], [0, 0, 1, 1], [], []>} : vector<8x32xf32>, vector<32x32xf32>, vector<8x32xf32> -> vector<8x32xf32>
    %331 = vector.broadcast %319 : vector<1x32xf32> to vector<8x32xf32>
    %332 = arith.addf %330, %331 : vector<8x32xf32>
    %cst_96 = arith.constant -1.000000e+02 : f32
    %cst_97 = arith.constant 1.000000e+02 : f32
    %333 = vector.broadcast %cst_96 : f32 to vector<8x32xf32>
    %334 = arith.maximumf %333, %332 : vector<8x32xf32>
    %335 = vector.broadcast %cst_97 : f32 to vector<8x32xf32>
    %336 = arith.minimumf %335, %334 : vector<8x32xf32>
    %337 = arith.addf %329, %336 : vector<8x32xf32>
    %cst_98 = arith.constant dense<0.000000e+00> : vector<8xf32>
    %338 = vector.multi_reduction <add>, %337, %cst_98 [1] : vector<8x32xf32> to vector<8xf32>
    %339 = vector.shape_cast %338 : vector<8xf32> to vector<8x1xf32>
    %cst_99 = arith.constant 3.200000e+01 : f32
    %340 = vector.broadcast %cst_99 : f32 to vector<8x1xf32>
    %341 = arith.divf %339, %340 : vector<8x1xf32>
    %342 = arith.mulf %337, %337 : vector<8x32xf32>
    %cst_100 = arith.constant dense<0.000000e+00> : vector<8xf32>
    %343 = vector.multi_reduction <add>, %342, %cst_100 [1] : vector<8x32xf32> to vector<8xf32>
    %344 = vector.shape_cast %343 : vector<8xf32> to vector<8x1xf32>
    %cst_101 = arith.constant 3.200000e+01 : f32
    %345 = vector.broadcast %cst_101 : f32 to vector<8x1xf32>
    %346 = arith.divf %344, %345 : vector<8x1xf32>
    %347 = arith.mulf %341, %341 : vector<8x1xf32>
    %348 = arith.subf %346, %347 : vector<8x1xf32>
    %cst_102 = arith.constant 0.000000e+00 : f32
    %349 = vector.broadcast %cst_102 : f32 to vector<8x1xf32>
    %350 = arith.maximumf %348, %349 : vector<8x1xf32>
    %351 = vector.broadcast %341 : vector<8x1xf32> to vector<8x32xf32>
    %352 = arith.subf %337, %351 : vector<8x32xf32>
    %cst_103 = arith.constant 9.99999974E-6 : f32
    %353 = vector.broadcast %cst_103 : f32 to vector<8x1xf32>
    %354 = arith.addf %350, %353 : vector<8x1xf32>
    %355 = math.rsqrt %354 : vector<8x1xf32>
    %356 = vector.broadcast %355 : vector<8x1xf32> to vector<8x32xf32>
    %357 = arith.mulf %352, %356 : vector<8x32xf32>
    %358 = vector.broadcast %320 : vector<1x32xf32> to vector<8x32xf32>
    %359 = arith.mulf %357, %358 : vector<8x32xf32>
    %360 = vector.broadcast %321 : vector<1x32xf32> to vector<8x32xf32>
    %361 = arith.addf %359, %360 : vector<8x32xf32>
    %cst_104 = arith.constant dense<0.000000e+00> : vector<8x64xf32>
    %362 = tpu.matmul %361, %316, %cst_104 {dimension_numbers = #tpu.dot_dimension_numbers<[1], [0], [0], [1], [0, 0, 1, 1], [], []>} : vector<8x32xf32>, vector<32x64xf32>, vector<8x64xf32> -> vector<8x64xf32>
    %363 = vector.broadcast %322 : vector<1x64xf32> to vector<8x64xf32>
    %364 = arith.addf %362, %363 : vector<8x64xf32>
    %365 = arith.mulf %364, %364 : vector<8x64xf32>
    %366 = arith.mulf %364, %365 : vector<8x64xf32>
    %cst_105 = arith.constant 4.471500e-02 : f32
    %367 = vector.broadcast %cst_105 : f32 to vector<8x64xf32>
    %368 = arith.mulf %367, %366 : vector<8x64xf32>
    %369 = arith.addf %364, %368 : vector<8x64xf32>
    %cst_106 = arith.constant 0.797884583 : f32
    %370 = vector.broadcast %cst_106 : f32 to vector<8x64xf32>
    %371 = arith.mulf %370, %369 : vector<8x64xf32>
    %372 = math.tanh %371 : vector<8x64xf32>
    %cst_107 = arith.constant 1.000000e+00 : f32
    %373 = vector.broadcast %cst_107 : f32 to vector<8x64xf32>
    %374 = arith.addf %373, %372 : vector<8x64xf32>
    %cst_108 = arith.constant 5.000000e-01 : f32
    %375 = vector.broadcast %cst_108 : f32 to vector<8x64xf32>
    %376 = arith.mulf %375, %374 : vector<8x64xf32>
    %377 = arith.mulf %364, %376 : vector<8x64xf32>
    %cst_109 = arith.constant dense<0.000000e+00> : vector<8x32xf32>
    %378 = tpu.matmul %377, %317, %cst_109 {dimension_numbers = #tpu.dot_dimension_numbers<[1], [0], [0], [1], [0, 0, 1, 1], [], []>} : vector<8x64xf32>, vector<64x32xf32>, vector<8x32xf32> -> vector<8x32xf32>
    %379 = vector.broadcast %323 : vector<1x32xf32> to vector<8x32xf32>
    %380 = arith.addf %378, %379 : vector<8x32xf32>
    %cst_110 = arith.constant -1.000000e+02 : f32
    %cst_111 = arith.constant 1.000000e+02 : f32
    %381 = vector.broadcast %cst_110 : f32 to vector<8x32xf32>
    %382 = arith.maximumf %381, %380 : vector<8x32xf32>
    %383 = vector.broadcast %cst_111 : f32 to vector<8x32xf32>
    %384 = arith.minimumf %383, %382 : vector<8x32xf32>
    %385 = arith.addf %361, %384 : vector<8x32xf32>
    %cst_112 = arith.constant dense<0.000000e+00> : vector<8xf32>
    %386 = vector.multi_reduction <add>, %385, %cst_112 [1] : vector<8x32xf32> to vector<8xf32>
    %387 = vector.shape_cast %386 : vector<8xf32> to vector<8x1xf32>
    %cst_113 = arith.constant 3.200000e+01 : f32
    %388 = vector.broadcast %cst_113 : f32 to vector<8x1xf32>
    %389 = arith.divf %387, %388 : vector<8x1xf32>
    %390 = arith.mulf %385, %385 : vector<8x32xf32>
    %cst_114 = arith.constant dense<0.000000e+00> : vector<8xf32>
    %391 = vector.multi_reduction <add>, %390, %cst_114 [1] : vector<8x32xf32> to vector<8xf32>
    %392 = vector.shape_cast %391 : vector<8xf32> to vector<8x1xf32>
    %cst_115 = arith.constant 3.200000e+01 : f32
    %393 = vector.broadcast %cst_115 : f32 to vector<8x1xf32>
    %394 = arith.divf %392, %393 : vector<8x1xf32>
    %395 = arith.mulf %389, %389 : vector<8x1xf32>
    %396 = arith.subf %394, %395 : vector<8x1xf32>
    %cst_116 = arith.constant 0.000000e+00 : f32
    %397 = vector.broadcast %cst_116 : f32 to vector<8x1xf32>
    %398 = arith.maximumf %396, %397 : vector<8x1xf32>
    %399 = vector.broadcast %389 : vector<8x1xf32> to vector<8x32xf32>
    %400 = arith.subf %385, %399 : vector<8x32xf32>
    %cst_117 = arith.constant 9.99999974E-6 : f32
    %401 = vector.broadcast %cst_117 : f32 to vector<8x1xf32>
    %402 = arith.addf %398, %401 : vector<8x1xf32>
    %403 = math.rsqrt %402 : vector<8x1xf32>
    %404 = vector.broadcast %403 : vector<8x1xf32> to vector<8x32xf32>
    %405 = arith.mulf %400, %404 : vector<8x32xf32>
    %406 = vector.broadcast %324 : vector<1x32xf32> to vector<8x32xf32>
    %407 = arith.mulf %405, %406 : vector<8x32xf32>
    %408 = vector.broadcast %325 : vector<1x32xf32> to vector<8x32xf32>
    %409 = arith.addf %407, %408 : vector<8x32xf32>
    %cst_118 = arith.constant -1.000000e+02 : f32
    %cst_119 = arith.constant 1.000000e+02 : f32
    %410 = vector.broadcast %cst_118 : f32 to vector<8x32xf32>
    %411 = arith.maximumf %410, %409 : vector<8x32xf32>
    %412 = vector.broadcast %cst_119 : f32 to vector<8x32xf32>
    %413 = arith.minimumf %412, %411 : vector<8x32xf32>
    %c4 = arith.constant 4 : index
    %c0_120 = arith.constant 0 : index
    %c0_121 = arith.constant 0 : index
    %414 = vector.load %arg1[%c4, %c0_120, %c0_121] : memref<9x136x64xf32, #tpu.memory_space<vmem>>, vector<1x136x64xf32>
    %415 = vector.shape_cast %414 : vector<1x136x64xf32> to vector<136x64xf32>
    %416 = vector.extract_strided_slice %415 {offsets = [0, 0], sizes = [32, 32], strides = [1, 1]} : vector<136x64xf32> to vector<32x32xf32>
    %417 = vector.extract_strided_slice %415 {offsets = [32, 0], sizes = [32, 64], strides = [1, 1]} : vector<136x64xf32> to vector<32x64xf32>
    %418 = vector.extract_strided_slice %415 {offsets = [64, 0], sizes = [64, 32], strides = [1, 1]} : vector<136x64xf32> to vector<64x32xf32>
    %419 = vector.extract_strided_slice %415 {offsets = [128, 0], sizes = [8, 64], strides = [1, 1]} : vector<136x64xf32> to vector<8x64xf32>
    %420 = vector.extract_strided_slice %419 {offsets = [0, 0], sizes = [1, 32], strides = [1, 1]} : vector<8x64xf32> to vector<1x32xf32>
    %421 = vector.extract_strided_slice %419 {offsets = [1, 0], sizes = [1, 32], strides = [1, 1]} : vector<8x64xf32> to vector<1x32xf32>
    %422 = vector.extract_strided_slice %419 {offsets = [2, 0], sizes = [1, 32], strides = [1, 1]} : vector<8x64xf32> to vector<1x32xf32>
    %423 = vector.extract_strided_slice %419 {offsets = [3, 0], sizes = [1, 64], strides = [1, 1]} : vector<8x64xf32> to vector<1x64xf32>
    %424 = vector.extract_strided_slice %419 {offsets = [4, 0], sizes = [1, 32], strides = [1, 1]} : vector<8x64xf32> to vector<1x32xf32>
    %425 = vector.extract_strided_slice %419 {offsets = [5, 0], sizes = [1, 32], strides = [1, 1]} : vector<8x64xf32> to vector<1x32xf32>
    %426 = vector.extract_strided_slice %419 {offsets = [6, 0], sizes = [1, 32], strides = [1, 1]} : vector<8x64xf32> to vector<1x32xf32>
    %cst_122 = arith.constant -1.000000e+02 : f32
    %cst_123 = arith.constant 1.000000e+02 : f32
    %427 = vector.broadcast %cst_122 : f32 to vector<8x32xf32>
    %428 = arith.maximumf %427, %413 : vector<8x32xf32>
    %429 = vector.broadcast %cst_123 : f32 to vector<8x32xf32>
    %430 = arith.minimumf %429, %428 : vector<8x32xf32>
    %cst_124 = arith.constant dense<0.000000e+00> : vector<8x32xf32>
    %431 = tpu.matmul %430, %416, %cst_124 {dimension_numbers = #tpu.dot_dimension_numbers<[1], [0], [0], [1], [0, 0, 1, 1], [], []>} : vector<8x32xf32>, vector<32x32xf32>, vector<8x32xf32> -> vector<8x32xf32>
    %432 = vector.broadcast %420 : vector<1x32xf32> to vector<8x32xf32>
    %433 = arith.addf %431, %432 : vector<8x32xf32>
    %cst_125 = arith.constant -1.000000e+02 : f32
    %cst_126 = arith.constant 1.000000e+02 : f32
    %434 = vector.broadcast %cst_125 : f32 to vector<8x32xf32>
    %435 = arith.maximumf %434, %433 : vector<8x32xf32>
    %436 = vector.broadcast %cst_126 : f32 to vector<8x32xf32>
    %437 = arith.minimumf %436, %435 : vector<8x32xf32>
    %438 = arith.addf %430, %437 : vector<8x32xf32>
    %cst_127 = arith.constant dense<0.000000e+00> : vector<8xf32>
    %439 = vector.multi_reduction <add>, %438, %cst_127 [1] : vector<8x32xf32> to vector<8xf32>
    %440 = vector.shape_cast %439 : vector<8xf32> to vector<8x1xf32>
    %cst_128 = arith.constant 3.200000e+01 : f32
    %441 = vector.broadcast %cst_128 : f32 to vector<8x1xf32>
    %442 = arith.divf %440, %441 : vector<8x1xf32>
    %443 = arith.mulf %438, %438 : vector<8x32xf32>
    %cst_129 = arith.constant dense<0.000000e+00> : vector<8xf32>
    %444 = vector.multi_reduction <add>, %443, %cst_129 [1] : vector<8x32xf32> to vector<8xf32>
    %445 = vector.shape_cast %444 : vector<8xf32> to vector<8x1xf32>
    %cst_130 = arith.constant 3.200000e+01 : f32
    %446 = vector.broadcast %cst_130 : f32 to vector<8x1xf32>
    %447 = arith.divf %445, %446 : vector<8x1xf32>
    %448 = arith.mulf %442, %442 : vector<8x1xf32>
    %449 = arith.subf %447, %448 : vector<8x1xf32>
    %cst_131 = arith.constant 0.000000e+00 : f32
    %450 = vector.broadcast %cst_131 : f32 to vector<8x1xf32>
    %451 = arith.maximumf %449, %450 : vector<8x1xf32>
    %452 = vector.broadcast %442 : vector<8x1xf32> to vector<8x32xf32>
    %453 = arith.subf %438, %452 : vector<8x32xf32>
    %cst_132 = arith.constant 9.99999974E-6 : f32
    %454 = vector.broadcast %cst_132 : f32 to vector<8x1xf32>
    %455 = arith.addf %451, %454 : vector<8x1xf32>
    %456 = math.rsqrt %455 : vector<8x1xf32>
    %457 = vector.broadcast %456 : vector<8x1xf32> to vector<8x32xf32>
    %458 = arith.mulf %453, %457 : vector<8x32xf32>
    %459 = vector.broadcast %421 : vector<1x32xf32> to vector<8x32xf32>
    %460 = arith.mulf %458, %459 : vector<8x32xf32>
    %461 = vector.broadcast %422 : vector<1x32xf32> to vector<8x32xf32>
    %462 = arith.addf %460, %461 : vector<8x32xf32>
    %cst_133 = arith.constant dense<0.000000e+00> : vector<8x64xf32>
    %463 = tpu.matmul %462, %417, %cst_133 {dimension_numbers = #tpu.dot_dimension_numbers<[1], [0], [0], [1], [0, 0, 1, 1], [], []>} : vector<8x32xf32>, vector<32x64xf32>, vector<8x64xf32> -> vector<8x64xf32>
    %464 = vector.broadcast %423 : vector<1x64xf32> to vector<8x64xf32>
    %465 = arith.addf %463, %464 : vector<8x64xf32>
    %466 = arith.mulf %465, %465 : vector<8x64xf32>
    %467 = arith.mulf %465, %466 : vector<8x64xf32>
    %cst_134 = arith.constant 4.471500e-02 : f32
    %468 = vector.broadcast %cst_134 : f32 to vector<8x64xf32>
    %469 = arith.mulf %468, %467 : vector<8x64xf32>
    %470 = arith.addf %465, %469 : vector<8x64xf32>
    %cst_135 = arith.constant 0.797884583 : f32
    %471 = vector.broadcast %cst_135 : f32 to vector<8x64xf32>
    %472 = arith.mulf %471, %470 : vector<8x64xf32>
    %473 = math.tanh %472 : vector<8x64xf32>
    %cst_136 = arith.constant 1.000000e+00 : f32
    %474 = vector.broadcast %cst_136 : f32 to vector<8x64xf32>
    %475 = arith.addf %474, %473 : vector<8x64xf32>
    %cst_137 = arith.constant 5.000000e-01 : f32
    %476 = vector.broadcast %cst_137 : f32 to vector<8x64xf32>
    %477 = arith.mulf %476, %475 : vector<8x64xf32>
    %478 = arith.mulf %465, %477 : vector<8x64xf32>
    %cst_138 = arith.constant dense<0.000000e+00> : vector<8x32xf32>
    %479 = tpu.matmul %478, %418, %cst_138 {dimension_numbers = #tpu.dot_dimension_numbers<[1], [0], [0], [1], [0, 0, 1, 1], [], []>} : vector<8x64xf32>, vector<64x32xf32>, vector<8x32xf32> -> vector<8x32xf32>
    %480 = vector.broadcast %424 : vector<1x32xf32> to vector<8x32xf32>
    %481 = arith.addf %479, %480 : vector<8x32xf32>
    %cst_139 = arith.constant -1.000000e+02 : f32
    %cst_140 = arith.constant 1.000000e+02 : f32
    %482 = vector.broadcast %cst_139 : f32 to vector<8x32xf32>
    %483 = arith.maximumf %482, %481 : vector<8x32xf32>
    %484 = vector.broadcast %cst_140 : f32 to vector<8x32xf32>
    %485 = arith.minimumf %484, %483 : vector<8x32xf32>
    %486 = arith.addf %462, %485 : vector<8x32xf32>
    %cst_141 = arith.constant dense<0.000000e+00> : vector<8xf32>
    %487 = vector.multi_reduction <add>, %486, %cst_141 [1] : vector<8x32xf32> to vector<8xf32>
    %488 = vector.shape_cast %487 : vector<8xf32> to vector<8x1xf32>
    %cst_142 = arith.constant 3.200000e+01 : f32
    %489 = vector.broadcast %cst_142 : f32 to vector<8x1xf32>
    %490 = arith.divf %488, %489 : vector<8x1xf32>
    %491 = arith.mulf %486, %486 : vector<8x32xf32>
    %cst_143 = arith.constant dense<0.000000e+00> : vector<8xf32>
    %492 = vector.multi_reduction <add>, %491, %cst_143 [1] : vector<8x32xf32> to vector<8xf32>
    %493 = vector.shape_cast %492 : vector<8xf32> to vector<8x1xf32>
    %cst_144 = arith.constant 3.200000e+01 : f32
    %494 = vector.broadcast %cst_144 : f32 to vector<8x1xf32>
    %495 = arith.divf %493, %494 : vector<8x1xf32>
    %496 = arith.mulf %490, %490 : vector<8x1xf32>
    %497 = arith.subf %495, %496 : vector<8x1xf32>
    %cst_145 = arith.constant 0.000000e+00 : f32
    %498 = vector.broadcast %cst_145 : f32 to vector<8x1xf32>
    %499 = arith.maximumf %497, %498 : vector<8x1xf32>
    %500 = vector.broadcast %490 : vector<8x1xf32> to vector<8x32xf32>
    %501 = arith.subf %486, %500 : vector<8x32xf32>
    %cst_146 = arith.constant 9.99999974E-6 : f32
    %502 = vector.broadcast %cst_146 : f32 to vector<8x1xf32>
    %503 = arith.addf %499, %502 : vector<8x1xf32>
    %504 = math.rsqrt %503 : vector<8x1xf32>
    %505 = vector.broadcast %504 : vector<8x1xf32> to vector<8x32xf32>
    %506 = arith.mulf %501, %505 : vector<8x32xf32>
    %507 = vector.broadcast %425 : vector<1x32xf32> to vector<8x32xf32>
    %508 = arith.mulf %506, %507 : vector<8x32xf32>
    %509 = vector.broadcast %426 : vector<1x32xf32> to vector<8x32xf32>
    %510 = arith.addf %508, %509 : vector<8x32xf32>
    %cst_147 = arith.constant -1.000000e+02 : f32
    %cst_148 = arith.constant 1.000000e+02 : f32
    %511 = vector.broadcast %cst_147 : f32 to vector<8x32xf32>
    %512 = arith.maximumf %511, %510 : vector<8x32xf32>
    %513 = vector.broadcast %cst_148 : f32 to vector<8x32xf32>
    %514 = arith.minimumf %513, %512 : vector<8x32xf32>
    %cst_149 = arith.constant -1.000000e+01 : f32
    %cst_150 = arith.constant 1.000000e+01 : f32
    %515 = vector.broadcast %cst_149 : f32 to vector<8x32xf32>
    %516 = arith.maximumf %515, %514 : vector<8x32xf32>
    %517 = vector.broadcast %cst_150 : f32 to vector<8x32xf32>
    %518 = arith.minimumf %517, %516 : vector<8x32xf32>
    %519 = vector.extract_strided_slice %4 {offsets = [1, 0], sizes = [1, 32], strides = [1, 1]} : vector<8x64xf32> to vector<1x32xf32>
    %520 = vector.extract_strided_slice %4 {offsets = [2, 0], sizes = [1, 32], strides = [1, 1]} : vector<8x64xf32> to vector<1x32xf32>
    %cst_151 = arith.constant dense<0.000000e+00> : vector<8xf32>
    %521 = vector.multi_reduction <add>, %518, %cst_151 [1] : vector<8x32xf32> to vector<8xf32>
    %522 = vector.shape_cast %521 : vector<8xf32> to vector<8x1xf32>
    %cst_152 = arith.constant 3.200000e+01 : f32
    %523 = vector.broadcast %cst_152 : f32 to vector<8x1xf32>
    %524 = arith.divf %522, %523 : vector<8x1xf32>
    %525 = arith.mulf %518, %518 : vector<8x32xf32>
    %cst_153 = arith.constant dense<0.000000e+00> : vector<8xf32>
    %526 = vector.multi_reduction <add>, %525, %cst_153 [1] : vector<8x32xf32> to vector<8xf32>
    %527 = vector.shape_cast %526 : vector<8xf32> to vector<8x1xf32>
    %cst_154 = arith.constant 3.200000e+01 : f32
    %528 = vector.broadcast %cst_154 : f32 to vector<8x1xf32>
    %529 = arith.divf %527, %528 : vector<8x1xf32>
    %530 = arith.mulf %524, %524 : vector<8x1xf32>
    %531 = arith.subf %529, %530 : vector<8x1xf32>
    %cst_155 = arith.constant 0.000000e+00 : f32
    %532 = vector.broadcast %cst_155 : f32 to vector<8x1xf32>
    %533 = arith.maximumf %531, %532 : vector<8x1xf32>
    %534 = vector.broadcast %524 : vector<8x1xf32> to vector<8x32xf32>
    %535 = arith.subf %518, %534 : vector<8x32xf32>
    %cst_156 = arith.constant 9.99999974E-6 : f32
    %536 = vector.broadcast %cst_156 : f32 to vector<8x1xf32>
    %537 = arith.addf %533, %536 : vector<8x1xf32>
    %538 = math.rsqrt %537 : vector<8x1xf32>
    %539 = vector.broadcast %538 : vector<8x1xf32> to vector<8x32xf32>
    %540 = arith.mulf %535, %539 : vector<8x32xf32>
    %541 = vector.broadcast %519 : vector<1x32xf32> to vector<8x32xf32>
    %542 = arith.mulf %540, %541 : vector<8x32xf32>
    %543 = vector.broadcast %520 : vector<1x32xf32> to vector<8x32xf32>
    %544 = arith.addf %542, %543 : vector<8x32xf32>
    %cst_157 = arith.constant dense<0.000000e+00> : vector<8x64xf32>
    %545 = tpu.matmul %544, %2, %cst_157 {dimension_numbers = #tpu.dot_dimension_numbers<[1], [0], [0], [1], [0, 0, 1, 1], [], []>} : vector<8x32xf32>, vector<32x64xf32>, vector<8x64xf32> -> vector<8x64xf32>
    %546 = vector.extract_strided_slice %4 {offsets = [3, 0], sizes = [1, 64], strides = [1, 1]} : vector<8x64xf32> to vector<1x64xf32>
    %547 = vector.broadcast %546 : vector<1x64xf32> to vector<8x64xf32>
    %548 = arith.addf %545, %547 : vector<8x64xf32>
    %549 = vector.extract_strided_slice %4 {offsets = [4, 0], sizes = [1, 64], strides = [1, 1]} : vector<8x64xf32> to vector<1x64xf32>
    %550 = vector.extract_strided_slice %4 {offsets = [5, 0], sizes = [1, 64], strides = [1, 1]} : vector<8x64xf32> to vector<1x64xf32>
    %cst_158 = arith.constant dense<0.000000e+00> : vector<8xf32>
    %551 = vector.multi_reduction <add>, %548, %cst_158 [1] : vector<8x64xf32> to vector<8xf32>
    %552 = vector.shape_cast %551 : vector<8xf32> to vector<8x1xf32>
    %cst_159 = arith.constant 6.400000e+01 : f32
    %553 = vector.broadcast %cst_159 : f32 to vector<8x1xf32>
    %554 = arith.divf %552, %553 : vector<8x1xf32>
    %555 = arith.mulf %548, %548 : vector<8x64xf32>
    %cst_160 = arith.constant dense<0.000000e+00> : vector<8xf32>
    %556 = vector.multi_reduction <add>, %555, %cst_160 [1] : vector<8x64xf32> to vector<8xf32>
    %557 = vector.shape_cast %556 : vector<8xf32> to vector<8x1xf32>
    %cst_161 = arith.constant 6.400000e+01 : f32
    %558 = vector.broadcast %cst_161 : f32 to vector<8x1xf32>
    %559 = arith.divf %557, %558 : vector<8x1xf32>
    %560 = arith.mulf %554, %554 : vector<8x1xf32>
    %561 = arith.subf %559, %560 : vector<8x1xf32>
    %cst_162 = arith.constant 0.000000e+00 : f32
    %562 = vector.broadcast %cst_162 : f32 to vector<8x1xf32>
    %563 = arith.maximumf %561, %562 : vector<8x1xf32>
    %564 = vector.broadcast %554 : vector<8x1xf32> to vector<8x64xf32>
    %565 = arith.subf %548, %564 : vector<8x64xf32>
    %cst_163 = arith.constant 9.99999974E-6 : f32
    %566 = vector.broadcast %cst_163 : f32 to vector<8x1xf32>
    %567 = arith.addf %563, %566 : vector<8x1xf32>
    %568 = math.rsqrt %567 : vector<8x1xf32>
    %569 = vector.broadcast %568 : vector<8x1xf32> to vector<8x64xf32>
    %570 = arith.mulf %565, %569 : vector<8x64xf32>
    %571 = vector.broadcast %549 : vector<1x64xf32> to vector<8x64xf32>
    %572 = arith.mulf %570, %571 : vector<8x64xf32>
    %573 = vector.broadcast %550 : vector<1x64xf32> to vector<8x64xf32>
    %574 = arith.addf %572, %573 : vector<8x64xf32>
    %575 = arith.mulf %574, %574 : vector<8x64xf32>
    %576 = arith.mulf %574, %575 : vector<8x64xf32>
    %cst_164 = arith.constant 4.471500e-02 : f32
    %577 = vector.broadcast %cst_164 : f32 to vector<8x64xf32>
    %578 = arith.mulf %577, %576 : vector<8x64xf32>
    %579 = arith.addf %574, %578 : vector<8x64xf32>
    %cst_165 = arith.constant 0.797884583 : f32
    %580 = vector.broadcast %cst_165 : f32 to vector<8x64xf32>
    %581 = arith.mulf %580, %579 : vector<8x64xf32>
    %582 = math.tanh %581 : vector<8x64xf32>
    %cst_166 = arith.constant 1.000000e+00 : f32
    %583 = vector.broadcast %cst_166 : f32 to vector<8x64xf32>
    %584 = arith.addf %583, %582 : vector<8x64xf32>
    %cst_167 = arith.constant 5.000000e-01 : f32
    %585 = vector.broadcast %cst_167 : f32 to vector<8x64xf32>
    %586 = arith.mulf %585, %584 : vector<8x64xf32>
    %587 = arith.mulf %574, %586 : vector<8x64xf32>
    %cst_168 = arith.constant dense<0.000000e+00> : vector<8x32xf32>
    %588 = tpu.matmul %587, %3, %cst_168 {dimension_numbers = #tpu.dot_dimension_numbers<[1], [0], [0], [1], [0, 0, 1, 1], [], []>} : vector<8x64xf32>, vector<64x32xf32>, vector<8x32xf32> -> vector<8x32xf32>
    %589 = vector.extract_strided_slice %4 {offsets = [6, 0], sizes = [1, 32], strides = [1, 1]} : vector<8x64xf32> to vector<1x32xf32>
    %590 = vector.broadcast %589 : vector<1x32xf32> to vector<8x32xf32>
    %591 = arith.addf %588, %590 : vector<8x32xf32>
    %cst_169 = arith.constant -1.000000e+01 : f32
    %cst_170 = arith.constant 1.000000e+01 : f32
    %592 = vector.broadcast %cst_169 : f32 to vector<8x32xf32>
    %593 = arith.maximumf %592, %591 : vector<8x32xf32>
    %594 = vector.broadcast %cst_170 : f32 to vector<8x32xf32>
    %595 = arith.minimumf %594, %593 : vector<8x32xf32>
    %c5 = arith.constant 5 : index
    %c0_171 = arith.constant 0 : index
    %c0_172 = arith.constant 0 : index
    %596 = vector.load %arg1[%c5, %c0_171, %c0_172] : memref<9x136x64xf32, #tpu.memory_space<vmem>>, vector<1x136x64xf32>
    %597 = vector.shape_cast %596 : vector<1x136x64xf32> to vector<136x64xf32>
    %598 = vector.extract_strided_slice %597 {offsets = [0, 0], sizes = [32, 32], strides = [1, 1]} : vector<136x64xf32> to vector<32x32xf32>
    %599 = vector.extract_strided_slice %597 {offsets = [32, 0], sizes = [32, 64], strides = [1, 1]} : vector<136x64xf32> to vector<32x64xf32>
    %600 = vector.extract_strided_slice %597 {offsets = [64, 0], sizes = [64, 32], strides = [1, 1]} : vector<136x64xf32> to vector<64x32xf32>
    %601 = vector.extract_strided_slice %597 {offsets = [128, 0], sizes = [8, 64], strides = [1, 1]} : vector<136x64xf32> to vector<8x64xf32>
    %602 = vector.extract_strided_slice %601 {offsets = [0, 0], sizes = [1, 32], strides = [1, 1]} : vector<8x64xf32> to vector<1x32xf32>
    %603 = vector.extract_strided_slice %601 {offsets = [1, 0], sizes = [1, 32], strides = [1, 1]} : vector<8x64xf32> to vector<1x32xf32>
    %604 = vector.extract_strided_slice %601 {offsets = [2, 0], sizes = [1, 32], strides = [1, 1]} : vector<8x64xf32> to vector<1x32xf32>
    %605 = vector.extract_strided_slice %601 {offsets = [3, 0], sizes = [1, 64], strides = [1, 1]} : vector<8x64xf32> to vector<1x64xf32>
    %606 = vector.extract_strided_slice %601 {offsets = [4, 0], sizes = [1, 32], strides = [1, 1]} : vector<8x64xf32> to vector<1x32xf32>
    %607 = vector.extract_strided_slice %601 {offsets = [5, 0], sizes = [1, 32], strides = [1, 1]} : vector<8x64xf32> to vector<1x32xf32>
    %608 = vector.extract_strided_slice %601 {offsets = [6, 0], sizes = [1, 32], strides = [1, 1]} : vector<8x64xf32> to vector<1x32xf32>
    %cst_173 = arith.constant -1.000000e+02 : f32
    %cst_174 = arith.constant 1.000000e+02 : f32
    %609 = vector.broadcast %cst_173 : f32 to vector<8x32xf32>
    %610 = arith.maximumf %609, %211 : vector<8x32xf32>
    %611 = vector.broadcast %cst_174 : f32 to vector<8x32xf32>
    %612 = arith.minimumf %611, %610 : vector<8x32xf32>
    %cst_175 = arith.constant dense<0.000000e+00> : vector<8x32xf32>
    %613 = tpu.matmul %612, %598, %cst_175 {dimension_numbers = #tpu.dot_dimension_numbers<[1], [0], [0], [1], [0, 0, 1, 1], [], []>} : vector<8x32xf32>, vector<32x32xf32>, vector<8x32xf32> -> vector<8x32xf32>
    %614 = vector.broadcast %602 : vector<1x32xf32> to vector<8x32xf32>
    %615 = arith.addf %613, %614 : vector<8x32xf32>
    %cst_176 = arith.constant -1.000000e+02 : f32
    %cst_177 = arith.constant 1.000000e+02 : f32
    %616 = vector.broadcast %cst_176 : f32 to vector<8x32xf32>
    %617 = arith.maximumf %616, %615 : vector<8x32xf32>
    %618 = vector.broadcast %cst_177 : f32 to vector<8x32xf32>
    %619 = arith.minimumf %618, %617 : vector<8x32xf32>
    %620 = arith.addf %612, %619 : vector<8x32xf32>
    %cst_178 = arith.constant dense<0.000000e+00> : vector<8xf32>
    %621 = vector.multi_reduction <add>, %620, %cst_178 [1] : vector<8x32xf32> to vector<8xf32>
    %622 = vector.shape_cast %621 : vector<8xf32> to vector<8x1xf32>
    %cst_179 = arith.constant 3.200000e+01 : f32
    %623 = vector.broadcast %cst_179 : f32 to vector<8x1xf32>
    %624 = arith.divf %622, %623 : vector<8x1xf32>
    %625 = arith.mulf %620, %620 : vector<8x32xf32>
    %cst_180 = arith.constant dense<0.000000e+00> : vector<8xf32>
    %626 = vector.multi_reduction <add>, %625, %cst_180 [1] : vector<8x32xf32> to vector<8xf32>
    %627 = vector.shape_cast %626 : vector<8xf32> to vector<8x1xf32>
    %cst_181 = arith.constant 3.200000e+01 : f32
    %628 = vector.broadcast %cst_181 : f32 to vector<8x1xf32>
    %629 = arith.divf %627, %628 : vector<8x1xf32>
    %630 = arith.mulf %624, %624 : vector<8x1xf32>
    %631 = arith.subf %629, %630 : vector<8x1xf32>
    %cst_182 = arith.constant 0.000000e+00 : f32
    %632 = vector.broadcast %cst_182 : f32 to vector<8x1xf32>
    %633 = arith.maximumf %631, %632 : vector<8x1xf32>
    %634 = vector.broadcast %624 : vector<8x1xf32> to vector<8x32xf32>
    %635 = arith.subf %620, %634 : vector<8x32xf32>
    %cst_183 = arith.constant 9.99999974E-6 : f32
    %636 = vector.broadcast %cst_183 : f32 to vector<8x1xf32>
    %637 = arith.addf %633, %636 : vector<8x1xf32>
    %638 = math.rsqrt %637 : vector<8x1xf32>
    %639 = vector.broadcast %638 : vector<8x1xf32> to vector<8x32xf32>
    %640 = arith.mulf %635, %639 : vector<8x32xf32>
    %641 = vector.broadcast %603 : vector<1x32xf32> to vector<8x32xf32>
    %642 = arith.mulf %640, %641 : vector<8x32xf32>
    %643 = vector.broadcast %604 : vector<1x32xf32> to vector<8x32xf32>
    %644 = arith.addf %642, %643 : vector<8x32xf32>
    %cst_184 = arith.constant dense<0.000000e+00> : vector<8x64xf32>
    %645 = tpu.matmul %644, %599, %cst_184 {dimension_numbers = #tpu.dot_dimension_numbers<[1], [0], [0], [1], [0, 0, 1, 1], [], []>} : vector<8x32xf32>, vector<32x64xf32>, vector<8x64xf32> -> vector<8x64xf32>
    %646 = vector.broadcast %605 : vector<1x64xf32> to vector<8x64xf32>
    %647 = arith.addf %645, %646 : vector<8x64xf32>
    %648 = arith.mulf %647, %647 : vector<8x64xf32>
    %649 = arith.mulf %647, %648 : vector<8x64xf32>
    %cst_185 = arith.constant 4.471500e-02 : f32
    %650 = vector.broadcast %cst_185 : f32 to vector<8x64xf32>
    %651 = arith.mulf %650, %649 : vector<8x64xf32>
    %652 = arith.addf %647, %651 : vector<8x64xf32>
    %cst_186 = arith.constant 0.797884583 : f32
    %653 = vector.broadcast %cst_186 : f32 to vector<8x64xf32>
    %654 = arith.mulf %653, %652 : vector<8x64xf32>
    %655 = math.tanh %654 : vector<8x64xf32>
    %cst_187 = arith.constant 1.000000e+00 : f32
    %656 = vector.broadcast %cst_187 : f32 to vector<8x64xf32>
    %657 = arith.addf %656, %655 : vector<8x64xf32>
    %cst_188 = arith.constant 5.000000e-01 : f32
    %658 = vector.broadcast %cst_188 : f32 to vector<8x64xf32>
    %659 = arith.mulf %658, %657 : vector<8x64xf32>
    %660 = arith.mulf %647, %659 : vector<8x64xf32>
    %cst_189 = arith.constant dense<0.000000e+00> : vector<8x32xf32>
    %661 = tpu.matmul %660, %600, %cst_189 {dimension_numbers = #tpu.dot_dimension_numbers<[1], [0], [0], [1], [0, 0, 1, 1], [], []>} : vector<8x64xf32>, vector<64x32xf32>, vector<8x32xf32> -> vector<8x32xf32>
    %662 = vector.broadcast %606 : vector<1x32xf32> to vector<8x32xf32>
    %663 = arith.addf %661, %662 : vector<8x32xf32>
    %cst_190 = arith.constant -1.000000e+02 : f32
    %cst_191 = arith.constant 1.000000e+02 : f32
    %664 = vector.broadcast %cst_190 : f32 to vector<8x32xf32>
    %665 = arith.maximumf %664, %663 : vector<8x32xf32>
    %666 = vector.broadcast %cst_191 : f32 to vector<8x32xf32>
    %667 = arith.minimumf %666, %665 : vector<8x32xf32>
    %668 = arith.addf %644, %667 : vector<8x32xf32>
    %cst_192 = arith.constant dense<0.000000e+00> : vector<8xf32>
    %669 = vector.multi_reduction <add>, %668, %cst_192 [1] : vector<8x32xf32> to vector<8xf32>
    %670 = vector.shape_cast %669 : vector<8xf32> to vector<8x1xf32>
    %cst_193 = arith.constant 3.200000e+01 : f32
    %671 = vector.broadcast %cst_193 : f32 to vector<8x1xf32>
    %672 = arith.divf %670, %671 : vector<8x1xf32>
    %673 = arith.mulf %668, %668 : vector<8x32xf32>
    %cst_194 = arith.constant dense<0.000000e+00> : vector<8xf32>
    %674 = vector.multi_reduction <add>, %673, %cst_194 [1] : vector<8x32xf32> to vector<8xf32>
    %675 = vector.shape_cast %674 : vector<8xf32> to vector<8x1xf32>
    %cst_195 = arith.constant 3.200000e+01 : f32
    %676 = vector.broadcast %cst_195 : f32 to vector<8x1xf32>
    %677 = arith.divf %675, %676 : vector<8x1xf32>
    %678 = arith.mulf %672, %672 : vector<8x1xf32>
    %679 = arith.subf %677, %678 : vector<8x1xf32>
    %cst_196 = arith.constant 0.000000e+00 : f32
    %680 = vector.broadcast %cst_196 : f32 to vector<8x1xf32>
    %681 = arith.maximumf %679, %680 : vector<8x1xf32>
    %682 = vector.broadcast %672 : vector<8x1xf32> to vector<8x32xf32>
    %683 = arith.subf %668, %682 : vector<8x32xf32>
    %cst_197 = arith.constant 9.99999974E-6 : f32
    %684 = vector.broadcast %cst_197 : f32 to vector<8x1xf32>
    %685 = arith.addf %681, %684 : vector<8x1xf32>
    %686 = math.rsqrt %685 : vector<8x1xf32>
    %687 = vector.broadcast %686 : vector<8x1xf32> to vector<8x32xf32>
    %688 = arith.mulf %683, %687 : vector<8x32xf32>
    %689 = vector.broadcast %607 : vector<1x32xf32> to vector<8x32xf32>
    %690 = arith.mulf %688, %689 : vector<8x32xf32>
    %691 = vector.broadcast %608 : vector<1x32xf32> to vector<8x32xf32>
    %692 = arith.addf %690, %691 : vector<8x32xf32>
    %cst_198 = arith.constant -1.000000e+02 : f32
    %cst_199 = arith.constant 1.000000e+02 : f32
    %693 = vector.broadcast %cst_198 : f32 to vector<8x32xf32>
    %694 = arith.maximumf %693, %692 : vector<8x32xf32>
    %695 = vector.broadcast %cst_199 : f32 to vector<8x32xf32>
    %696 = arith.minimumf %695, %694 : vector<8x32xf32>
    %c6 = arith.constant 6 : index
    %c0_200 = arith.constant 0 : index
    %c0_201 = arith.constant 0 : index
    %697 = vector.load %arg1[%c6, %c0_200, %c0_201] : memref<9x136x64xf32, #tpu.memory_space<vmem>>, vector<1x136x64xf32>
    %698 = vector.shape_cast %697 : vector<1x136x64xf32> to vector<136x64xf32>
    %699 = vector.extract_strided_slice %698 {offsets = [0, 0], sizes = [32, 32], strides = [1, 1]} : vector<136x64xf32> to vector<32x32xf32>
    %700 = vector.extract_strided_slice %698 {offsets = [32, 0], sizes = [32, 64], strides = [1, 1]} : vector<136x64xf32> to vector<32x64xf32>
    %701 = vector.extract_strided_slice %698 {offsets = [64, 0], sizes = [64, 32], strides = [1, 1]} : vector<136x64xf32> to vector<64x32xf32>
    %702 = vector.extract_strided_slice %698 {offsets = [128, 0], sizes = [8, 64], strides = [1, 1]} : vector<136x64xf32> to vector<8x64xf32>
    %703 = vector.extract_strided_slice %702 {offsets = [0, 0], sizes = [1, 32], strides = [1, 1]} : vector<8x64xf32> to vector<1x32xf32>
    %704 = vector.extract_strided_slice %702 {offsets = [1, 0], sizes = [1, 32], strides = [1, 1]} : vector<8x64xf32> to vector<1x32xf32>
    %705 = vector.extract_strided_slice %702 {offsets = [2, 0], sizes = [1, 32], strides = [1, 1]} : vector<8x64xf32> to vector<1x32xf32>
    %706 = vector.extract_strided_slice %702 {offsets = [3, 0], sizes = [1, 64], strides = [1, 1]} : vector<8x64xf32> to vector<1x64xf32>
    %707 = vector.extract_strided_slice %702 {offsets = [4, 0], sizes = [1, 32], strides = [1, 1]} : vector<8x64xf32> to vector<1x32xf32>
    %708 = vector.extract_strided_slice %702 {offsets = [5, 0], sizes = [1, 32], strides = [1, 1]} : vector<8x64xf32> to vector<1x32xf32>
    %709 = vector.extract_strided_slice %702 {offsets = [6, 0], sizes = [1, 32], strides = [1, 1]} : vector<8x64xf32> to vector<1x32xf32>
    %cst_202 = arith.constant -1.000000e+02 : f32
    %cst_203 = arith.constant 1.000000e+02 : f32
    %710 = vector.broadcast %cst_202 : f32 to vector<8x32xf32>
    %711 = arith.maximumf %710, %696 : vector<8x32xf32>
    %712 = vector.broadcast %cst_203 : f32 to vector<8x32xf32>
    %713 = arith.minimumf %712, %711 : vector<8x32xf32>
    %cst_204 = arith.constant dense<0.000000e+00> : vector<8x32xf32>
    %714 = tpu.matmul %713, %699, %cst_204 {dimension_numbers = #tpu.dot_dimension_numbers<[1], [0], [0], [1], [0, 0, 1, 1], [], []>} : vector<8x32xf32>, vector<32x32xf32>, vector<8x32xf32> -> vector<8x32xf32>
    %715 = vector.broadcast %703 : vector<1x32xf32> to vector<8x32xf32>
    %716 = arith.addf %714, %715 : vector<8x32xf32>
    %cst_205 = arith.constant -1.000000e+02 : f32
    %cst_206 = arith.constant 1.000000e+02 : f32
    %717 = vector.broadcast %cst_205 : f32 to vector<8x32xf32>
    %718 = arith.maximumf %717, %716 : vector<8x32xf32>
    %719 = vector.broadcast %cst_206 : f32 to vector<8x32xf32>
    %720 = arith.minimumf %719, %718 : vector<8x32xf32>
    %721 = arith.addf %713, %720 : vector<8x32xf32>
    %cst_207 = arith.constant dense<0.000000e+00> : vector<8xf32>
    %722 = vector.multi_reduction <add>, %721, %cst_207 [1] : vector<8x32xf32> to vector<8xf32>
    %723 = vector.shape_cast %722 : vector<8xf32> to vector<8x1xf32>
    %cst_208 = arith.constant 3.200000e+01 : f32
    %724 = vector.broadcast %cst_208 : f32 to vector<8x1xf32>
    %725 = arith.divf %723, %724 : vector<8x1xf32>
    %726 = arith.mulf %721, %721 : vector<8x32xf32>
    %cst_209 = arith.constant dense<0.000000e+00> : vector<8xf32>
    %727 = vector.multi_reduction <add>, %726, %cst_209 [1] : vector<8x32xf32> to vector<8xf32>
    %728 = vector.shape_cast %727 : vector<8xf32> to vector<8x1xf32>
    %cst_210 = arith.constant 3.200000e+01 : f32
    %729 = vector.broadcast %cst_210 : f32 to vector<8x1xf32>
    %730 = arith.divf %728, %729 : vector<8x1xf32>
    %731 = arith.mulf %725, %725 : vector<8x1xf32>
    %732 = arith.subf %730, %731 : vector<8x1xf32>
    %cst_211 = arith.constant 0.000000e+00 : f32
    %733 = vector.broadcast %cst_211 : f32 to vector<8x1xf32>
    %734 = arith.maximumf %732, %733 : vector<8x1xf32>
    %735 = vector.broadcast %725 : vector<8x1xf32> to vector<8x32xf32>
    %736 = arith.subf %721, %735 : vector<8x32xf32>
    %cst_212 = arith.constant 9.99999974E-6 : f32
    %737 = vector.broadcast %cst_212 : f32 to vector<8x1xf32>
    %738 = arith.addf %734, %737 : vector<8x1xf32>
    %739 = math.rsqrt %738 : vector<8x1xf32>
    %740 = vector.broadcast %739 : vector<8x1xf32> to vector<8x32xf32>
    %741 = arith.mulf %736, %740 : vector<8x32xf32>
    %742 = vector.broadcast %704 : vector<1x32xf32> to vector<8x32xf32>
    %743 = arith.mulf %741, %742 : vector<8x32xf32>
    %744 = vector.broadcast %705 : vector<1x32xf32> to vector<8x32xf32>
    %745 = arith.addf %743, %744 : vector<8x32xf32>
    %cst_213 = arith.constant dense<0.000000e+00> : vector<8x64xf32>
    %746 = tpu.matmul %745, %700, %cst_213 {dimension_numbers = #tpu.dot_dimension_numbers<[1], [0], [0], [1], [0, 0, 1, 1], [], []>} : vector<8x32xf32>, vector<32x64xf32>, vector<8x64xf32> -> vector<8x64xf32>
    %747 = vector.broadcast %706 : vector<1x64xf32> to vector<8x64xf32>
    %748 = arith.addf %746, %747 : vector<8x64xf32>
    %749 = arith.mulf %748, %748 : vector<8x64xf32>
    %750 = arith.mulf %748, %749 : vector<8x64xf32>
    %cst_214 = arith.constant 4.471500e-02 : f32
    %751 = vector.broadcast %cst_214 : f32 to vector<8x64xf32>
    %752 = arith.mulf %751, %750 : vector<8x64xf32>
    %753 = arith.addf %748, %752 : vector<8x64xf32>
    %cst_215 = arith.constant 0.797884583 : f32
    %754 = vector.broadcast %cst_215 : f32 to vector<8x64xf32>
    %755 = arith.mulf %754, %753 : vector<8x64xf32>
    %756 = math.tanh %755 : vector<8x64xf32>
    %cst_216 = arith.constant 1.000000e+00 : f32
    %757 = vector.broadcast %cst_216 : f32 to vector<8x64xf32>
    %758 = arith.addf %757, %756 : vector<8x64xf32>
    %cst_217 = arith.constant 5.000000e-01 : f32
    %759 = vector.broadcast %cst_217 : f32 to vector<8x64xf32>
    %760 = arith.mulf %759, %758 : vector<8x64xf32>
    %761 = arith.mulf %748, %760 : vector<8x64xf32>
    %cst_218 = arith.constant dense<0.000000e+00> : vector<8x32xf32>
    %762 = tpu.matmul %761, %701, %cst_218 {dimension_numbers = #tpu.dot_dimension_numbers<[1], [0], [0], [1], [0, 0, 1, 1], [], []>} : vector<8x64xf32>, vector<64x32xf32>, vector<8x32xf32> -> vector<8x32xf32>
    %763 = vector.broadcast %707 : vector<1x32xf32> to vector<8x32xf32>
    %764 = arith.addf %762, %763 : vector<8x32xf32>
    %cst_219 = arith.constant -1.000000e+02 : f32
    %cst_220 = arith.constant 1.000000e+02 : f32
    %765 = vector.broadcast %cst_219 : f32 to vector<8x32xf32>
    %766 = arith.maximumf %765, %764 : vector<8x32xf32>
    %767 = vector.broadcast %cst_220 : f32 to vector<8x32xf32>
    %768 = arith.minimumf %767, %766 : vector<8x32xf32>
    %769 = arith.addf %745, %768 : vector<8x32xf32>
    %cst_221 = arith.constant dense<0.000000e+00> : vector<8xf32>
    %770 = vector.multi_reduction <add>, %769, %cst_221 [1] : vector<8x32xf32> to vector<8xf32>
    %771 = vector.shape_cast %770 : vector<8xf32> to vector<8x1xf32>
    %cst_222 = arith.constant 3.200000e+01 : f32
    %772 = vector.broadcast %cst_222 : f32 to vector<8x1xf32>
    %773 = arith.divf %771, %772 : vector<8x1xf32>
    %774 = arith.mulf %769, %769 : vector<8x32xf32>
    %cst_223 = arith.constant dense<0.000000e+00> : vector<8xf32>
    %775 = vector.multi_reduction <add>, %774, %cst_223 [1] : vector<8x32xf32> to vector<8xf32>
    %776 = vector.shape_cast %775 : vector<8xf32> to vector<8x1xf32>
    %cst_224 = arith.constant 3.200000e+01 : f32
    %777 = vector.broadcast %cst_224 : f32 to vector<8x1xf32>
    %778 = arith.divf %776, %777 : vector<8x1xf32>
    %779 = arith.mulf %773, %773 : vector<8x1xf32>
    %780 = arith.subf %778, %779 : vector<8x1xf32>
    %cst_225 = arith.constant 0.000000e+00 : f32
    %781 = vector.broadcast %cst_225 : f32 to vector<8x1xf32>
    %782 = arith.maximumf %780, %781 : vector<8x1xf32>
    %783 = vector.broadcast %773 : vector<8x1xf32> to vector<8x32xf32>
    %784 = arith.subf %769, %783 : vector<8x32xf32>
    %cst_226 = arith.constant 9.99999974E-6 : f32
    %785 = vector.broadcast %cst_226 : f32 to vector<8x1xf32>
    %786 = arith.addf %782, %785 : vector<8x1xf32>
    %787 = math.rsqrt %786 : vector<8x1xf32>
    %788 = vector.broadcast %787 : vector<8x1xf32> to vector<8x32xf32>
    %789 = arith.mulf %784, %788 : vector<8x32xf32>
    %790 = vector.broadcast %708 : vector<1x32xf32> to vector<8x32xf32>
    %791 = arith.mulf %789, %790 : vector<8x32xf32>
    %792 = vector.broadcast %709 : vector<1x32xf32> to vector<8x32xf32>
    %793 = arith.addf %791, %792 : vector<8x32xf32>
    %cst_227 = arith.constant -1.000000e+02 : f32
    %cst_228 = arith.constant 1.000000e+02 : f32
    %794 = vector.broadcast %cst_227 : f32 to vector<8x32xf32>
    %795 = arith.maximumf %794, %793 : vector<8x32xf32>
    %796 = vector.broadcast %cst_228 : f32 to vector<8x32xf32>
    %797 = arith.minimumf %796, %795 : vector<8x32xf32>
    %c7 = arith.constant 7 : index
    %c0_229 = arith.constant 0 : index
    %c0_230 = arith.constant 0 : index
    %798 = vector.load %arg1[%c7, %c0_229, %c0_230] : memref<9x136x64xf32, #tpu.memory_space<vmem>>, vector<1x136x64xf32>
    %799 = vector.shape_cast %798 : vector<1x136x64xf32> to vector<136x64xf32>
    %800 = vector.extract_strided_slice %799 {offsets = [0, 0], sizes = [32, 32], strides = [1, 1]} : vector<136x64xf32> to vector<32x32xf32>
    %801 = vector.extract_strided_slice %799 {offsets = [32, 0], sizes = [32, 64], strides = [1, 1]} : vector<136x64xf32> to vector<32x64xf32>
    %802 = vector.extract_strided_slice %799 {offsets = [64, 0], sizes = [64, 32], strides = [1, 1]} : vector<136x64xf32> to vector<64x32xf32>
    %803 = vector.extract_strided_slice %799 {offsets = [128, 0], sizes = [8, 64], strides = [1, 1]} : vector<136x64xf32> to vector<8x64xf32>
    %804 = vector.extract_strided_slice %803 {offsets = [0, 0], sizes = [1, 32], strides = [1, 1]} : vector<8x64xf32> to vector<1x32xf32>
    %805 = vector.extract_strided_slice %803 {offsets = [1, 0], sizes = [1, 32], strides = [1, 1]} : vector<8x64xf32> to vector<1x32xf32>
    %806 = vector.extract_strided_slice %803 {offsets = [2, 0], sizes = [1, 32], strides = [1, 1]} : vector<8x64xf32> to vector<1x32xf32>
    %807 = vector.extract_strided_slice %803 {offsets = [3, 0], sizes = [1, 64], strides = [1, 1]} : vector<8x64xf32> to vector<1x64xf32>
    %808 = vector.extract_strided_slice %803 {offsets = [4, 0], sizes = [1, 32], strides = [1, 1]} : vector<8x64xf32> to vector<1x32xf32>
    %809 = vector.extract_strided_slice %803 {offsets = [5, 0], sizes = [1, 32], strides = [1, 1]} : vector<8x64xf32> to vector<1x32xf32>
    %810 = vector.extract_strided_slice %803 {offsets = [6, 0], sizes = [1, 32], strides = [1, 1]} : vector<8x64xf32> to vector<1x32xf32>
    %cst_231 = arith.constant -1.000000e+02 : f32
    %cst_232 = arith.constant 1.000000e+02 : f32
    %811 = vector.broadcast %cst_231 : f32 to vector<8x32xf32>
    %812 = arith.maximumf %811, %211 : vector<8x32xf32>
    %813 = vector.broadcast %cst_232 : f32 to vector<8x32xf32>
    %814 = arith.minimumf %813, %812 : vector<8x32xf32>
    %cst_233 = arith.constant dense<0.000000e+00> : vector<8x32xf32>
    %815 = tpu.matmul %814, %800, %cst_233 {dimension_numbers = #tpu.dot_dimension_numbers<[1], [0], [0], [1], [0, 0, 1, 1], [], []>} : vector<8x32xf32>, vector<32x32xf32>, vector<8x32xf32> -> vector<8x32xf32>
    %816 = vector.broadcast %804 : vector<1x32xf32> to vector<8x32xf32>
    %817 = arith.addf %815, %816 : vector<8x32xf32>
    %cst_234 = arith.constant -1.000000e+02 : f32
    %cst_235 = arith.constant 1.000000e+02 : f32
    %818 = vector.broadcast %cst_234 : f32 to vector<8x32xf32>
    %819 = arith.maximumf %818, %817 : vector<8x32xf32>
    %820 = vector.broadcast %cst_235 : f32 to vector<8x32xf32>
    %821 = arith.minimumf %820, %819 : vector<8x32xf32>
    %822 = arith.addf %814, %821 : vector<8x32xf32>
    %cst_236 = arith.constant dense<0.000000e+00> : vector<8xf32>
    %823 = vector.multi_reduction <add>, %822, %cst_236 [1] : vector<8x32xf32> to vector<8xf32>
    %824 = vector.shape_cast %823 : vector<8xf32> to vector<8x1xf32>
    %cst_237 = arith.constant 3.200000e+01 : f32
    %825 = vector.broadcast %cst_237 : f32 to vector<8x1xf32>
    %826 = arith.divf %824, %825 : vector<8x1xf32>
    %827 = arith.mulf %822, %822 : vector<8x32xf32>
    %cst_238 = arith.constant dense<0.000000e+00> : vector<8xf32>
    %828 = vector.multi_reduction <add>, %827, %cst_238 [1] : vector<8x32xf32> to vector<8xf32>
    %829 = vector.shape_cast %828 : vector<8xf32> to vector<8x1xf32>
    %cst_239 = arith.constant 3.200000e+01 : f32
    %830 = vector.broadcast %cst_239 : f32 to vector<8x1xf32>
    %831 = arith.divf %829, %830 : vector<8x1xf32>
    %832 = arith.mulf %826, %826 : vector<8x1xf32>
    %833 = arith.subf %831, %832 : vector<8x1xf32>
    %cst_240 = arith.constant 0.000000e+00 : f32
    %834 = vector.broadcast %cst_240 : f32 to vector<8x1xf32>
    %835 = arith.maximumf %833, %834 : vector<8x1xf32>
    %836 = vector.broadcast %826 : vector<8x1xf32> to vector<8x32xf32>
    %837 = arith.subf %822, %836 : vector<8x32xf32>
    %cst_241 = arith.constant 9.99999974E-6 : f32
    %838 = vector.broadcast %cst_241 : f32 to vector<8x1xf32>
    %839 = arith.addf %835, %838 : vector<8x1xf32>
    %840 = math.rsqrt %839 : vector<8x1xf32>
    %841 = vector.broadcast %840 : vector<8x1xf32> to vector<8x32xf32>
    %842 = arith.mulf %837, %841 : vector<8x32xf32>
    %843 = vector.broadcast %805 : vector<1x32xf32> to vector<8x32xf32>
    %844 = arith.mulf %842, %843 : vector<8x32xf32>
    %845 = vector.broadcast %806 : vector<1x32xf32> to vector<8x32xf32>
    %846 = arith.addf %844, %845 : vector<8x32xf32>
    %cst_242 = arith.constant dense<0.000000e+00> : vector<8x64xf32>
    %847 = tpu.matmul %846, %801, %cst_242 {dimension_numbers = #tpu.dot_dimension_numbers<[1], [0], [0], [1], [0, 0, 1, 1], [], []>} : vector<8x32xf32>, vector<32x64xf32>, vector<8x64xf32> -> vector<8x64xf32>
    %848 = vector.broadcast %807 : vector<1x64xf32> to vector<8x64xf32>
    %849 = arith.addf %847, %848 : vector<8x64xf32>
    %850 = arith.mulf %849, %849 : vector<8x64xf32>
    %851 = arith.mulf %849, %850 : vector<8x64xf32>
    %cst_243 = arith.constant 4.471500e-02 : f32
    %852 = vector.broadcast %cst_243 : f32 to vector<8x64xf32>
    %853 = arith.mulf %852, %851 : vector<8x64xf32>
    %854 = arith.addf %849, %853 : vector<8x64xf32>
    %cst_244 = arith.constant 0.797884583 : f32
    %855 = vector.broadcast %cst_244 : f32 to vector<8x64xf32>
    %856 = arith.mulf %855, %854 : vector<8x64xf32>
    %857 = math.tanh %856 : vector<8x64xf32>
    %cst_245 = arith.constant 1.000000e+00 : f32
    %858 = vector.broadcast %cst_245 : f32 to vector<8x64xf32>
    %859 = arith.addf %858, %857 : vector<8x64xf32>
    %cst_246 = arith.constant 5.000000e-01 : f32
    %860 = vector.broadcast %cst_246 : f32 to vector<8x64xf32>
    %861 = arith.mulf %860, %859 : vector<8x64xf32>
    %862 = arith.mulf %849, %861 : vector<8x64xf32>
    %cst_247 = arith.constant dense<0.000000e+00> : vector<8x32xf32>
    %863 = tpu.matmul %862, %802, %cst_247 {dimension_numbers = #tpu.dot_dimension_numbers<[1], [0], [0], [1], [0, 0, 1, 1], [], []>} : vector<8x64xf32>, vector<64x32xf32>, vector<8x32xf32> -> vector<8x32xf32>
    %864 = vector.broadcast %808 : vector<1x32xf32> to vector<8x32xf32>
    %865 = arith.addf %863, %864 : vector<8x32xf32>
    %cst_248 = arith.constant -1.000000e+02 : f32
    %cst_249 = arith.constant 1.000000e+02 : f32
    %866 = vector.broadcast %cst_248 : f32 to vector<8x32xf32>
    %867 = arith.maximumf %866, %865 : vector<8x32xf32>
    %868 = vector.broadcast %cst_249 : f32 to vector<8x32xf32>
    %869 = arith.minimumf %868, %867 : vector<8x32xf32>
    %870 = arith.addf %846, %869 : vector<8x32xf32>
    %cst_250 = arith.constant dense<0.000000e+00> : vector<8xf32>
    %871 = vector.multi_reduction <add>, %870, %cst_250 [1] : vector<8x32xf32> to vector<8xf32>
    %872 = vector.shape_cast %871 : vector<8xf32> to vector<8x1xf32>
    %cst_251 = arith.constant 3.200000e+01 : f32
    %873 = vector.broadcast %cst_251 : f32 to vector<8x1xf32>
    %874 = arith.divf %872, %873 : vector<8x1xf32>
    %875 = arith.mulf %870, %870 : vector<8x32xf32>
    %cst_252 = arith.constant dense<0.000000e+00> : vector<8xf32>
    %876 = vector.multi_reduction <add>, %875, %cst_252 [1] : vector<8x32xf32> to vector<8xf32>
    %877 = vector.shape_cast %876 : vector<8xf32> to vector<8x1xf32>
    %cst_253 = arith.constant 3.200000e+01 : f32
    %878 = vector.broadcast %cst_253 : f32 to vector<8x1xf32>
    %879 = arith.divf %877, %878 : vector<8x1xf32>
    %880 = arith.mulf %874, %874 : vector<8x1xf32>
    %881 = arith.subf %879, %880 : vector<8x1xf32>
    %cst_254 = arith.constant 0.000000e+00 : f32
    %882 = vector.broadcast %cst_254 : f32 to vector<8x1xf32>
    %883 = arith.maximumf %881, %882 : vector<8x1xf32>
    %884 = vector.broadcast %874 : vector<8x1xf32> to vector<8x32xf32>
    %885 = arith.subf %870, %884 : vector<8x32xf32>
    %cst_255 = arith.constant 9.99999974E-6 : f32
    %886 = vector.broadcast %cst_255 : f32 to vector<8x1xf32>
    %887 = arith.addf %883, %886 : vector<8x1xf32>
    %888 = math.rsqrt %887 : vector<8x1xf32>
    %889 = vector.broadcast %888 : vector<8x1xf32> to vector<8x32xf32>
    %890 = arith.mulf %885, %889 : vector<8x32xf32>
    %891 = vector.broadcast %809 : vector<1x32xf32> to vector<8x32xf32>
    %892 = arith.mulf %890, %891 : vector<8x32xf32>
    %893 = vector.broadcast %810 : vector<1x32xf32> to vector<8x32xf32>
    %894 = arith.addf %892, %893 : vector<8x32xf32>
    %cst_256 = arith.constant -1.000000e+02 : f32
    %cst_257 = arith.constant 1.000000e+02 : f32
    %895 = vector.broadcast %cst_256 : f32 to vector<8x32xf32>
    %896 = arith.maximumf %895, %894 : vector<8x32xf32>
    %897 = vector.broadcast %cst_257 : f32 to vector<8x32xf32>
    %898 = arith.minimumf %897, %896 : vector<8x32xf32>
    %c8 = arith.constant 8 : index
    %c0_258 = arith.constant 0 : index
    %c0_259 = arith.constant 0 : index
    %899 = vector.load %arg1[%c8, %c0_258, %c0_259] : memref<9x136x64xf32, #tpu.memory_space<vmem>>, vector<1x136x64xf32>
    %900 = vector.shape_cast %899 : vector<1x136x64xf32> to vector<136x64xf32>
    %901 = vector.extract_strided_slice %900 {offsets = [0, 0], sizes = [32, 32], strides = [1, 1]} : vector<136x64xf32> to vector<32x32xf32>
    %902 = vector.extract_strided_slice %900 {offsets = [32, 0], sizes = [32, 64], strides = [1, 1]} : vector<136x64xf32> to vector<32x64xf32>
    %903 = vector.extract_strided_slice %900 {offsets = [64, 0], sizes = [64, 32], strides = [1, 1]} : vector<136x64xf32> to vector<64x32xf32>
    %904 = vector.extract_strided_slice %900 {offsets = [128, 0], sizes = [8, 64], strides = [1, 1]} : vector<136x64xf32> to vector<8x64xf32>
    %905 = vector.extract_strided_slice %904 {offsets = [0, 0], sizes = [1, 32], strides = [1, 1]} : vector<8x64xf32> to vector<1x32xf32>
    %906 = vector.extract_strided_slice %904 {offsets = [1, 0], sizes = [1, 32], strides = [1, 1]} : vector<8x64xf32> to vector<1x32xf32>
    %907 = vector.extract_strided_slice %904 {offsets = [2, 0], sizes = [1, 32], strides = [1, 1]} : vector<8x64xf32> to vector<1x32xf32>
    %908 = vector.extract_strided_slice %904 {offsets = [3, 0], sizes = [1, 64], strides = [1, 1]} : vector<8x64xf32> to vector<1x64xf32>
    %909 = vector.extract_strided_slice %904 {offsets = [4, 0], sizes = [1, 32], strides = [1, 1]} : vector<8x64xf32> to vector<1x32xf32>
    %910 = vector.extract_strided_slice %904 {offsets = [5, 0], sizes = [1, 32], strides = [1, 1]} : vector<8x64xf32> to vector<1x32xf32>
    %911 = vector.extract_strided_slice %904 {offsets = [6, 0], sizes = [1, 32], strides = [1, 1]} : vector<8x64xf32> to vector<1x32xf32>
    %cst_260 = arith.constant -1.000000e+02 : f32
    %cst_261 = arith.constant 1.000000e+02 : f32
    %912 = vector.broadcast %cst_260 : f32 to vector<8x32xf32>
    %913 = arith.maximumf %912, %898 : vector<8x32xf32>
    %914 = vector.broadcast %cst_261 : f32 to vector<8x32xf32>
    %915 = arith.minimumf %914, %913 : vector<8x32xf32>
    %cst_262 = arith.constant dense<0.000000e+00> : vector<8x32xf32>
    %916 = tpu.matmul %915, %901, %cst_262 {dimension_numbers = #tpu.dot_dimension_numbers<[1], [0], [0], [1], [0, 0, 1, 1], [], []>} : vector<8x32xf32>, vector<32x32xf32>, vector<8x32xf32> -> vector<8x32xf32>
    %917 = vector.broadcast %905 : vector<1x32xf32> to vector<8x32xf32>
    %918 = arith.addf %916, %917 : vector<8x32xf32>
    %cst_263 = arith.constant -1.000000e+02 : f32
    %cst_264 = arith.constant 1.000000e+02 : f32
    %919 = vector.broadcast %cst_263 : f32 to vector<8x32xf32>
    %920 = arith.maximumf %919, %918 : vector<8x32xf32>
    %921 = vector.broadcast %cst_264 : f32 to vector<8x32xf32>
    %922 = arith.minimumf %921, %920 : vector<8x32xf32>
    %923 = arith.addf %915, %922 : vector<8x32xf32>
    %cst_265 = arith.constant dense<0.000000e+00> : vector<8xf32>
    %924 = vector.multi_reduction <add>, %923, %cst_265 [1] : vector<8x32xf32> to vector<8xf32>
    %925 = vector.shape_cast %924 : vector<8xf32> to vector<8x1xf32>
    %cst_266 = arith.constant 3.200000e+01 : f32
    %926 = vector.broadcast %cst_266 : f32 to vector<8x1xf32>
    %927 = arith.divf %925, %926 : vector<8x1xf32>
    %928 = arith.mulf %923, %923 : vector<8x32xf32>
    %cst_267 = arith.constant dense<0.000000e+00> : vector<8xf32>
    %929 = vector.multi_reduction <add>, %928, %cst_267 [1] : vector<8x32xf32> to vector<8xf32>
    %930 = vector.shape_cast %929 : vector<8xf32> to vector<8x1xf32>
    %cst_268 = arith.constant 3.200000e+01 : f32
    %931 = vector.broadcast %cst_268 : f32 to vector<8x1xf32>
    %932 = arith.divf %930, %931 : vector<8x1xf32>
    %933 = arith.mulf %927, %927 : vector<8x1xf32>
    %934 = arith.subf %932, %933 : vector<8x1xf32>
    %cst_269 = arith.constant 0.000000e+00 : f32
    %935 = vector.broadcast %cst_269 : f32 to vector<8x1xf32>
    %936 = arith.maximumf %934, %935 : vector<8x1xf32>
    %937 = vector.broadcast %927 : vector<8x1xf32> to vector<8x32xf32>
    %938 = arith.subf %923, %937 : vector<8x32xf32>
    %cst_270 = arith.constant 9.99999974E-6 : f32
    %939 = vector.broadcast %cst_270 : f32 to vector<8x1xf32>
    %940 = arith.addf %936, %939 : vector<8x1xf32>
    %941 = math.rsqrt %940 : vector<8x1xf32>
    %942 = vector.broadcast %941 : vector<8x1xf32> to vector<8x32xf32>
    %943 = arith.mulf %938, %942 : vector<8x32xf32>
    %944 = vector.broadcast %906 : vector<1x32xf32> to vector<8x32xf32>
    %945 = arith.mulf %943, %944 : vector<8x32xf32>
    %946 = vector.broadcast %907 : vector<1x32xf32> to vector<8x32xf32>
    %947 = arith.addf %945, %946 : vector<8x32xf32>
    %cst_271 = arith.constant dense<0.000000e+00> : vector<8x64xf32>
    %948 = tpu.matmul %947, %902, %cst_271 {dimension_numbers = #tpu.dot_dimension_numbers<[1], [0], [0], [1], [0, 0, 1, 1], [], []>} : vector<8x32xf32>, vector<32x64xf32>, vector<8x64xf32> -> vector<8x64xf32>
    %949 = vector.broadcast %908 : vector<1x64xf32> to vector<8x64xf32>
    %950 = arith.addf %948, %949 : vector<8x64xf32>
    %951 = arith.mulf %950, %950 : vector<8x64xf32>
    %952 = arith.mulf %950, %951 : vector<8x64xf32>
    %cst_272 = arith.constant 4.471500e-02 : f32
    %953 = vector.broadcast %cst_272 : f32 to vector<8x64xf32>
    %954 = arith.mulf %953, %952 : vector<8x64xf32>
    %955 = arith.addf %950, %954 : vector<8x64xf32>
    %cst_273 = arith.constant 0.797884583 : f32
    %956 = vector.broadcast %cst_273 : f32 to vector<8x64xf32>
    %957 = arith.mulf %956, %955 : vector<8x64xf32>
    %958 = math.tanh %957 : vector<8x64xf32>
    %cst_274 = arith.constant 1.000000e+00 : f32
    %959 = vector.broadcast %cst_274 : f32 to vector<8x64xf32>
    %960 = arith.addf %959, %958 : vector<8x64xf32>
    %cst_275 = arith.constant 5.000000e-01 : f32
    %961 = vector.broadcast %cst_275 : f32 to vector<8x64xf32>
    %962 = arith.mulf %961, %960 : vector<8x64xf32>
    %963 = arith.mulf %950, %962 : vector<8x64xf32>
    %cst_276 = arith.constant dense<0.000000e+00> : vector<8x32xf32>
    %964 = tpu.matmul %963, %903, %cst_276 {dimension_numbers = #tpu.dot_dimension_numbers<[1], [0], [0], [1], [0, 0, 1, 1], [], []>} : vector<8x64xf32>, vector<64x32xf32>, vector<8x32xf32> -> vector<8x32xf32>
    %965 = vector.broadcast %909 : vector<1x32xf32> to vector<8x32xf32>
    %966 = arith.addf %964, %965 : vector<8x32xf32>
    %cst_277 = arith.constant -1.000000e+02 : f32
    %cst_278 = arith.constant 1.000000e+02 : f32
    %967 = vector.broadcast %cst_277 : f32 to vector<8x32xf32>
    %968 = arith.maximumf %967, %966 : vector<8x32xf32>
    %969 = vector.broadcast %cst_278 : f32 to vector<8x32xf32>
    %970 = arith.minimumf %969, %968 : vector<8x32xf32>
    %971 = arith.addf %947, %970 : vector<8x32xf32>
    %cst_279 = arith.constant dense<0.000000e+00> : vector<8xf32>
    %972 = vector.multi_reduction <add>, %971, %cst_279 [1] : vector<8x32xf32> to vector<8xf32>
    %973 = vector.shape_cast %972 : vector<8xf32> to vector<8x1xf32>
    %cst_280 = arith.constant 3.200000e+01 : f32
    %974 = vector.broadcast %cst_280 : f32 to vector<8x1xf32>
    %975 = arith.divf %973, %974 : vector<8x1xf32>
    %976 = arith.mulf %971, %971 : vector<8x32xf32>
    %cst_281 = arith.constant dense<0.000000e+00> : vector<8xf32>
    %977 = vector.multi_reduction <add>, %976, %cst_281 [1] : vector<8x32xf32> to vector<8xf32>
    %978 = vector.shape_cast %977 : vector<8xf32> to vector<8x1xf32>
    %cst_282 = arith.constant 3.200000e+01 : f32
    %979 = vector.broadcast %cst_282 : f32 to vector<8x1xf32>
    %980 = arith.divf %978, %979 : vector<8x1xf32>
    %981 = arith.mulf %975, %975 : vector<8x1xf32>
    %982 = arith.subf %980, %981 : vector<8x1xf32>
    %cst_283 = arith.constant 0.000000e+00 : f32
    %983 = vector.broadcast %cst_283 : f32 to vector<8x1xf32>
    %984 = arith.maximumf %982, %983 : vector<8x1xf32>
    %985 = vector.broadcast %975 : vector<8x1xf32> to vector<8x32xf32>
    %986 = arith.subf %971, %985 : vector<8x32xf32>
    %cst_284 = arith.constant 9.99999974E-6 : f32
    %987 = vector.broadcast %cst_284 : f32 to vector<8x1xf32>
    %988 = arith.addf %984, %987 : vector<8x1xf32>
    %989 = math.rsqrt %988 : vector<8x1xf32>
    %990 = vector.broadcast %989 : vector<8x1xf32> to vector<8x32xf32>
    %991 = arith.mulf %986, %990 : vector<8x32xf32>
    %992 = vector.broadcast %910 : vector<1x32xf32> to vector<8x32xf32>
    %993 = arith.mulf %991, %992 : vector<8x32xf32>
    %994 = vector.broadcast %911 : vector<1x32xf32> to vector<8x32xf32>
    %995 = arith.addf %993, %994 : vector<8x32xf32>
    %cst_285 = arith.constant -1.000000e+02 : f32
    %cst_286 = arith.constant 1.000000e+02 : f32
    %996 = vector.broadcast %cst_285 : f32 to vector<8x32xf32>
    %997 = arith.maximumf %996, %995 : vector<8x32xf32>
    %998 = vector.broadcast %cst_286 : f32 to vector<8x32xf32>
    %999 = arith.minimumf %998, %997 : vector<8x32xf32>
    %c0_287 = arith.constant 0 : index
    %c0_288 = arith.constant 0 : index
    %1000 = vector.load %arg3[%c0_287, %c0_288] : memref<296x128xf32, #tpu.memory_space<vmem>>, vector<296x128xf32>
    %1001 = vector.extract_strided_slice %1000 {offsets = [0, 0], sizes = [96, 96], strides = [1, 1]} : vector<296x128xf32> to vector<96x96xf32>
    %1002 = vector.extract_strided_slice %1000 {offsets = [96, 0], sizes = [96, 96], strides = [1, 1]} : vector<296x128xf32> to vector<96x96xf32>
    %1003 = vector.extract_strided_slice %1000 {offsets = [192, 0], sizes = [96, 128], strides = [1, 1]} : vector<296x128xf32> to vector<96x128xf32>
    %1004 = vector.extract_strided_slice %1000 {offsets = [288, 0], sizes = [1, 96], strides = [1, 1]} : vector<296x128xf32> to vector<1x96xf32>
    %1005 = vector.extract_strided_slice %1000 {offsets = [289, 0], sizes = [1, 96], strides = [1, 1]} : vector<296x128xf32> to vector<1x96xf32>
    %1006 = vector.extract_strided_slice %1000 {offsets = [290, 0], sizes = [1, 128], strides = [1, 1]} : vector<296x128xf32> to vector<1x128xf32>
    %1007 = tpu.concatenate %595, %797, %999 in 1 : vector<8x32xf32>, vector<8x32xf32>, vector<8x32xf32> -> vector<8x96xf32>
    %cst_289 = arith.constant dense<0.000000e+00> : vector<8x96xf32>
    %1008 = tpu.matmul %1007, %1001, %cst_289 {dimension_numbers = #tpu.dot_dimension_numbers<[1], [0], [0], [1], [0, 0, 1, 1], [], []>} : vector<8x96xf32>, vector<96x96xf32>, vector<8x96xf32> -> vector<8x96xf32>
    %1009 = vector.broadcast %1004 : vector<1x96xf32> to vector<8x96xf32>
    %1010 = arith.addf %1008, %1009 : vector<8x96xf32>
    %cst_290 = arith.constant 0.000000e+00 : f32
    %1011 = vector.broadcast %cst_290 : f32 to vector<8x96xf32>
    %1012 = arith.maximumf %1010, %1011 : vector<8x96xf32>
    %cst_291 = arith.constant dense<0.000000e+00> : vector<8x96xf32>
    %1013 = tpu.matmul %1012, %1002, %cst_291 {dimension_numbers = #tpu.dot_dimension_numbers<[1], [0], [0], [1], [0, 0, 1, 1], [], []>} : vector<8x96xf32>, vector<96x96xf32>, vector<8x96xf32> -> vector<8x96xf32>
    %1014 = vector.broadcast %1005 : vector<1x96xf32> to vector<8x96xf32>
    %1015 = arith.addf %1013, %1014 : vector<8x96xf32>
    %cst_292 = arith.constant 0.000000e+00 : f32
    %1016 = vector.broadcast %cst_292 : f32 to vector<8x96xf32>
    %1017 = arith.maximumf %1015, %1016 : vector<8x96xf32>
    %cst_293 = arith.constant dense<0.000000e+00> : vector<8x128xf32>
    %1018 = tpu.matmul %1017, %1003, %cst_293 {dimension_numbers = #tpu.dot_dimension_numbers<[1], [0], [0], [1], [0, 0, 1, 1], [], []>} : vector<8x96xf32>, vector<96x128xf32>, vector<8x128xf32> -> vector<8x128xf32>
    %1019 = vector.broadcast %1006 : vector<1x128xf32> to vector<8x128xf32>
    %1020 = arith.addf %1018, %1019 : vector<8x128xf32>
    %1021 = arith.negf %1020 : vector<8x128xf32>
    %1022 = math.exp %1021 : vector<8x128xf32>
    %cst_294 = arith.constant 1.000000e+00 : f32
    %1023 = vector.broadcast %cst_294 : f32 to vector<8x128xf32>
    %1024 = arith.addf %1023, %1022 : vector<8x128xf32>
    %1025 = arith.divf %1023, %1024 : vector<8x128xf32>
    %cst_295 = arith.constant 9.99999997E-7 : f32
    %cst_296 = arith.constant 0.999998986 : f32
    %1026 = vector.broadcast %cst_295 : f32 to vector<8x128xf32>
    %1027 = arith.maximumf %1026, %1025 : vector<8x128xf32>
    %1028 = vector.broadcast %cst_296 : f32 to vector<8x128xf32>
    %1029 = arith.minimumf %1028, %1027 : vector<8x128xf32>
    %c0_297 = arith.constant 0 : index
    %c0_298 = arith.constant 0 : index
    %1030 = vector.load %arg4[%c0_297, %c0_298] : memref<8x128xf32, #tpu.memory_space<vmem>>, vector<8x128xf32>
    tpu.vector_store %arg4[%c0_297, %c0_298], %1029 {strides = array<i32>} : memref<8x128xf32, #tpu.memory_space<vmem>>, vector<8x128xf32>,
    return
  }
}

</mosaic_0001>

<llo_original>
// kernel: forward.1
$region0: #{forward.1}
  #allocation0 [shape = 'u32[]', space=smem, size = 0x4, offset = 0x4, fixed_abs, tag = 'smem constant byte address 0x4 - core index']
  #allocation1 [shape = 'u32[144,128]{1,0:T(1,128)}', space=vmem, size = 0x12000, scoped, tag = 'internal scratch']
  %s0 = inlined_call_operand.vmem [shape: f32[8,24], index: 0, kind: input, shape index: {}]
  %s1 = inlined_call_operand.vmem [shape: f32[9,136,64], index: 1, kind: input, shape index: {}]
  %s2 = inlined_call_operand.vmem [shape: f32[128,64], index: 2, kind: input, shape index: {}]
  %s3 = inlined_call_operand.vmem [shape: f32[296,128], index: 3, kind: input, shape index: {}]
  %s4 = inlined_call_operand.vmem [shape: f32[8,128], index: 4, kind: output, shape index: {}]
  %s5 = sld [smem:[#allocation0]]
  $region26: #{forward.1} parent=0
    _
  %s7 = ssub.s32 1, %s5
  %s8 = scalar_select 0, %s7, %s5
  // Predicated region
  $region2: #{forward.1} parent=0 // pred_check
    _
  $region3: #{forward.1} parent=0 // pred_check_branch
    %10 = sbr.rel (0) target = $region5
  $region4: #{forward.1} parent=0 // pred_region
    _
  $region5: #{forward.1} parent=0 // pred_fallthru
    _
  // Predicated region
  $region6: #{forward.1} parent=0 // pred_check
    _
  $region7: #{forward.1} parent=0 // pred_check_branch
    %12 = sbr.rel (0) target = $region9
  $region8: #{forward.1} parent=0 // pred_region
    _
  $region9: #{forward.1} parent=0 // pred_fallthru
    _
  // Predicated region
  $region10: #{forward.1} parent=0 // pred_check
    _
  $region11: #{forward.1} parent=0 // pred_check_branch
    %14 = sbr.rel (0) target = $region13
  $region12: #{forward.1} parent=0 // pred_region
    _
  $region13: #{forward.1} parent=0 // pred_fallthru
    _
  // Predicated region
  $region14: #{forward.1} parent=0 // pred_check
    _
  $region15: #{forward.1} parent=0 // pred_check_branch
    %16 = sbr.rel (0) target = $region17
  $region16: #{forward.1} parent=0 // pred_region
    _
  $region17: #{forward.1} parent=0 // pred_fallthru
    _
  %v17 = vld [vmem:[%s2] sm:$0xff]
  %v18 = vld [vmem:[%s2 + $0x8] sm:$0xff]
  %v19 = vld [vmem:[%s2 + $0x10] sm:$0xff]
  %v20 = vld [vmem:[%s2 + $0x18] sm:$0xff]
  %v21 = vld [vmem:[%s2 + $0x20] sm:$0xff]
  %v22 = vld [vmem:[%s2 + $0x28] sm:$0xff]
  %v23 = vld [vmem:[%s2 + $0x30] sm:$0xff]
  %v24 = vld [vmem:[%s2 + $0x38] sm:$0xff]
  %v25 = vld [vmem:[%s2 + $0x40] sm:$0xff]
  %v26 = vld [vmem:[%s2 + $0x48] sm:$0xff]
  %v27 = vld [vmem:[%s2 + $0x50] sm:$0xff]
  %v28 = vld [vmem:[%s2 + $0x58] sm:$0xff]
  %v29 = vld [vmem:[%s2 + $0x60] sm:$0xff]
  %v30 = vld [vmem:[%s2 + $0x68] sm:$0xff]
  %v31 = vld [vmem:[%s2 + $0x70] sm:$0xff]
  %v32 = vld [vmem:[%s2 + $0x78] sm:$0xff]
  %v33 = vld [vmem:[%s0] sm:$0xff]
  %v34 = vlaneseq
  %v35 = vshrl.u32 %v34, 7
  %v36 = vsub.s32 0, %v35
  %v37 = vrot.slane %v32, %v36
  %vm38 = vcmask 195584
  %v40 = vsel %vm38, %v33, 0
  %42 = vmatprep.subr.mxu0 0.0
  %43 = vmatpush1.msra.mxu0 0.0
  %44 = vmatprep.subr.mxu0 0.0
  %45 = vmatpush1.msra.mxu0 0.0
  %46 = vmatprep.subr.mxu0 0.0
  %47 = vmatpush1.msra.mxu0 0.0
  %48 = vmatprep.subr.mxu0 0.0
  %49 = vmatpush1.msra.mxu0 0.0
  %50 = vmatprep.subr.mxu0 0.0
  %51 = vmatpush1.msra.mxu0 0.0
  %52 = vmatprep.subr.mxu0 0.0
  %53 = vmatpush1.msra.mxu0 0.0
  %54 = vmatprep.subr.mxu0 0.0
  %55 = vmatpush1.msra.mxu0 0.0
  %56 = vmatprep.subr.mxu0 0.0
  %57 = vmatpush1.msra.mxu0 0.0
  %58 = vmatprep.subr.mxu0 0.0
  %59 = vmatpush1.msra.mxu0 0.0
  %60 = vmatprep.subr.mxu0 0.0
  %61 = vmatpush1.msra.mxu0 0.0
  %62 = vmatprep.subr.mxu0 0.0
  %63 = vmatpush1.msra.mxu0 0.0
  %64 = vmatprep.subr.mxu0 0.0
  %65 = vmatpush1.msra.mxu0 0.0
  %66 = vmatprep.subr.mxu0 0.0
  %67 = vmatpush1.msra.mxu0 0.0
  %68 = vmatprep.subr.mxu0 0.0
  %69 = vmatpush1.msra.mxu0 %v19
  %70 = vmatprep.subr.mxu0 0.0
  %71 = vmatpush1.msra.mxu0 %v18
  %72 = vmatprep.subr.mxu0 0.0
  %73 = vmatpush1.msra.mxu0 %v17
  %74 = vmatprep.subr.mxu0 0.0
  %75 = vmatpush2.msra.mxu0 0.0
  %76 = vmatprep.subr.mxu0 0.0
  %77 = vmatpush2.msra.mxu0 0.0
  %78 = vmatprep.subr.mxu0 0.0
  %79 = vmatpush2.msra.mxu0 0.0
  %80 = vmatprep.subr.mxu0 0.0
  %81 = vmatpush2.msra.mxu0 0.0
  %82 = vmatprep.subr.mxu0 0.0
  %83 = vmatpush2.msra.mxu0 0.0
  %84 = vmatprep.subr.mxu0 0.0
  %85 = vmatpush2.msra.mxu0 0.0
  %86 = vmatprep.subr.mxu0 0.0
  %87 = vmatpush2.msra.mxu0 0.0
  %88 = vmatprep.subr.mxu0 0.0
  %89 = vmatpush2.msra.mxu0 0.0
  %90 = vmatprep.subr.mxu0 0.0
  %91 = vmatpush2.msra.mxu0 0.0
  %92 = vmatprep.subr.mxu0 0.0
  %93 = vmatpush2.msra.mxu0 0.0
  %94 = vmatprep.subr.mxu0 0.0
  %95 = vmatpush2.msra.mxu0 0.0
  %96 = vmatprep.subr.mxu0 0.0
  %97 = vmatpush2.msra.mxu0 0.0
  %98 = vmatprep.subr.mxu0 0.0
  %99 = vmatpush2.msra.mxu0 0.0
  %100 = vmatprep.subr.mxu0 0.0
  %101 = vmatpush2.msra.mxu0 0.0
  %102 = vmatprep.subr.mxu0 0.0
  %103 = vmatpush2.msra.mxu0 0.0
  %104 = vmatprep.subr.mxu0 0.0
  %105 = vmatpush2.msra.mxu0 0.0
  %106 = vmatprep.mubr.f32.mxu0 0.0
  %107 = vmatmul.mubr.f32.gmra.mxu0 %v40
  %v108 = vpop.f32.mrf.mxu0
  %v109 = vadd.f32 %v37, %v108
  %v110 = vpop.f32.mrf.mxu0
  %111 = vdwg.mxu0
  %v112 = vld [vmem:[%s1] sm:$0xff]
  %v113 = vld [vmem:[%s1 + $0x8] sm:$0xff]
  %v114 = vld [vmem:[%s1 + $0x10] sm:$0xff]
  %v115 = vld [vmem:[%s1 + $0x18] sm:$0xff]
  %v116 = vld [vmem:[%s1 + $0x20] sm:$0xff]
  %v117 = vld [vmem:[%s1 + $0x28] sm:$0xff]
  %v118 = vld [vmem:[%s1 + $0x30] sm:$0xff]
  %v119 = vld [vmem:[%s1 + $0x38] sm:$0xff]
  %v120 = vld [vmem:[%s1 + $0x40] sm:$0xff]
  %v121 = vld [vmem:[%s1 + $0x48] sm:$0xff]
  %v122 = vld [vmem:[%s1 + $0x50] sm:$0xff]
  %v123 = vld [vmem:[%s1 + $0x58] sm:$0xff]
  %v124 = vld [vmem:[%s1 + $0x60] sm:$0xff]
  %v125 = vld [vmem:[%s1 + $0x68] sm:$0xff]
  %v126 = vld [vmem:[%s1 + $0x70] sm:$0xff]
  %v127 = vld [vmem:[%s1 + $0x78] sm:$0xff]
  %v128 = vld [vmem:[%s1 + $0x80] sm:$0xff]
  %v129 = vmax.f32 %v109, -100.0
  %v130 = vmin.f32 %v129, 100.0
  %v131 = vlaneseq
  %v132 = vshrl.u32 %v131, 7
  %v133 = vsub.s32 0, %v132
  %v134 = vrot.slane %v128, %v133
  %vm135 = vcmask 261120
  %v137 = vsel %vm135, %v130, 0
  %139 = vmatprep.subr.mxu0 0.0
  %140 = vmatpush1.msra.mxu0 0.0
  %141 = vmatprep.subr.mxu0 0.0
  %142 = vmatpush1.msra.mxu0 0.0
  %143 = vmatprep.subr.mxu0 0.0
  %144 = vmatpush1.msra.mxu0 0.0
  %145 = vmatprep.subr.mxu0 0.0
  %146 = vmatpush1.msra.mxu0 0.0
  %147 = vmatprep.subr.mxu0 0.0
  %148 = vmatpush1.msra.mxu0 0.0
  %149 = vmatprep.subr.mxu0 0.0
  %150 = vmatpush1.msra.mxu0 0.0
  %151 = vmatprep.subr.mxu0 0.0
  %152 = vmatpush1.msra.mxu0 0.0
  %153 = vmatprep.subr.mxu0 0.0
  %154 = vmatpush1.msra.mxu0 0.0
  %155 = vmatprep.subr.mxu0 0.0
  %156 = vmatpush1.msra.mxu0 0.0
  %157 = vmatprep.subr.mxu0 0.0
  %158 = vmatpush1.msra.mxu0 0.0
  %159 = vmatprep.subr.mxu0 0.0
  %160 = vmatpush1.msra.mxu0 0.0
  %161 = vmatprep.subr.mxu0 0.0
  %162 = vmatpush1.msra.mxu0 0.0
  %163 = vmatprep.subr.mxu0 0.0
  %164 = vmatpush1.msra.mxu0 %v115
  %165 = vmatprep.subr.mxu0 0.0
  %166 = vmatpush1.msra.mxu0 %v114
  %167 = vmatprep.subr.mxu0 0.0
  %168 = vmatpush1.msra.mxu0 %v113
  %169 = vmatprep.subr.mxu0 0.0
  %170 = vmatpush1.msra.mxu0 %v112
  %171 = vmatprep.subr.mxu0 0.0
  %172 = vmatpush2.msra.mxu0 0.0
  %173 = vmatprep.subr.mxu0 0.0
  %174 = vmatpush2.msra.mxu0 0.0
  %175 = vmatprep.subr.mxu0 0.0
  %176 = vmatpush2.msra.mxu0 0.0
  %177 = vmatprep.subr.mxu0 0.0
  %178 = vmatpush2.msra.mxu0 0.0
  %179 = vmatprep.subr.mxu0 0.0
  %180 = vmatpush2.msra.mxu0 0.0
  %181 = vmatprep.subr.mxu0 0.0
  %182 = vmatpush2.msra.mxu0 0.0
  %183 = vmatprep.subr.mxu0 0.0
  %184 = vmatpush2.msra.mxu0 0.0
  %185 = vmatprep.subr.mxu0 0.0
  %186 = vmatpush2.msra.mxu0 0.0
  %187 = vmatprep.subr.mxu0 0.0
  %188 = vmatpush2.msra.mxu0 0.0
  %189 = vmatprep.subr.mxu0 0.0
  %190 = vmatpush2.msra.mxu0 0.0
  %191 = vmatprep.subr.mxu0 0.0
  %192 = vmatpush2.msra.mxu0 0.0
  %193 = vmatprep.subr.mxu0 0.0
  %194 = vmatpush2.msra.mxu0 0.0
  %195 = vmatprep.subr.mxu0 0.0
  %196 = vmatpush2.msra.mxu0 0.0
  %197 = vmatprep.subr.mxu0 0.0
  %198 = vmatpush2.msra.mxu0 0.0
  %199 = vmatprep.subr.mxu0 0.0
  %200 = vmatpush2.msra.mxu0 0.0
  %201 = vmatprep.subr.mxu0 0.0
  %202 = vmatpush2.msra.mxu0 0.0
  %203 = vmatprep.mubr.f32.mxu0 0.0
  %204 = vmatmul.mubr.f32.gmra.mxu0 %v137
  %v205 = vpop.f32.mrf.mxu0
  %v206 = vadd.f32 %v134, %v205
  %v207 = vpop.f32.mrf.mxu0
  %208 = vdwg.mxu0
  %v209 = vmax.f32 %v206, -100.0
  %v210 = vmin.f32 %v209, 100.0
  %v211 = vadd.f32 %v130, %v210
  %v212 = vsel %vm135, %v211, 0.0
  %213 = vadd.xlane.f32.xlu0 %v212
  %v214 = vpop.xlane.xlu0 %213
  %v215 = vrcp.pop 32.0
  %v216 = vmul.f32 %v214, %v215
  %v217 = vmul.f32 %v211, %v211
  %v218 = vsel %vm135, %v217, 0.0
  %219 = vadd.xlane.f32.xlu0 %v218
  %v220 = vpop.xlane.xlu0 %219
  %v221 = vmul.f32 %v220, %v215
  %v222 = vmul.f32 %v216, %v216
  %v223 = vsub.f32 %v221, %v222
  %v224 = vmax.f32 %v223, 0.0
  %v225 = vsub.f32 %v211, %v216
  %v226 = vadd.f32 %v224, 1e-05
  %v227 = vrsqrt.pop %v226
  %v228 = vmul.f32 %v225, %v227
  %v229 = vlaneseq
  %v230 = vshrl.u32 %v229, 7
  %v231 = vsub.s32 1, %v230
  %v232 = vrot.slane %v128, %v231
  %v233 = vmul.f32 %v228, %v232
  %v234 = vlaneseq
  %v235 = vshrl.u32 %v234, 7
  %v236 = vsub.s32 2, %v235
  %v237 = vrot.slane %v128, %v236
  %v238 = vadd.f32 %v233, %v237
  %v239 = vlaneseq
  %v240 = vshrl.u32 %v239, 7
  %v241 = vsub.s32 3, %v240
  %v242 = vrot.slane %v128, %v241
  %v244 = vsel %vm135, %v238, 0
  %246 = vmatprep.subr.mxu0 0.0
  %247 = vmatpush1.msra.mxu0 0.0
  %248 = vmatprep.subr.mxu0 0.0
  %249 = vmatpush1.msra.mxu0 0.0
  %250 = vmatprep.subr.mxu0 0.0
  %251 = vmatpush1.msra.mxu0 0.0
  %252 = vmatprep.subr.mxu0 0.0
  %253 = vmatpush1.msra.mxu0 0.0
  %254 = vmatprep.subr.mxu0 0.0
  %255 = vmatpush1.msra.mxu0 0.0
  %256 = vmatprep.subr.mxu0 0.0
  %257 = vmatpush1.msra.mxu0 0.0
  %258 = vmatprep.subr.mxu0 0.0
  %259 = vmatpush1.msra.mxu0 0.0
  %260 = vmatprep.subr.mxu0 0.0
  %261 = vmatpush1.msra.mxu0 0.0
  %262 = vmatprep.subr.mxu0 0.0
  %263 = vmatpush1.msra.mxu0 0.0
  %264 = vmatprep.subr.mxu0 0.0
  %265 = vmatpush1.msra.mxu0 0.0
  %266 = vmatprep.subr.mxu0 0.0
  %267 = vmatpush1.msra.mxu0 0.0
  %268 = vmatprep.subr.mxu0 0.0
  %269 = vmatpush1.msra.mxu0 0.0
  %270 = vmatprep.subr.mxu0 0.0
  %271 = vmatpush1.msra.mxu0 %v119
  %272 = vmatprep.subr.mxu0 0.0
  %273 = vmatpush1.msra.mxu0 %v118
  %274 = vmatprep.subr.mxu0 0.0
  %275 = vmatpush1.msra.mxu0 %v117
  %276 = vmatprep.subr.mxu0 0.0
  %277 = vmatpush1.msra.mxu0 %v116
  %278 = vmatprep.subr.mxu0 0.0
  %279 = vmatpush2.msra.mxu0 0.0
  %280 = vmatprep.subr.mxu0 0.0
  %281 = vmatpush2.msra.mxu0 0.0
  %282 = vmatprep.subr.mxu0 0.0
  %283 = vmatpush2.msra.mxu0 0.0
  %284 = vmatprep.subr.mxu0 0.0
  %285 = vmatpush2.msra.mxu0 0.0
  %286 = vmatprep.subr.mxu0 0.0
  %287 = vmatpush2.msra.mxu0 0.0
  %288 = vmatprep.subr.mxu0 0.0
  %289 = vmatpush2.msra.mxu0 0.0
  %290 = vmatprep.subr.mxu0 0.0
  %291 = vmatpush2.msra.mxu0 0.0
  %292 = vmatprep.subr.mxu0 0.0
  %293 = vmatpush2.msra.mxu0 0.0
  %294 = vmatprep.subr.mxu0 0.0
  %295 = vmatpush2.msra.mxu0 0.0
  %296 = vmatprep.subr.mxu0 0.0
  %297 = vmatpush2.msra.mxu0 0.0
  %298 = vmatprep.subr.mxu0 0.0
  %299 = vmatpush2.msra.mxu0 0.0
  %300 = vmatprep.subr.mxu0 0.0
  %301 = vmatpush2.msra.mxu0 0.0
  %302 = vmatprep.subr.mxu0 0.0
  %303 = vmatpush2.msra.mxu0 0.0
  %304 = vmatprep.subr.mxu0 0.0
  %305 = vmatpush2.msra.mxu0 0.0
  %306 = vmatprep.subr.mxu0 0.0
  %307 = vmatpush2.msra.mxu0 0.0
  %308 = vmatprep.subr.mxu0 0.0
  %309 = vmatpush2.msra.mxu0 0.0
  %310 = vmatprep.mubr.f32.mxu0 0.0
  %311 = vmatmul.mubr.f32.gmra.mxu0 %v244
  %v312 = vpop.f32.mrf.mxu0
  %v313 = vadd.f32 %v242, %v312
  %v314 = vpop.f32.mrf.mxu0
  %315 = vdwg.mxu0
  %v316 = vmul.f32 %v313, %v313
  %v317 = vmul.f32 %v313, %v316
  %v318 = vmul.f32 %v317, 0.044715
  %v319 = vadd.f32 %v313, %v318
  %v320 = vmul.f32 %v319, 0.7978846
  %v321 = vtanh.pop %v320
  %v322 = vadd.f32 %v321, 1.0
  %v323 = vmul.f32 %v322, 0.5
  %v324 = vmul.f32 %v313, %v323
  %v325 = vlaneseq
  %v326 = vshrl.u32 %v325, 7
  %v327 = vsub.s32 4, %v326
  %v328 = vrot.slane %v128, %v327
  %vm329 = vcmask 523264
  %v331 = vsel %vm329, %v324, 0
  %333 = vmatprep.subr.mxu0 0.0
  %334 = vmatpush1.msra.mxu0 0.0
  %335 = vmatprep.subr.mxu0 0.0
  %336 = vmatpush1.msra.mxu0 0.0
  %337 = vmatprep.subr.mxu0 0.0
  %338 = vmatpush1.msra.mxu0 0.0
  %339 = vmatprep.subr.mxu0 0.0
  %340 = vmatpush1.msra.mxu0 0.0
  %341 = vmatprep.subr.mxu0 0.0
  %342 = vmatpush1.msra.mxu0 0.0
  %343 = vmatprep.subr.mxu0 0.0
  %344 = vmatpush1.msra.mxu0 0.0
  %345 = vmatprep.subr.mxu0 0.0
  %346 = vmatpush1.msra.mxu0 0.0
  %347 = vmatprep.subr.mxu0 0.0
  %348 = vmatpush1.msra.mxu0 0.0
  %349 = vmatprep.subr.mxu0 0.0
  %350 = vmatpush1.msra.mxu0 %v127
  %351 = vmatprep.subr.mxu0 0.0
  %352 = vmatpush1.msra.mxu0 %v126
  %353 = vmatprep.subr.mxu0 0.0
  %354 = vmatpush1.msra.mxu0 %v125
  %355 = vmatprep.subr.mxu0 0.0
  %356 = vmatpush1.msra.mxu0 %v124
  %357 = vmatprep.subr.mxu0 0.0
  %358 = vmatpush1.msra.mxu0 %v123
  %359 = vmatprep.subr.mxu0 0.0
  %360 = vmatpush1.msra.mxu0 %v122
  %361 = vmatprep.subr.mxu0 0.0
  %362 = vmatpush1.msra.mxu0 %v121
  %363 = vmatprep.subr.mxu0 0.0
  %364 = vmatpush1.msra.mxu0 %v120
  %365 = vmatprep.subr.mxu0 0.0
  %366 = vmatpush2.msra.mxu0 0.0
  %367 = vmatprep.subr.mxu0 0.0
  %368 = vmatpush2.msra.mxu0 0.0
  %369 = vmatprep.subr.mxu0 0.0
  %370 = vmatpush2.msra.mxu0 0.0
  %371 = vmatprep.subr.mxu0 0.0
  %372 = vmatpush2.msra.mxu0 0.0
  %373 = vmatprep.subr.mxu0 0.0
  %374 = vmatpush2.msra.mxu0 0.0
  %375 = vmatprep.subr.mxu0 0.0
  %376 = vmatpush2.msra.mxu0 0.0
  %377 = vmatprep.subr.mxu0 0.0
  %378 = vmatpush2.msra.mxu0 0.0
  %379 = vmatprep.subr.mxu0 0.0
  %380 = vmatpush2.msra.mxu0 0.0
  %381 = vmatprep.subr.mxu0 0.0
  %382 = vmatpush2.msra.mxu0 0.0
  %383 = vmatprep.subr.mxu0 0.0
  %384 = vmatpush2.msra.mxu0 0.0
  %385 = vmatprep.subr.mxu0 0.0
  %386 = vmatpush2.msra.mxu0 0.0
  %387 = vmatprep.subr.mxu0 0.0
  %388 = vmatpush2.msra.mxu0 0.0
  %389 = vmatprep.subr.mxu0 0.0
  %390 = vmatpush2.msra.mxu0 0.0
  %391 = vmatprep.subr.mxu0 0.0
  %392 = vmatpush2.msra.mxu0 0.0
  %393 = vmatprep.subr.mxu0 0.0
  %394 = vmatpush2.msra.mxu0 0.0
  %395 = vmatprep.subr.mxu0 0.0
  %396 = vmatpush2.msra.mxu0 0.0
  %397 = vmatprep.mubr.f32.mxu0 0.0
  %398 = vmatmul.mubr.f32.gmra.mxu0 %v331
  %v399 = vpop.f32.mrf.mxu0
  %v400 = vadd.f32 %v328, %v399
  %v401 = vpop.f32.mrf.mxu0
  %402 = vdwg.mxu0
  %v403 = vmax.f32 %v400, -100.0
  %v404 = vmin.f32 %v403, 100.0
  %v405 = vadd.f32 %v238, %v404
  %v406 = vsel %vm135, %v405, 0.0
  %407 = vadd.xlane.f32.xlu0 %v406
  %v408 = vpop.xlane.xlu0 %407
  %v409 = vmul.f32 %v408, %v215
  %v410 = vmul.f32 %v405, %v405
  %v411 = vsel %vm135, %v410, 0.0
  %412 = vadd.xlane.f32.xlu0 %v411
  %v413 = vpop.xlane.xlu0 %412
  %v414 = vmul.f32 %v413, %v215
  %v415 = vmul.f32 %v409, %v409
  %v416 = vsub.f32 %v414, %v415
  %v417 = vmax.f32 %v416, 0.0
  %v418 = vsub.f32 %v405, %v409
  %v419 = vadd.f32 %v417, 1e-05
  %v420 = vrsqrt.pop %v419
  %v421 = vmul.f32 %v418, %v420
  %v422 = vlaneseq
  %v423 = vshrl.u32 %v422, 7
  %v424 = vsub.s32 5, %v423
  %v425 = vrot.slane %v128, %v424
  %v426 = vmul.f32 %v421, %v425
  %v427 = vlaneseq
  %v428 = vshrl.u32 %v427, 7
  %v429 = vsub.s32 6, %v428
  %v430 = vrot.slane %v128, %v429
  %v431 = vadd.f32 %v426, %v430
  %v432 = vmax.f32 %v431, -100.0
  %v433 = vmin.f32 %v432, 100.0
  %s434 = scalar_lea.vmem %s1, 136
  %v435 = vld [vmem:[%s434] sm:$0xff]
  %v436 = vld [vmem:[%s434 + $0x8] sm:$0xff]
  %v437 = vld [vmem:[%s434 + $0x10] sm:$0xff]
  %v438 = vld [vmem:[%s434 + $0x18] sm:$0xff]
  %v439 = vld [vmem:[%s434 + $0x20] sm:$0xff]
  %v440 = vld [vmem:[%s434 + $0x28] sm:$0xff]
  %v441 = vld [vmem:[%s434 + $0x30] sm:$0xff]
  %v442 = vld [vmem:[%s434 + $0x38] sm:$0xff]
  %v443 = vld [vmem:[%s434 + $0x40] sm:$0xff]
  %v444 = vld [vmem:[%s434 + $0x48] sm:$0xff]
  %v445 = vld [vmem:[%s434 + $0x50] sm:$0xff]
  %v446 = vld [vmem:[%s434 + $0x58] sm:$0xff]
  %v447 = vld [vmem:[%s434 + $0x60] sm:$0xff]
  %v448 = vld [vmem:[%s434 + $0x68] sm:$0xff]
  %v449 = vld [vmem:[%s434 + $0x70] sm:$0xff]
  %v450 = vld [vmem:[%s434 + $0x78] sm:$0xff]
  %v451 = vld [vmem:[%s434 + $0x80] sm:$0xff]
  %v452 = vmax.f32 %v433, -100.0
  %v453 = vmin.f32 %v452, 100.0
  %v454 = vlaneseq
  %v455 = vshrl.u32 %v454, 7
  %v456 = vsub.s32 0, %v455
  %v457 = vrot.slane %v451, %v456
  %v459 = vsel %vm135, %v453, 0
  %461 = vmatprep.subr.mxu0 0.0
  %462 = vmatpush1.msra.mxu0 0.0
  %463 = vmatprep.subr.mxu0 0.0
  %464 = vmatpush1.msra.mxu0 0.0
  %465 = vmatprep.subr.mxu0 0.0
  %466 = vmatpush1.msra.mxu0 0.0
  %467 = vmatprep.subr.mxu0 0.0
  %468 = vmatpush1.msra.mxu0 0.0
  %469 = vmatprep.subr.mxu0 0.0
  %470 = vmatpush1.msra.mxu0 0.0
  %471 = vmatprep.subr.mxu0 0.0
  %472 = vmatpush1.msra.mxu0 0.0
  %473 = vmatprep.subr.mxu0 0.0
  %474 = vmatpush1.msra.mxu0 0.0
  %475 = vmatprep.subr.mxu0 0.0
  %476 = vmatpush1.msra.mxu0 0.0
  %477 = vmatprep.subr.mxu0 0.0
  %478 = vmatpush1.msra.mxu0 0.0
  %479 = vmatprep.subr.mxu0 0.0
  %480 = vmatpush1.msra.mxu0 0.0
  %481 = vmatprep.subr.mxu0 0.0
  %482 = vmatpush1.msra.mxu0 0.0
  %483 = vmatprep.subr.mxu0 0.0
  %484 = vmatpush1.msra.mxu0 0.0
  %485 = vmatprep.subr.mxu0 0.0
  %486 = vmatpush1.msra.mxu0 %v438
  %487 = vmatprep.subr.mxu0 0.0
  %488 = vmatpush1.msra.mxu0 %v437
  %489 = vmatprep.subr.mxu0 0.0
  %490 = vmatpush1.msra.mxu0 %v436
  %491 = vmatprep.subr.mxu0 0.0
  %492 = vmatpush1.msra.mxu0 %v435
  %493 = vmatprep.subr.mxu0 0.0
  %494 = vmatpush2.msra.mxu0 0.0
  %495 = vmatprep.subr.mxu0 0.0
  %496 = vmatpush2.msra.mxu0 0.0
  %497 = vmatprep.subr.mxu0 0.0
  %498 = vmatpush2.msra.mxu0 0.0
  %499 = vmatprep.subr.mxu0 0.0
  %500 = vmatpush2.msra.mxu0 0.0
  %501 = vmatprep.subr.mxu0 0.0
  %502 = vmatpush2.msra.mxu0 0.0
  %503 = vmatprep.subr.mxu0 0.0
  %504 = vmatpush2.msra.mxu0 0.0
  %505 = vmatprep.subr.mxu0 0.0
  %506 = vmatpush2.msra.mxu0 0.0
  %507 = vmatprep.subr.mxu0 0.0
  %508 = vmatpush2.msra.mxu0 0.0
  %509 = vmatprep.subr.mxu0 0.0
  %510 = vmatpush2.msra.mxu0 0.0
  %511 = vmatprep.subr.mxu0 0.0
  %512 = vmatpush2.msra.mxu0 0.0
  %513 = vmatprep.subr.mxu0 0.0
  %514 = vmatpush2.msra.mxu0 0.0
  %515 = vmatprep.subr.mxu0 0.0
  %516 = vmatpush2.msra.mxu0 0.0
  %517 = vmatprep.subr.mxu0 0.0
  %518 = vmatpush2.msra.mxu0 0.0
  %519 = vmatprep.subr.mxu0 0.0
  %520 = vmatpush2.msra.mxu0 0.0
  %521 = vmatprep.subr.mxu0 0.0
  %522 = vmatpush2.msra.mxu0 0.0
  %523 = vmatprep.subr.mxu0 0.0
  %524 = vmatpush2.msra.mxu0 0.0
  %525 = vmatprep.mubr.f32.mxu0 0.0
  %526 = vmatmul.mubr.f32.gmra.mxu0 %v459
  %v527 = vpop.f32.mrf.mxu0
  %v528 = vadd.f32 %v457, %v527
  %v529 = vpop.f32.mrf.mxu0
  %530 = vdwg.mxu0
  %v531 = vmax.f32 %v528, -100.0
  %v532 = vmin.f32 %v531, 100.0
  %v533 = vadd.f32 %v453, %v532
  %v534 = vsel %vm135, %v533, 0.0
  %535 = vadd.xlane.f32.xlu0 %v534
  %v536 = vpop.xlane.xlu0 %535
  %v537 = vmul.f32 %v536, %v215
  %v538 = vmul.f32 %v533, %v533
  %v539 = vsel %vm135, %v538, 0.0
  %540 = vadd.xlane.f32.xlu0 %v539
  %v541 = vpop.xlane.xlu0 %540
  %v542 = vmul.f32 %v541, %v215
  %v543 = vmul.f32 %v537, %v537
  %v544 = vsub.f32 %v542, %v543
  %v545 = vmax.f32 %v544, 0.0
  %v546 = vsub.f32 %v533, %v537
  %v547 = vadd.f32 %v545, 1e-05
  %v548 = vrsqrt.pop %v547
  %v549 = vmul.f32 %v546, %v548
  %v550 = vlaneseq
  %v551 = vshrl.u32 %v550, 7
  %v552 = vsub.s32 1, %v551
  %v553 = vrot.slane %v451, %v552
  %v554 = vmul.f32 %v549, %v553
  %v555 = vlaneseq
  %v556 = vshrl.u32 %v555, 7
  %v557 = vsub.s32 2, %v556
  %v558 = vrot.slane %v451, %v557
  %v559 = vadd.f32 %v554, %v558
  %v560 = vlaneseq
  %v561 = vshrl.u32 %v560, 7
  %v562 = vsub.s32 3, %v561
  %v563 = vrot.slane %v451, %v562
  %v565 = vsel %vm135, %v559, 0
  %567 = vmatprep.subr.mxu0 0.0
  %568 = vmatpush1.msra.mxu0 0.0
  %569 = vmatprep.subr.mxu0 0.0
  %570 = vmatpush1.msra.mxu0 0.0
  %571 = vmatprep.subr.mxu0 0.0
  %572 = vmatpush1.msra.mxu0 0.0
  %573 = vmatprep.subr.mxu0 0.0
  %574 = vmatpush1.msra.mxu0 0.0
  %575 = vmatprep.subr.mxu0 0.0
  %576 = vmatpush1.msra.mxu0 0.0
  %577 = vmatprep.subr.mxu0 0.0
  %578 = vmatpush1.msra.mxu0 0.0
  %579 = vmatprep.subr.mxu0 0.0
  %580 = vmatpush1.msra.mxu0 0.0
  %581 = vmatprep.subr.mxu0 0.0
  %582 = vmatpush1.msra.mxu0 0.0
  %583 = vmatprep.subr.mxu0 0.0
  %584 = vmatpush1.msra.mxu0 0.0
  %585 = vmatprep.subr.mxu0 0.0
  %586 = vmatpush1.msra.mxu0 0.0
  %587 = vmatprep.subr.mxu0 0.0
  %588 = vmatpush1.msra.mxu0 0.0
  %589 = vmatprep.subr.mxu0 0.0
  %590 = vmatpush1.msra.mxu0 0.0
  %591 = vmatprep.subr.mxu0 0.0
  %592 = vmatpush1.msra.mxu0 %v442
  %593 = vmatprep.subr.mxu0 0.0
  %594 = vmatpush1.msra.mxu0 %v441
  %595 = vmatprep.subr.mxu0 0.0
  %596 = vmatpush1.msra.mxu0 %v440
  %597 = vmatprep.subr.mxu0 0.0
  %598 = vmatpush1.msra.mxu0 %v439
  %599 = vmatprep.subr.mxu0 0.0
  %600 = vmatpush2.msra.mxu0 0.0
  %601 = vmatprep.subr.mxu0 0.0
  %602 = vmatpush2.msra.mxu0 0.0
  %603 = vmatprep.subr.mxu0 0.0
  %604 = vmatpush2.msra.mxu0 0.0
  %605 = vmatprep.subr.mxu0 0.0
  %606 = vmatpush2.msra.mxu0 0.0
  %607 = vmatprep.subr.mxu0 0.0
  %608 = vmatpush2.msra.mxu0 0.0
  %609 = vmatprep.subr.mxu0 0.0
  %610 = vmatpush2.msra.mxu0 0.0
  %611 = vmatprep.subr.mxu0 0.0
  %612 = vmatpush2.msra.mxu0 0.0
  %613 = vmatprep.subr.mxu0 0.0
  %614 = vmatpush2.msra.mxu0 0.0
  %615 = vmatprep.subr.mxu0 0.0
  %616 = vmatpush2.msra.mxu0 0.0
  %617 = vmatprep.subr.mxu0 0.0
  %618 = vmatpush2.msra.mxu0 0.0
  %619 = vmatprep.subr.mxu0 0.0
  %620 = vmatpush2.msra.mxu0 0.0
  %621 = vmatprep.subr.mxu0 0.0
  %622 = vmatpush2.msra.mxu0 0.0
  %623 = vmatprep.subr.mxu0 0.0
  %624 = vmatpush2.msra.mxu0 0.0
  %625 = vmatprep.subr.mxu0 0.0
  %626 = vmatpush2.msra.mxu0 0.0
  %627 = vmatprep.subr.mxu0 0.0
  %628 = vmatpush2.msra.mxu0 0.0
  %629 = vmatprep.subr.mxu0 0.0
  %630 = vmatpush2.msra.mxu0 0.0
  %631 = vmatprep.mubr.f32.mxu0 0.0
  %632 = vmatmul.mubr.f32.gmra.mxu0 %v565
  %v633 = vpop.f32.mrf.mxu0
  %v634 = vadd.f32 %v563, %v633
  %v635 = vpop.f32.mrf.mxu0
  %636 = vdwg.mxu0
  %v637 = vmul.f32 %v634, %v634
  %v638 = vmul.f32 %v634, %v637
  %v639 = vmul.f32 %v638, 0.044715
  %v640 = vadd.f32 %v634, %v639
  %v641 = vmul.f32 %v640, 0.7978846
  %v642 = vtanh.pop %v641
  %v643 = vadd.f32 %v642, 1.0
  %v644 = vmul.f32 %v643, 0.5
  %v645 = vmul.f32 %v634, %v644
  %v646 = vlaneseq
  %v647 = vshrl.u32 %v646, 7
  %v648 = vsub.s32 4, %v647
  %v649 = vrot.slane %v451, %v648
  %v651 = vsel %vm329, %v645, 0
  %653 = vmatprep.subr.mxu0 0.0
  %654 = vmatpush1.msra.mxu0 0.0
  %655 = vmatprep.subr.mxu0 0.0
  %656 = vmatpush1.msra.mxu0 0.0
  %657 = vmatprep.subr.mxu0 0.0
  %658 = vmatpush1.msra.mxu0 0.0
  %659 = vmatprep.subr.mxu0 0.0
  %660 = vmatpush1.msra.mxu0 0.0
  %661 = vmatprep.subr.mxu0 0.0
  %662 = vmatpush1.msra.mxu0 0.0
  %663 = vmatprep.subr.mxu0 0.0
  %664 = vmatpush1.msra.mxu0 0.0
  %665 = vmatprep.subr.mxu0 0.0
  %666 = vmatpush1.msra.mxu0 0.0
  %667 = vmatprep.subr.mxu0 0.0
  %668 = vmatpush1.msra.mxu0 0.0
  %669 = vmatprep.subr.mxu0 0.0
  %670 = vmatpush1.msra.mxu0 %v450
  %671 = vmatprep.subr.mxu0 0.0
  %672 = vmatpush1.msra.mxu0 %v449
  %673 = vmatprep.subr.mxu0 0.0
  %674 = vmatpush1.msra.mxu0 %v448
  %675 = vmatprep.subr.mxu0 0.0
  %676 = vmatpush1.msra.mxu0 %v447
  %677 = vmatprep.subr.mxu0 0.0
  %678 = vmatpush1.msra.mxu0 %v446
  %679 = vmatprep.subr.mxu0 0.0
  %680 = vmatpush1.msra.mxu0 %v445
  %681 = vmatprep.subr.mxu0 0.0
  %682 = vmatpush1.msra.mxu0 %v444
  %683 = vmatprep.subr.mxu0 0.0
  %684 = vmatpush1.msra.mxu0 %v443
  %685 = vmatprep.subr.mxu0 0.0
  %686 = vmatpush2.msra.mxu0 0.0
  %687 = vmatprep.subr.mxu0 0.0
  %688 = vmatpush2.msra.mxu0 0.0
  %689 = vmatprep.subr.mxu0 0.0
  %690 = vmatpush2.msra.mxu0 0.0
  %691 = vmatprep.subr.mxu0 0.0
  %692 = vmatpush2.msra.mxu0 0.0
  %693 = vmatprep.subr.mxu0 0.0
  %694 = vmatpush2.msra.mxu0 0.0
  %695 = vmatprep.subr.mxu0 0.0
  %696 = vmatpush2.msra.mxu0 0.0
  %697 = vmatprep.subr.mxu0 0.0
  %698 = vmatpush2.msra.mxu0 0.0
  %699 = vmatprep.subr.mxu0 0.0
  %700 = vmatpush2.msra.mxu0 0.0
  %701 = vmatprep.subr.mxu0 0.0
  %702 = vmatpush2.msra.mxu0 0.0
  %703 = vmatprep.subr.mxu0 0.0
  %704 = vmatpush2.msra.mxu0 0.0
  %705 = vmatprep.subr.mxu0 0.0
  %706 = vmatpush2.msra.mxu0 0.0
  %707 = vmatprep.subr.mxu0 0.0
  %708 = vmatpush2.msra.mxu0 0.0
  %709 = vmatprep.subr.mxu0 0.0
  %710 = vmatpush2.msra.mxu0 0.0
  %711 = vmatprep.subr.mxu0 0.0
  %712 = vmatpush2.msra.mxu0 0.0
  %713 = vmatprep.subr.mxu0 0.0
  %714 = vmatpush2.msra.mxu0 0.0
  %715 = vmatprep.subr.mxu0 0.0
  %716 = vmatpush2.msra.mxu0 0.0
  %717 = vmatprep.mubr.f32.mxu0 0.0
  %718 = vmatmul.mubr.f32.gmra.mxu0 %v651
  %v719 = vpop.f32.mrf.mxu0
  %v720 = vadd.f32 %v649, %v719
  %v721 = vpop.f32.mrf.mxu0
  %722 = vdwg.mxu0
  %v723 = vmax.f32 %v720, -100.0
  %v724 = vmin.f32 %v723, 100.0
  %v725 = vadd.f32 %v559, %v724
  %v726 = vsel %vm135, %v725, 0.0
  %727 = vadd.xlane.f32.xlu0 %v726
  %v728 = vpop.xlane.xlu0 %727
  %v729 = vmul.f32 %v728, %v215
  %v730 = vmul.f32 %v725, %v725
  %v731 = vsel %vm135, %v730, 0.0
  %732 = vadd.xlane.f32.xlu0 %v731
  %v733 = vpop.xlane.xlu0 %732
  %v734 = vmul.f32 %v733, %v215
  %v735 = vmul.f32 %v729, %v729
  %v736 = vsub.f32 %v734, %v735
  %v737 = vmax.f32 %v736, 0.0
  %v738 = vsub.f32 %v725, %v729
  %v739 = vadd.f32 %v737, 1e-05
  %v740 = vrsqrt.pop %v739
  %v741 = vmul.f32 %v738, %v740
  %v742 = vlaneseq
  %v743 = vshrl.u32 %v742, 7
  %v744 = vsub.s32 5, %v743
  %v745 = vrot.slane %v451, %v744
  %v746 = vmul.f32 %v741, %v745
  %v747 = vlaneseq
  %v748 = vshrl.u32 %v747, 7
  %v749 = vsub.s32 6, %v748
  %v750 = vrot.slane %v451, %v749
  %v751 = vadd.f32 %v746, %v750
  %v752 = vmax.f32 %v751, -100.0
  %v753 = vmin.f32 %v752, 100.0
  %s754 = scalar_lea.vmem %s1, 272
  %v755 = vld [vmem:[%s754] sm:$0xff]
  %v756 = vld [vmem:[%s754 + $0x8] sm:$0xff]
  %v757 = vld [vmem:[%s754 + $0x10] sm:$0xff]
  %v758 = vld [vmem:[%s754 + $0x18] sm:$0xff]
  %v759 = vld [vmem:[%s754 + $0x20] sm:$0xff]
  %v760 = vld [vmem:[%s754 + $0x28] sm:$0xff]
  %v761 = vld [vmem:[%s754 + $0x30] sm:$0xff]
  %v762 = vld [vmem:[%s754 + $0x38] sm:$0xff]
  %v763 = vld [vmem:[%s754 + $0x40] sm:$0xff]
  %v764 = vld [vmem:[%s754 + $0x48] sm:$0xff]
  %v765 = vld [vmem:[%s754 + $0x50] sm:$0xff]
  %v766 = vld [vmem:[%s754 + $0x58] sm:$0xff]
  %v767 = vld [vmem:[%s754 + $0x60] sm:$0xff]
  %v768 = vld [vmem:[%s754 + $0x68] sm:$0xff]
  %v769 = vld [vmem:[%s754 + $0x70] sm:$0xff]
  %v770 = vld [vmem:[%s754 + $0x78] sm:$0xff]
  %v771 = vld [vmem:[%s754 + $0x80] sm:$0xff]
  %v772 = vmax.f32 %v753, -100.0
  %v773 = vmin.f32 %v772, 100.0
  %v774 = vlaneseq
  %v775 = vshrl.u32 %v774, 7
  %v776 = vsub.s32 0, %v775
  %v777 = vrot.slane %v771, %v776
  %v779 = vsel %vm135, %v773, 0
  %781 = vmatprep.subr.mxu0 0.0
  %782 = vmatpush1.msra.mxu0 0.0
  %783 = vmatprep.subr.mxu0 0.0
  %784 = vmatpush1.msra.mxu0 0.0
  %785 = vmatprep.subr.mxu0 0.0
  %786 = vmatpush1.msra.mxu0 0.0
  %787 = vmatprep.subr.mxu0 0.0
  %788 = vmatpush1.msra.mxu0 0.0
  %789 = vmatprep.subr.mxu0 0.0
  %790 = vmatpush1.msra.mxu0 0.0
  %791 = vmatprep.subr.mxu0 0.0
  %792 = vmatpush1.msra.mxu0 0.0
  %793 = vmatprep.subr.mxu0 0.0
  %794 = vmatpush1.msra.mxu0 0.0
  %795 = vmatprep.subr.mxu0 0.0
  %796 = vmatpush1.msra.mxu0 0.0
  %797 = vmatprep.subr.mxu0 0.0
  %798 = vmatpush1.msra.mxu0 0.0
  %799 = vmatprep.subr.mxu0 0.0
  %800 = vmatpush1.msra.mxu0 0.0
  %801 = vmatprep.subr.mxu0 0.0
  %802 = vmatpush1.msra.mxu0 0.0
  %803 = vmatprep.subr.mxu0 0.0
  %804 = vmatpush1.msra.mxu0 0.0
  %805 = vmatprep.subr.mxu0 0.0
  %806 = vmatpush1.msra.mxu0 %v758
  %807 = vmatprep.subr.mxu0 0.0
  %808 = vmatpush1.msra.mxu0 %v757
  %809 = vmatprep.subr.mxu0 0.0
  %810 = vmatpush1.msra.mxu0 %v756
  %811 = vmatprep.subr.mxu0 0.0
  %812 = vmatpush1.msra.mxu0 %v755
  %813 = vmatprep.subr.mxu0 0.0
  %814 = vmatpush2.msra.mxu0 0.0
  %815 = vmatprep.subr.mxu0 0.0
  %816 = vmatpush2.msra.mxu0 0.0
  %817 = vmatprep.subr.mxu0 0.0
  %818 = vmatpush2.msra.mxu0 0.0
  %819 = vmatprep.subr.mxu0 0.0
  %820 = vmatpush2.msra.mxu0 0.0
  %821 = vmatprep.subr.mxu0 0.0
  %822 = vmatpush2.msra.mxu0 0.0
  %823 = vmatprep.subr.mxu0 0.0
  %824 = vmatpush2.msra.mxu0 0.0
  %825 = vmatprep.subr.mxu0 0.0
  %826 = vmatpush2.msra.mxu0 0.0
  %827 = vmatprep.subr.mxu0 0.0
  %828 = vmatpush2.msra.mxu0 0.0
  %829 = vmatprep.subr.mxu0 0.0
  %830 = vmatpush2.msra.mxu0 0.0
  %831 = vmatprep.subr.mxu0 0.0
  %832 = vmatpush2.msra.mxu0 0.0
  %833 = vmatprep.subr.mxu0 0.0
  %834 = vmatpush2.msra.mxu0 0.0
  %835 = vmatprep.subr.mxu0 0.0
  %836 = vmatpush2.msra.mxu0 0.0
  %837 = vmatprep.subr.mxu0 0.0
  %838 = vmatpush2.msra.mxu0 0.0
  %839 = vmatprep.subr.mxu0 0.0
  %840 = vmatpush2.msra.mxu0 0.0
  %841 = vmatprep.subr.mxu0 0.0
  %842 = vmatpush2.msra.mxu0 0.0
  %843 = vmatprep.subr.mxu0 0.0
  %844 = vmatpush2.msra.mxu0 0.0
  %845 = vmatprep.mubr.f32.mxu0 0.0
  %846 = vmatmul.mubr.f32.gmra.mxu0 %v779
  %v847 = vpop.f32.mrf.mxu0
  %v848 = vadd.f32 %v777, %v847
  %v849 = vpop.f32.mrf.mxu0
  %850 = vdwg.mxu0
  %v851 = vmax.f32 %v848, -100.0
  %v852 = vmin.f32 %v851, 100.0
  %v853 = vadd.f32 %v773, %v852
  %v854 = vsel %vm135, %v853, 0.0
  %855 = vadd.xlane.f32.xlu0 %v854
  %v856 = vpop.xlane.xlu0 %855
  %v857 = vmul.f32 %v856, %v215
  %v858 = vmul.f32 %v853, %v853
  %v859 = vsel %vm135, %v858, 0.0
  %860 = vadd.xlane.f32.xlu0 %v859
  %v861 = vpop.xlane.xlu0 %860
  %v862 = vmul.f32 %v861, %v215
  %v863 = vmul.f32 %v857, %v857
  %v864 = vsub.f32 %v862, %v863
  %v865 = vmax.f32 %v864, 0.0
  %v866 = vsub.f32 %v853, %v857
  %v867 = vadd.f32 %v865, 1e-05
  %v868 = vrsqrt.pop %v867
  %v869 = vmul.f32 %v866, %v868
  %v870 = vlaneseq
  %v871 = vshrl.u32 %v870, 7
  %v872 = vsub.s32 1, %v871
  %v873 = vrot.slane %v771, %v872
  %v874 = vmul.f32 %v869, %v873
  %v875 = vlaneseq
  %v876 = vshrl.u32 %v875, 7
  %v877 = vsub.s32 2, %v876
  %v878 = vrot.slane %v771, %v877
  %v879 = vadd.f32 %v874, %v878
  %v880 = vlaneseq
  %v881 = vshrl.u32 %v880, 7
  %v882 = vsub.s32 3, %v881
  %v883 = vrot.slane %v771, %v882
  %v885 = vsel %vm135, %v879, 0
  %887 = vmatprep.subr.mxu0 0.0
  %888 = vmatpush1.msra.mxu0 0.0
  %889 = vmatprep.subr.mxu0 0.0
  %890 = vmatpush1.msra.mxu0 0.0
  %891 = vmatprep.subr.mxu0 0.0
  %892 = vmatpush1.msra.mxu0 0.0
  %893 = vmatprep.subr.mxu0 0.0
  %894 = vmatpush1.msra.mxu0 0.0
  %895 = vmatprep.subr.mxu0 0.0
  %896 = vmatpush1.msra.mxu0 0.0
  %897 = vmatprep.subr.mxu0 0.0
  %898 = vmatpush1.msra.mxu0 0.0
  %899 = vmatprep.subr.mxu0 0.0
  %900 = vmatpush1.msra.mxu0 0.0
  %901 = vmatprep.subr.mxu0 0.0
  %902 = vmatpush1.msra.mxu0 0.0
  %903 = vmatprep.subr.mxu0 0.0
  %904 = vmatpush1.msra.mxu0 0.0
  %905 = vmatprep.subr.mxu0 0.0
  %906 = vmatpush1.msra.mxu0 0.0
  %907 = vmatprep.subr.mxu0 0.0
  %908 = vmatpush1.msra.mxu0 0.0
  %909 = vmatprep.subr.mxu0 0.0
  %910 = vmatpush1.msra.mxu0 0.0
  %911 = vmatprep.subr.mxu0 0.0
  %912 = vmatpush1.msra.mxu0 %v762
  %913 = vmatprep.subr.mxu0 0.0
  %914 = vmatpush1.msra.mxu0 %v761
  %915 = vmatprep.subr.mxu0 0.0
  %916 = vmatpush1.msra.mxu0 %v760
  %917 = vmatprep.subr.mxu0 0.0
  %918 = vmatpush1.msra.mxu0 %v759
  %919 = vmatprep.subr.mxu0 0.0
  %920 = vmatpush2.msra.mxu0 0.0
  %921 = vmatprep.subr.mxu0 0.0
  %922 = vmatpush2.msra.mxu0 0.0
  %923 = vmatprep.subr.mxu0 0.0
  %924 = vmatpush2.msra.mxu0 0.0
  %925 = vmatprep.subr.mxu0 0.0
  %926 = vmatpush2.msra.mxu0 0.0
  %927 = vmatprep.subr.mxu0 0.0
  %928 = vmatpush2.msra.mxu0 0.0
  %929 = vmatprep.subr.mxu0 0.0
  %930 = vmatpush2.msra.mxu0 0.0
  %931 = vmatprep.subr.mxu0 0.0
  %932 = vmatpush2.msra.mxu0 0.0
  %933 = vmatprep.subr.mxu0 0.0
  %934 = vmatpush2.msra.mxu0 0.0
  %935 = vmatprep.subr.mxu0 0.0
  %936 = vmatpush2.msra.mxu0 0.0
  %937 = vmatprep.subr.mxu0 0.0
  %938 = vmatpush2.msra.mxu0 0.0
  %939 = vmatprep.subr.mxu0 0.0
  %940 = vmatpush2.msra.mxu0 0.0
  %941 = vmatprep.subr.mxu0 0.0
  %942 = vmatpush2.msra.mxu0 0.0
  %943 = vmatprep.subr.mxu0 0.0
  %944 = vmatpush2.msra.mxu0 0.0
  %945 = vmatprep.subr.mxu0 0.0
  %946 = vmatpush2.msra.mxu0 0.0
  %947 = vmatprep.subr.mxu0 0.0
  %948 = vmatpush2.msra.mxu0 0.0
  %949 = vmatprep.subr.mxu0 0.0
  %950 = vmatpush2.msra.mxu0 0.0
  %951 = vmatprep.mubr.f32.mxu0 0.0
  %952 = vmatmul.mubr.f32.gmra.mxu0 %v885
  %v953 = vpop.f32.mrf.mxu0
  %v954 = vadd.f32 %v883, %v953
  %v955 = vpop.f32.mrf.mxu0
  %956 = vdwg.mxu0
  %v957 = vmul.f32 %v954, %v954
  %v958 = vmul.f32 %v954, %v957
  %v959 = vmul.f32 %v958, 0.044715
  %v960 = vadd.f32 %v954, %v959
  %v961 = vmul.f32 %v960, 0.7978846
  %v962 = vtanh.pop %v961
  %v963 = vadd.f32 %v962, 1.0
  %v964 = vmul.f32 %v963, 0.5
  %v965 = vmul.f32 %v954, %v964
  %v966 = vlaneseq
  %v967 = vshrl.u32 %v966, 7
  %v968 = vsub.s32 4, %v967
  %v969 = vrot.slane %v771, %v968
  %v971 = vsel %vm329, %v965, 0
  %973 = vmatprep.subr.mxu0 0.0
  %974 = vmatpush1.msra.mxu0 0.0
  %975 = vmatprep.subr.mxu0 0.0
  %976 = vmatpush1.msra.mxu0 0.0
  %977 = vmatprep.subr.mxu0 0.0
  %978 = vmatpush1.msra.mxu0 0.0
  %979 = vmatprep.subr.mxu0 0.0
  %980 = vmatpush1.msra.mxu0 0.0
  %981 = vmatprep.subr.mxu0 0.0
  %982 = vmatpush1.msra.mxu0 0.0
  %983 = vmatprep.subr.mxu0 0.0
  %984 = vmatpush1.msra.mxu0 0.0
  %985 = vmatprep.subr.mxu0 0.0
  %986 = vmatpush1.msra.mxu0 0.0
  %987 = vmatprep.subr.mxu0 0.0
  %988 = vmatpush1.msra.mxu0 0.0
  %989 = vmatprep.subr.mxu0 0.0
  %990 = vmatpush1.msra.mxu0 %v770
  %991 = vmatprep.subr.mxu0 0.0
  %992 = vmatpush1.msra.mxu0 %v769
  %993 = vmatprep.subr.mxu0 0.0
  %994 = vmatpush1.msra.mxu0 %v768
  %995 = vmatprep.subr.mxu0 0.0
  %996 = vmatpush1.msra.mxu0 %v767
  %997 = vmatprep.subr.mxu0 0.0
  %998 = vmatpush1.msra.mxu0 %v766
  %999 = vmatprep.subr.mxu0 0.0
  %1000 = vmatpush1.msra.mxu0 %v765
  %1001 = vmatprep.subr.mxu0 0.0
  %1002 = vmatpush1.msra.mxu0 %v764
  %1003 = vmatprep.subr.mxu0 0.0
  %1004 = vmatpush1.msra.mxu0 %v763
  %1005 = vmatprep.subr.mxu0 0.0
  %1006 = vmatpush2.msra.mxu0 0.0
  %1007 = vmatprep.subr.mxu0 0.0
  %1008 = vmatpush2.msra.mxu0 0.0
  %1009 = vmatprep.subr.mxu0 0.0
  %1010 = vmatpush2.msra.mxu0 0.0
  %1011 = vmatprep.subr.mxu0 0.0
  %1012 = vmatpush2.msra.mxu0 0.0
  %1013 = vmatprep.subr.mxu0 0.0
  %1014 = vmatpush2.msra.mxu0 0.0
  %1015 = vmatprep.subr.mxu0 0.0
  %1016 = vmatpush2.msra.mxu0 0.0
  %1017 = vmatprep.subr.mxu0 0.0
  %1018 = vmatpush2.msra.mxu0 0.0
  %1019 = vmatprep.subr.mxu0 0.0
  %1020 = vmatpush2.msra.mxu0 0.0
  %1021 = vmatprep.subr.mxu0 0.0
  %1022 = vmatpush2.msra.mxu0 0.0
  %1023 = vmatprep.subr.mxu0 0.0
  %1024 = vmatpush2.msra.mxu0 0.0
  %1025 = vmatprep.subr.mxu0 0.0
  %1026 = vmatpush2.msra.mxu0 0.0
  %1027 = vmatprep.subr.mxu0 0.0
  %1028 = vmatpush2.msra.mxu0 0.0
  %1029 = vmatprep.subr.mxu0 0.0
  %1030 = vmatpush2.msra.mxu0 0.0
  %1031 = vmatprep.subr.mxu0 0.0
  %1032 = vmatpush2.msra.mxu0 0.0
  %1033 = vmatprep.subr.mxu0 0.0
  %1034 = vmatpush2.msra.mxu0 0.0
  %1035 = vmatprep.subr.mxu0 0.0
  %1036 = vmatpush2.msra.mxu0 0.0
  %1037 = vmatprep.mubr.f32.mxu0 0.0
  %1038 = vmatmul.mubr.f32.gmra.mxu0 %v971
  %v1039 = vpop.f32.mrf.mxu0
  %v1040 = vadd.f32 %v969, %v1039
  %v1041 = vpop.f32.mrf.mxu0
  %1042 = vdwg.mxu0
  %v1043 = vmax.f32 %v1040, -100.0
  %v1044 = vmin.f32 %v1043, 100.0
  %v1045 = vadd.f32 %v879, %v1044
  %v1046 = vsel %vm135, %v1045, 0.0
  %1047 = vadd.xlane.f32.xlu0 %v1046
  %v1048 = vpop.xlane.xlu0 %1047
  %v1049 = vmul.f32 %v1048, %v215
  %v1050 = vmul.f32 %v1045, %v1045
  %v1051 = vsel %vm135, %v1050, 0.0
  %1052 = vadd.xlane.f32.xlu0 %v1051
  %v1053 = vpop.xlane.xlu0 %1052
  %v1054 = vmul.f32 %v1053, %v215
  %v1055 = vmul.f32 %v1049, %v1049
  %v1056 = vsub.f32 %v1054, %v1055
  %v1057 = vmax.f32 %v1056, 0.0
  %v1058 = vsub.f32 %v1045, %v1049
  %v1059 = vadd.f32 %v1057, 1e-05
  %v1060 = vrsqrt.pop %v1059
  %v1061 = vmul.f32 %v1058, %v1060
  %v1062 = vlaneseq
  %v1063 = vshrl.u32 %v1062, 7
  %v1064 = vsub.s32 5, %v1063
  %v1065 = vrot.slane %v771, %v1064
  %v1066 = vmul.f32 %v1061, %v1065
  %v1067 = vlaneseq
  %v1068 = vshrl.u32 %v1067, 7
  %v1069 = vsub.s32 6, %v1068
  %v1070 = vrot.slane %v771, %v1069
  %v1071 = vadd.f32 %v1066, %v1070
  %v1072 = vmax.f32 %v1071, -100.0
  %v1073 = vmin.f32 %v1072, 100.0
  %s1074 = scalar_lea.vmem %s1, 408
  %v1075 = vld [vmem:[%s1074] sm:$0xff]
  %v1076 = vld [vmem:[%s1074 + $0x8] sm:$0xff]
  %v1077 = vld [vmem:[%s1074 + $0x10] sm:$0xff]
  %v1078 = vld [vmem:[%s1074 + $0x18] sm:$0xff]
  %v1079 = vld [vmem:[%s1074 + $0x20] sm:$0xff]
  %v1080 = vld [vmem:[%s1074 + $0x28] sm:$0xff]
  %v1081 = vld [vmem:[%s1074 + $0x30] sm:$0xff]
  %v1082 = vld [vmem:[%s1074 + $0x38] sm:$0xff]
  %v1083 = vld [vmem:[%s1074 + $0x40] sm:$0xff]
  %v1084 = vld [vmem:[%s1074 + $0x48] sm:$0xff]
  %v1085 = vld [vmem:[%s1074 + $0x50] sm:$0xff]
  %v1086 = vld [vmem:[%s1074 + $0x58] sm:$0xff]
  %v1087 = vld [vmem:[%s1074 + $0x60] sm:$0xff]
  %v1088 = vld [vmem:[%s1074 + $0x68] sm:$0xff]
  %v1089 = vld [vmem:[%s1074 + $0x70] sm:$0xff]
  %v1090 = vld [vmem:[%s1074 + $0x78] sm:$0xff]
  %v1091 = vld [vmem:[%s1074 + $0x80] sm:$0xff]
  %v1092 = vmax.f32 %v1073, -100.0
  %v1093 = vmin.f32 %v1092, 100.0
  %v1094 = vlaneseq
  %v1095 = vshrl.u32 %v1094, 7
  %v1096 = vsub.s32 0, %v1095
  %v1097 = vrot.slane %v1091, %v1096
  %v1099 = vsel %vm135, %v1093, 0
  %1101 = vmatprep.subr.mxu0 0.0
  %1102 = vmatpush1.msra.mxu0 0.0
  %1103 = vmatprep.subr.mxu0 0.0
  %1104 = vmatpush1.msra.mxu0 0.0
  %1105 = vmatprep.subr.mxu0 0.0
  %1106 = vmatpush1.msra.mxu0 0.0
  %1107 = vmatprep.subr.mxu0 0.0
  %1108 = vmatpush1.msra.mxu0 0.0
  %1109 = vmatprep.subr.mxu0 0.0
  %1110 = vmatpush1.msra.mxu0 0.0
  %1111 = vmatprep.subr.mxu0 0.0
  %1112 = vmatpush1.msra.mxu0 0.0
  %1113 = vmatprep.subr.mxu0 0.0
  %1114 = vmatpush1.msra.mxu0 0.0
  %1115 = vmatprep.subr.mxu0 0.0
  %1116 = vmatpush1.msra.mxu0 0.0
  %1117 = vmatprep.subr.mxu0 0.0
  %1118 = vmatpush1.msra.mxu0 0.0
  %1119 = vmatprep.subr.mxu0 0.0
  %1120 = vmatpush1.msra.mxu0 0.0
  %1121 = vmatprep.subr.mxu0 0.0
  %1122 = vmatpush1.msra.mxu0 0.0
  %1123 = vmatprep.subr.mxu0 0.0
  %1124 = vmatpush1.msra.mxu0 0.0
  %1125 = vmatprep.subr.mxu0 0.0
  %1126 = vmatpush1.msra.mxu0 %v1078
  %1127 = vmatprep.subr.mxu0 0.0
  %1128 = vmatpush1.msra.mxu0 %v1077
  %1129 = vmatprep.subr.mxu0 0.0
  %1130 = vmatpush1.msra.mxu0 %v1076
  %1131 = vmatprep.subr.mxu0 0.0
  %1132 = vmatpush1.msra.mxu0 %v1075
  %1133 = vmatprep.subr.mxu0 0.0
  %1134 = vmatpush2.msra.mxu0 0.0
  %1135 = vmatprep.subr.mxu0 0.0
  %1136 = vmatpush2.msra.mxu0 0.0
  %1137 = vmatprep.subr.mxu0 0.0
  %1138 = vmatpush2.msra.mxu0 0.0
  %1139 = vmatprep.subr.mxu0 0.0
  %1140 = vmatpush2.msra.mxu0 0.0
  %1141 = vmatprep.subr.mxu0 0.0
  %1142 = vmatpush2.msra.mxu0 0.0
  %1143 = vmatprep.subr.mxu0 0.0
  %1144 = vmatpush2.msra.mxu0 0.0
  %1145 = vmatprep.subr.mxu0 0.0
  %1146 = vmatpush2.msra.mxu0 0.0
  %1147 = vmatprep.subr.mxu0 0.0
  %1148 = vmatpush2.msra.mxu0 0.0
  %1149 = vmatprep.subr.mxu0 0.0
  %1150 = vmatpush2.msra.mxu0 0.0
  %1151 = vmatprep.subr.mxu0 0.0
  %1152 = vmatpush2.msra.mxu0 0.0
  %1153 = vmatprep.subr.mxu0 0.0
  %1154 = vmatpush2.msra.mxu0 0.0
  %1155 = vmatprep.subr.mxu0 0.0
  %1156 = vmatpush2.msra.mxu0 0.0
  %1157 = vmatprep.subr.mxu0 0.0
  %1158 = vmatpush2.msra.mxu0 0.0
  %1159 = vmatprep.subr.mxu0 0.0
  %1160 = vmatpush2.msra.mxu0 0.0
  %1161 = vmatprep.subr.mxu0 0.0
  %1162 = vmatpush2.msra.mxu0 0.0
  %1163 = vmatprep.subr.mxu0 0.0
  %1164 = vmatpush2.msra.mxu0 0.0
  %1165 = vmatprep.mubr.f32.mxu0 0.0
  %1166 = vmatmul.mubr.f32.gmra.mxu0 %v1099
  %v1167 = vpop.f32.mrf.mxu0
  %v1168 = vadd.f32 %v1097, %v1167
  %v1169 = vpop.f32.mrf.mxu0
  %1170 = vdwg.mxu0
  %v1171 = vmax.f32 %v1168, -100.0
  %v1172 = vmin.f32 %v1171, 100.0
  %v1173 = vadd.f32 %v1093, %v1172
  %v1174 = vsel %vm135, %v1173, 0.0
  %1175 = vadd.xlane.f32.xlu0 %v1174
  %v1176 = vpop.xlane.xlu0 %1175
  %v1177 = vmul.f32 %v1176, %v215
  %v1178 = vmul.f32 %v1173, %v1173
  %v1179 = vsel %vm135, %v1178, 0.0
  %1180 = vadd.xlane.f32.xlu0 %v1179
  %v1181 = vpop.xlane.xlu0 %1180
  %v1182 = vmul.f32 %v1181, %v215
  %v1183 = vmul.f32 %v1177, %v1177
  %v1184 = vsub.f32 %v1182, %v1183
  %v1185 = vmax.f32 %v1184, 0.0
  %v1186 = vsub.f32 %v1173, %v1177
  %v1187 = vadd.f32 %v1185, 1e-05
  %v1188 = vrsqrt.pop %v1187
  %v1189 = vmul.f32 %v1186, %v1188
  %v1190 = vlaneseq
  %v1191 = vshrl.u32 %v1190, 7
  %v1192 = vsub.s32 1, %v1191
  %v1193 = vrot.slane %v1091, %v1192
  %v1194 = vmul.f32 %v1189, %v1193
  %v1195 = vlaneseq
  %v1196 = vshrl.u32 %v1195, 7
  %v1197 = vsub.s32 2, %v1196
  %v1198 = vrot.slane %v1091, %v1197
  %v1199 = vadd.f32 %v1194, %v1198
  %v1200 = vlaneseq
  %v1201 = vshrl.u32 %v1200, 7
  %v1202 = vsub.s32 3, %v1201
  %v1203 = vrot.slane %v1091, %v1202
  %v1205 = vsel %vm135, %v1199, 0
  %1207 = vmatprep.subr.mxu0 0.0
  %1208 = vmatpush1.msra.mxu0 0.0
  %1209 = vmatprep.subr.mxu0 0.0
  %1210 = vmatpush1.msra.mxu0 0.0
  %1211 = vmatprep.subr.mxu0 0.0
  %1212 = vmatpush1.msra.mxu0 0.0
  %1213 = vmatprep.subr.mxu0 0.0
  %1214 = vmatpush1.msra.mxu0 0.0
  %1215 = vmatprep.subr.mxu0 0.0
  %1216 = vmatpush1.msra.mxu0 0.0
  %1217 = vmatprep.subr.mxu0 0.0
  %1218 = vmatpush1.msra.mxu0 0.0
  %1219 = vmatprep.subr.mxu0 0.0
  %1220 = vmatpush1.msra.mxu0 0.0
  %1221 = vmatprep.subr.mxu0 0.0
  %1222 = vmatpush1.msra.mxu0 0.0
  %1223 = vmatprep.subr.mxu0 0.0
  %1224 = vmatpush1.msra.mxu0 0.0
  %1225 = vmatprep.subr.mxu0 0.0
  %1226 = vmatpush1.msra.mxu0 0.0
  %1227 = vmatprep.subr.mxu0 0.0
  %1228 = vmatpush1.msra.mxu0 0.0
  %1229 = vmatprep.subr.mxu0 0.0
  %1230 = vmatpush1.msra.mxu0 0.0
  %1231 = vmatprep.subr.mxu0 0.0
  %1232 = vmatpush1.msra.mxu0 %v1082
  %1233 = vmatprep.subr.mxu0 0.0
  %1234 = vmatpush1.msra.mxu0 %v1081
  %1235 = vmatprep.subr.mxu0 0.0
  %1236 = vmatpush1.msra.mxu0 %v1080
  %1237 = vmatprep.subr.mxu0 0.0
  %1238 = vmatpush1.msra.mxu0 %v1079
  %1239 = vmatprep.subr.mxu0 0.0
  %1240 = vmatpush2.msra.mxu0 0.0
  %1241 = vmatprep.subr.mxu0 0.0
  %1242 = vmatpush2.msra.mxu0 0.0
  %1243 = vmatprep.subr.mxu0 0.0
  %1244 = vmatpush2.msra.mxu0 0.0
  %1245 = vmatprep.subr.mxu0 0.0
  %1246 = vmatpush2.msra.mxu0 0.0
  %1247 = vmatprep.subr.mxu0 0.0
  %1248 = vmatpush2.msra.mxu0 0.0
  %1249 = vmatprep.subr.mxu0 0.0
  %1250 = vmatpush2.msra.mxu0 0.0
  %1251 = vmatprep.subr.mxu0 0.0
  %1252 = vmatpush2.msra.mxu0 0.0
  %1253 = vmatprep.subr.mxu0 0.0
  %1254 = vmatpush2.msra.mxu0 0.0
  %1255 = vmatprep.subr.mxu0 0.0
  %1256 = vmatpush2.msra.mxu0 0.0
  %1257 = vmatprep.subr.mxu0 0.0
  %1258 = vmatpush2.msra.mxu0 0.0
  %1259 = vmatprep.subr.mxu0 0.0
  %1260 = vmatpush2.msra.mxu0 0.0
  %1261 = vmatprep.subr.mxu0 0.0
  %1262 = vmatpush2.msra.mxu0 0.0
  %1263 = vmatprep.subr.mxu0 0.0
  %1264 = vmatpush2.msra.mxu0 0.0
  %1265 = vmatprep.subr.mxu0 0.0
  %1266 = vmatpush2.msra.mxu0 0.0
  %1267 = vmatprep.subr.mxu0 0.0
  %1268 = vmatpush2.msra.mxu0 0.0
  %1269 = vmatprep.subr.mxu0 0.0
  %1270 = vmatpush2.msra.mxu0 0.0
  %1271 = vmatprep.mubr.f32.mxu0 0.0
  %1272 = vmatmul.mubr.f32.gmra.mxu0 %v1205
  %v1273 = vpop.f32.mrf.mxu0
  %v1274 = vadd.f32 %v1203, %v1273
  %v1275 = vpop.f32.mrf.mxu0
  %1276 = vdwg.mxu0
  %v1277 = vmul.f32 %v1274, %v1274
  %v1278 = vmul.f32 %v1274, %v1277
  %v1279 = vmul.f32 %v1278, 0.044715
  %v1280 = vadd.f32 %v1274, %v1279
  %v1281 = vmul.f32 %v1280, 0.7978846
  %v1282 = vtanh.pop %v1281
  %v1283 = vadd.f32 %v1282, 1.0
  %v1284 = vmul.f32 %v1283, 0.5
  %v1285 = vmul.f32 %v1274, %v1284
  %v1286 = vlaneseq
  %v1287 = vshrl.u32 %v1286, 7
  %v1288 = vsub.s32 4, %v1287
  %v1289 = vrot.slane %v1091, %v1288
  %v1291 = vsel %vm329, %v1285, 0
  %1293 = vmatprep.subr.mxu0 0.0
  %1294 = vmatpush1.msra.mxu0 0.0
  %1295 = vmatprep.subr.mxu0 0.0
  %1296 = vmatpush1.msra.mxu0 0.0
  %1297 = vmatprep.subr.mxu0 0.0
  %1298 = vmatpush1.msra.mxu0 0.0
  %1299 = vmatprep.subr.mxu0 0.0
  %1300 = vmatpush1.msra.mxu0 0.0
  %1301 = vmatprep.subr.mxu0 0.0
  %1302 = vmatpush1.msra.mxu0 0.0
  %1303 = vmatprep.subr.mxu0 0.0
  %1304 = vmatpush1.msra.mxu0 0.0
  %1305 = vmatprep.subr.mxu0 0.0
  %1306 = vmatpush1.msra.mxu0 0.0
  %1307 = vmatprep.subr.mxu0 0.0
  %1308 = vmatpush1.msra.mxu0 0.0
  %1309 = vmatprep.subr.mxu0 0.0
  %1310 = vmatpush1.msra.mxu0 %v1090
  %1311 = vmatprep.subr.mxu0 0.0
  %1312 = vmatpush1.msra.mxu0 %v1089
  %1313 = vmatprep.subr.mxu0 0.0
  %1314 = vmatpush1.msra.mxu0 %v1088
  %1315 = vmatprep.subr.mxu0 0.0
  %1316 = vmatpush1.msra.mxu0 %v1087
  %1317 = vmatprep.subr.mxu0 0.0
  %1318 = vmatpush1.msra.mxu0 %v1086
  %1319 = vmatprep.subr.mxu0 0.0
  %1320 = vmatpush1.msra.mxu0 %v1085
  %1321 = vmatprep.subr.mxu0 0.0
  %1322 = vmatpush1.msra.mxu0 %v1084
  %1323 = vmatprep.subr.mxu0 0.0
  %1324 = vmatpush1.msra.mxu0 %v1083
  %1325 = vmatprep.subr.mxu0 0.0
  %1326 = vmatpush2.msra.mxu0 0.0
  %1327 = vmatprep.subr.mxu0 0.0
  %1328 = vmatpush2.msra.mxu0 0.0
  %1329 = vmatprep.subr.mxu0 0.0
  %1330 = vmatpush2.msra.mxu0 0.0
  %1331 = vmatprep.subr.mxu0 0.0
  %1332 = vmatpush2.msra.mxu0 0.0
  %1333 = vmatprep.subr.mxu0 0.0
  %1334 = vmatpush2.msra.mxu0 0.0
  %1335 = vmatprep.subr.mxu0 0.0
  %1336 = vmatpush2.msra.mxu0 0.0
  %1337 = vmatprep.subr.mxu0 0.0
  %1338 = vmatpush2.msra.mxu0 0.0
  %1339 = vmatprep.subr.mxu0 0.0
  %1340 = vmatpush2.msra.mxu0 0.0
  %1341 = vmatprep.subr.mxu0 0.0
  %1342 = vmatpush2.msra.mxu0 0.0
  %1343 = vmatprep.subr.mxu0 0.0
  %1344 = vmatpush2.msra.mxu0 0.0
  %1345 = vmatprep.subr.mxu0 0.0
  %1346 = vmatpush2.msra.mxu0 0.0
  %1347 = vmatprep.subr.mxu0 0.0
  %1348 = vmatpush2.msra.mxu0 0.0
  %1349 = vmatprep.subr.mxu0 0.0
  %1350 = vmatpush2.msra.mxu0 0.0
  %1351 = vmatprep.subr.mxu0 0.0
  %1352 = vmatpush2.msra.mxu0 0.0
  %1353 = vmatprep.subr.mxu0 0.0
  %1354 = vmatpush2.msra.mxu0 0.0
  %1355 = vmatprep.subr.mxu0 0.0
  %1356 = vmatpush2.msra.mxu0 0.0
  %1357 = vmatprep.mubr.f32.mxu0 0.0
  %1358 = vmatmul.mubr.f32.gmra.mxu0 %v1291
  %v1359 = vpop.f32.mrf.mxu0
  %v1360 = vadd.f32 %v1289, %v1359
  %v1361 = vpop.f32.mrf.mxu0
  %1362 = vdwg.mxu0
  %v1363 = vmax.f32 %v1360, -100.0
  %v1364 = vmin.f32 %v1363, 100.0
  %v1365 = vadd.f32 %v1199, %v1364
  %v1366 = vsel %vm135, %v1365, 0.0
  %1367 = vadd.xlane.f32.xlu0 %v1366
  %v1368 = vpop.xlane.xlu0 %1367
  %v1369 = vmul.f32 %v1368, %v215
  %v1370 = vmul.f32 %v1365, %v1365
  %v1371 = vsel %vm135, %v1370, 0.0
  %1372 = vadd.xlane.f32.xlu0 %v1371
  %v1373 = vpop.xlane.xlu0 %1372
  %v1374 = vmul.f32 %v1373, %v215
  %v1375 = vmul.f32 %v1369, %v1369
  %v1376 = vsub.f32 %v1374, %v1375
  %v1377 = vmax.f32 %v1376, 0.0
  %v1378 = vsub.f32 %v1365, %v1369
  %v1379 = vadd.f32 %v1377, 1e-05
  %v1380 = vrsqrt.pop %v1379
  %v1381 = vmul.f32 %v1378, %v1380
  %v1382 = vlaneseq
  %v1383 = vshrl.u32 %v1382, 7
  %v1384 = vsub.s32 5, %v1383
  %v1385 = vrot.slane %v1091, %v1384
  %v1386 = vmul.f32 %v1381, %v1385
  %v1387 = vlaneseq
  %v1388 = vshrl.u32 %v1387, 7
  %v1389 = vsub.s32 6, %v1388
  %v1390 = vrot.slane %v1091, %v1389
  %v1391 = vadd.f32 %v1386, %v1390
  %v1392 = vmax.f32 %v1391, -100.0
  %v1393 = vmin.f32 %v1392, 100.0
  %s1394 = scalar_lea.vmem %s1, 544
  %v1395 = vld [vmem:[%s1394] sm:$0xff]
  %v1396 = vld [vmem:[%s1394 + $0x8] sm:$0xff]
  %v1397 = vld [vmem:[%s1394 + $0x10] sm:$0xff]
  %v1398 = vld [vmem:[%s1394 + $0x18] sm:$0xff]
  %v1399 = vld [vmem:[%s1394 + $0x20] sm:$0xff]
  %v1400 = vld [vmem:[%s1394 + $0x28] sm:$0xff]
  %v1401 = vld [vmem:[%s1394 + $0x30] sm:$0xff]
  %v1402 = vld [vmem:[%s1394 + $0x38] sm:$0xff]
  %v1403 = vld [vmem:[%s1394 + $0x40] sm:$0xff]
  %v1404 = vld [vmem:[%s1394 + $0x48] sm:$0xff]
  %v1405 = vld [vmem:[%s1394 + $0x50] sm:$0xff]
  %v1406 = vld [vmem:[%s1394 + $0x58] sm:$0xff]
  %v1407 = vld [vmem:[%s1394 + $0x60] sm:$0xff]
  %v1408 = vld [vmem:[%s1394 + $0x68] sm:$0xff]
  %v1409 = vld [vmem:[%s1394 + $0x70] sm:$0xff]
  %v1410 = vld [vmem:[%s1394 + $0x78] sm:$0xff]
  %v1411 = vld [vmem:[%s1394 + $0x80] sm:$0xff]
  %v1412 = vmax.f32 %v1393, -100.0
  %v1413 = vmin.f32 %v1412, 100.0
  %v1414 = vlaneseq
  %v1415 = vshrl.u32 %v1414, 7
  %v1416 = vsub.s32 0, %v1415
  %v1417 = vrot.slane %v1411, %v1416
  %v1419 = vsel %vm135, %v1413, 0
  %1421 = vmatprep.subr.mxu0 0.0
  %1422 = vmatpush1.msra.mxu0 0.0
  %1423 = vmatprep.subr.mxu0 0.0
  %1424 = vmatpush1.msra.mxu0 0.0
  %1425 = vmatprep.subr.mxu0 0.0
  %1426 = vmatpush1.msra.mxu0 0.0
  %1427 = vmatprep.subr.mxu0 0.0
  %1428 = vmatpush1.msra.mxu0 0.0
  %1429 = vmatprep.subr.mxu0 0.0
  %1430 = vmatpush1.msra.mxu0 0.0
  %1431 = vmatprep.subr.mxu0 0.0
  %1432 = vmatpush1.msra.mxu0 0.0
  %1433 = vmatprep.subr.mxu0 0.0
  %1434 = vmatpush1.msra.mxu0 0.0
  %1435 = vmatprep.subr.mxu0 0.0
  %1436 = vmatpush1.msra.mxu0 0.0
  %1437 = vmatprep.subr.mxu0 0.0
  %1438 = vmatpush1.msra.mxu0 0.0
  %1439 = vmatprep.subr.mxu0 0.0
  %1440 = vmatpush1.msra.mxu0 0.0
  %1441 = vmatprep.subr.mxu0 0.0
  %1442 = vmatpush1.msra.mxu0 0.0
  %1443 = vmatprep.subr.mxu0 0.0
  %1444 = vmatpush1.msra.mxu0 0.0
  %1445 = vmatprep.subr.mxu0 0.0
  %1446 = vmatpush1.msra.mxu0 %v1398
  %1447 = vmatprep.subr.mxu0 0.0
  %1448 = vmatpush1.msra.mxu0 %v1397
  %1449 = vmatprep.subr.mxu0 0.0
  %1450 = vmatpush1.msra.mxu0 %v1396
  %1451 = vmatprep.subr.mxu0 0.0
  %1452 = vmatpush1.msra.mxu0 %v1395
  %1453 = vmatprep.subr.mxu0 0.0
  %1454 = vmatpush2.msra.mxu0 0.0
  %1455 = vmatprep.subr.mxu0 0.0
  %1456 = vmatpush2.msra.mxu0 0.0
  %1457 = vmatprep.subr.mxu0 0.0
  %1458 = vmatpush2.msra.mxu0 0.0
  %1459 = vmatprep.subr.mxu0 0.0
  %1460 = vmatpush2.msra.mxu0 0.0
  %1461 = vmatprep.subr.mxu0 0.0
  %1462 = vmatpush2.msra.mxu0 0.0
  %1463 = vmatprep.subr.mxu0 0.0
  %1464 = vmatpush2.msra.mxu0 0.0
  %1465 = vmatprep.subr.mxu0 0.0
  %1466 = vmatpush2.msra.mxu0 0.0
  %1467 = vmatprep.subr.mxu0 0.0
  %1468 = vmatpush2.msra.mxu0 0.0
  %1469 = vmatprep.subr.mxu0 0.0
  %1470 = vmatpush2.msra.mxu0 0.0
  %1471 = vmatprep.subr.mxu0 0.0
  %1472 = vmatpush2.msra.mxu0 0.0
  %1473 = vmatprep.subr.mxu0 0.0
  %1474 = vmatpush2.msra.mxu0 0.0
  %1475 = vmatprep.subr.mxu0 0.0
  %1476 = vmatpush2.msra.mxu0 0.0
  %1477 = vmatprep.subr.mxu0 0.0
  %1478 = vmatpush2.msra.mxu0 0.0
  %1479 = vmatprep.subr.mxu0 0.0
  %1480 = vmatpush2.msra.mxu0 0.0
  %1481 = vmatprep.subr.mxu0 0.0
  %1482 = vmatpush2.msra.mxu0 0.0
  %1483 = vmatprep.subr.mxu0 0.0
  %1484 = vmatpush2.msra.mxu0 0.0
  %1485 = vmatprep.mubr.f32.mxu0 0.0
  %1486 = vmatmul.mubr.f32.gmra.mxu0 %v1419
  %v1487 = vpop.f32.mrf.mxu0
  %v1488 = vadd.f32 %v1417, %v1487
  %v1489 = vpop.f32.mrf.mxu0
  %1490 = vdwg.mxu0
  %v1491 = vmax.f32 %v1488, -100.0
  %v1492 = vmin.f32 %v1491, 100.0
  %v1493 = vadd.f32 %v1413, %v1492
  %v1494 = vsel %vm135, %v1493, 0.0
  %1495 = vadd.xlane.f32.xlu0 %v1494
  %v1496 = vpop.xlane.xlu0 %1495
  %v1497 = vmul.f32 %v1496, %v215
  %v1498 = vmul.f32 %v1493, %v1493
  %v1499 = vsel %vm135, %v1498, 0.0
  %1500 = vadd.xlane.f32.xlu0 %v1499
  %v1501 = vpop.xlane.xlu0 %1500
  %v1502 = vmul.f32 %v1501, %v215
  %v1503 = vmul.f32 %v1497, %v1497
  %v1504 = vsub.f32 %v1502, %v1503
  %v1505 = vmax.f32 %v1504, 0.0
  %v1506 = vsub.f32 %v1493, %v1497
  %v1507 = vadd.f32 %v1505, 1e-05
  %v1508 = vrsqrt.pop %v1507
  %v1509 = vmul.f32 %v1506, %v1508
  %v1510 = vlaneseq
  %v1511 = vshrl.u32 %v1510, 7
  %v1512 = vsub.s32 1, %v1511
  %v1513 = vrot.slane %v1411, %v1512
  %v1514 = vmul.f32 %v1509, %v1513
  %v1515 = vlaneseq
  %v1516 = vshrl.u32 %v1515, 7
  %v1517 = vsub.s32 2, %v1516
  %v1518 = vrot.slane %v1411, %v1517
  %v1519 = vadd.f32 %v1514, %v1518
  %v1520 = vlaneseq
  %v1521 = vshrl.u32 %v1520, 7
  %v1522 = vsub.s32 3, %v1521
  %v1523 = vrot.slane %v1411, %v1522
  %v1525 = vsel %vm135, %v1519, 0
  %1527 = vmatprep.subr.mxu0 0.0
  %1528 = vmatpush1.msra.mxu0 0.0
  %1529 = vmatprep.subr.mxu0 0.0
  %1530 = vmatpush1.msra.mxu0 0.0
  %1531 = vmatprep.subr.mxu0 0.0
  %1532 = vmatpush1.msra.mxu0 0.0
  %1533 = vmatprep.subr.mxu0 0.0
  %1534 = vmatpush1.msra.mxu0 0.0
  %1535 = vmatprep.subr.mxu0 0.0
  %1536 = vmatpush1.msra.mxu0 0.0
  %1537 = vmatprep.subr.mxu0 0.0
  %1538 = vmatpush1.msra.mxu0 0.0
  %1539 = vmatprep.subr.mxu0 0.0
  %1540 = vmatpush1.msra.mxu0 0.0
  %1541 = vmatprep.subr.mxu0 0.0
  %1542 = vmatpush1.msra.mxu0 0.0
  %1543 = vmatprep.subr.mxu0 0.0
  %1544 = vmatpush1.msra.mxu0 0.0
  %1545 = vmatprep.subr.mxu0 0.0
  %1546 = vmatpush1.msra.mxu0 0.0
  %1547 = vmatprep.subr.mxu0 0.0
  %1548 = vmatpush1.msra.mxu0 0.0
  %1549 = vmatprep.subr.mxu0 0.0
  %1550 = vmatpush1.msra.mxu0 0.0
  %1551 = vmatprep.subr.mxu0 0.0
  %1552 = vmatpush1.msra.mxu0 %v1402
  %1553 = vmatprep.subr.mxu0 0.0
  %1554 = vmatpush1.msra.mxu0 %v1401
  %1555 = vmatprep.subr.mxu0 0.0
  %1556 = vmatpush1.msra.mxu0 %v1400
  %1557 = vmatprep.subr.mxu0 0.0
  %1558 = vmatpush1.msra.mxu0 %v1399
  %1559 = vmatprep.subr.mxu0 0.0
  %1560 = vmatpush2.msra.mxu0 0.0
  %1561 = vmatprep.subr.mxu0 0.0
  %1562 = vmatpush2.msra.mxu0 0.0
  %1563 = vmatprep.subr.mxu0 0.0
  %1564 = vmatpush2.msra.mxu0 0.0
  %1565 = vmatprep.subr.mxu0 0.0
  %1566 = vmatpush2.msra.mxu0 0.0
  %1567 = vmatprep.subr.mxu0 0.0
  %1568 = vmatpush2.msra.mxu0 0.0
  %1569 = vmatprep.subr.mxu0 0.0
  %1570 = vmatpush2.msra.mxu0 0.0
  %1571 = vmatprep.subr.mxu0 0.0
  %1572 = vmatpush2.msra.mxu0 0.0
  %1573 = vmatprep.subr.mxu0 0.0
  %1574 = vmatpush2.msra.mxu0 0.0
  %1575 = vmatprep.subr.mxu0 0.0
  %1576 = vmatpush2.msra.mxu0 0.0
  %1577 = vmatprep.subr.mxu0 0.0
  %1578 = vmatpush2.msra.mxu0 0.0
  %1579 = vmatprep.subr.mxu0 0.0
  %1580 = vmatpush2.msra.mxu0 0.0
  %1581 = vmatprep.subr.mxu0 0.0
  %1582 = vmatpush2.msra.mxu0 0.0
  %1583 = vmatprep.subr.mxu0 0.0
  %1584 = vmatpush2.msra.mxu0 0.0
  %1585 = vmatprep.subr.mxu0 0.0
  %1586 = vmatpush2.msra.mxu0 0.0
  %1587 = vmatprep.subr.mxu0 0.0
  %1588 = vmatpush2.msra.mxu0 0.0
  %1589 = vmatprep.subr.mxu0 0.0
  %1590 = vmatpush2.msra.mxu0 0.0
  %1591 = vmatprep.mubr.f32.mxu0 0.0
  %1592 = vmatmul.mubr.f32.gmra.mxu0 %v1525
  %v1593 = vpop.f32.mrf.mxu0
  %v1594 = vadd.f32 %v1523, %v1593
  %v1595 = vpop.f32.mrf.mxu0
  %1596 = vdwg.mxu0
  %v1597 = vmul.f32 %v1594, %v1594
  %v1598 = vmul.f32 %v1594, %v1597
  %v1599 = vmul.f32 %v1598, 0.044715
  %v1600 = vadd.f32 %v1594, %v1599
  %v1601 = vmul.f32 %v1600, 0.7978846
  %v1602 = vtanh.pop %v1601
  %v1603 = vadd.f32 %v1602, 1.0
  %v1604 = vmul.f32 %v1603, 0.5
  %v1605 = vmul.f32 %v1594, %v1604
  %v1606 = vlaneseq
  %v1607 = vshrl.u32 %v1606, 7
  %v1608 = vsub.s32 4, %v1607
  %v1609 = vrot.slane %v1411, %v1608
  %v1611 = vsel %vm329, %v1605, 0
  %1613 = vmatprep.subr.mxu0 0.0
  %1614 = vmatpush1.msra.mxu0 0.0
  %1615 = vmatprep.subr.mxu0 0.0
  %1616 = vmatpush1.msra.mxu0 0.0
  %1617 = vmatprep.subr.mxu0 0.0
  %1618 = vmatpush1.msra.mxu0 0.0
  %1619 = vmatprep.subr.mxu0 0.0
  %1620 = vmatpush1.msra.mxu0 0.0
  %1621 = vmatprep.subr.mxu0 0.0
  %1622 = vmatpush1.msra.mxu0 0.0
  %1623 = vmatprep.subr.mxu0 0.0
  %1624 = vmatpush1.msra.mxu0 0.0
  %1625 = vmatprep.subr.mxu0 0.0
  %1626 = vmatpush1.msra.mxu0 0.0
  %1627 = vmatprep.subr.mxu0 0.0
  %1628 = vmatpush1.msra.mxu0 0.0
  %1629 = vmatprep.subr.mxu0 0.0
  %1630 = vmatpush1.msra.mxu0 %v1410
  %1631 = vmatprep.subr.mxu0 0.0
  %1632 = vmatpush1.msra.mxu0 %v1409
  %1633 = vmatprep.subr.mxu0 0.0
  %1634 = vmatpush1.msra.mxu0 %v1408
  %1635 = vmatprep.subr.mxu0 0.0
  %1636 = vmatpush1.msra.mxu0 %v1407
  %1637 = vmatprep.subr.mxu0 0.0
  %1638 = vmatpush1.msra.mxu0 %v1406
  %1639 = vmatprep.subr.mxu0 0.0
  %1640 = vmatpush1.msra.mxu0 %v1405
  %1641 = vmatprep.subr.mxu0 0.0
  %1642 = vmatpush1.msra.mxu0 %v1404
  %1643 = vmatprep.subr.mxu0 0.0
  %1644 = vmatpush1.msra.mxu0 %v1403
  %1645 = vmatprep.subr.mxu0 0.0
  %1646 = vmatpush2.msra.mxu0 0.0
  %1647 = vmatprep.subr.mxu0 0.0
  %1648 = vmatpush2.msra.mxu0 0.0
  %1649 = vmatprep.subr.mxu0 0.0
  %1650 = vmatpush2.msra.mxu0 0.0
  %1651 = vmatprep.subr.mxu0 0.0
  %1652 = vmatpush2.msra.mxu0 0.0
  %1653 = vmatprep.subr.mxu0 0.0
  %1654 = vmatpush2.msra.mxu0 0.0
  %1655 = vmatprep.subr.mxu0 0.0
  %1656 = vmatpush2.msra.mxu0 0.0
  %1657 = vmatprep.subr.mxu0 0.0
  %1658 = vmatpush2.msra.mxu0 0.0
  %1659 = vmatprep.subr.mxu0 0.0
  %1660 = vmatpush2.msra.mxu0 0.0
  %1661 = vmatprep.subr.mxu0 0.0
  %1662 = vmatpush2.msra.mxu0 0.0
  %1663 = vmatprep.subr.mxu0 0.0
  %1664 = vmatpush2.msra.mxu0 0.0
  %1665 = vmatprep.subr.mxu0 0.0
  %1666 = vmatpush2.msra.mxu0 0.0
  %1667 = vmatprep.subr.mxu0 0.0
  %1668 = vmatpush2.msra.mxu0 0.0
  %1669 = vmatprep.subr.mxu0 0.0
  %1670 = vmatpush2.msra.mxu0 0.0
  %1671 = vmatprep.subr.mxu0 0.0
  %1672 = vmatpush2.msra.mxu0 0.0
  %1673 = vmatprep.subr.mxu0 0.0
  %1674 = vmatpush2.msra.mxu0 0.0
  %1675 = vmatprep.subr.mxu0 0.0
  %1676 = vmatpush2.msra.mxu0 0.0
  %1677 = vmatprep.mubr.f32.mxu0 0.0
  %1678 = vmatmul.mubr.f32.gmra.mxu0 %v1611
  %v1679 = vpop.f32.mrf.mxu0
  %v1680 = vadd.f32 %v1609, %v1679
  %v1681 = vpop.f32.mrf.mxu0
  %1682 = vdwg.mxu0
  %v1683 = vmax.f32 %v1680, -100.0
  %v1684 = vmin.f32 %v1683, 100.0
  %v1685 = vadd.f32 %v1519, %v1684
  %v1686 = vsel %vm135, %v1685, 0.0
  %1687 = vadd.xlane.f32.xlu0 %v1686
  %v1688 = vpop.xlane.xlu0 %1687
  %v1689 = vmul.f32 %v1688, %v215
  %v1690 = vmul.f32 %v1685, %v1685
  %v1691 = vsel %vm135, %v1690, 0.0
  %1692 = vadd.xlane.f32.xlu0 %v1691
  %v1693 = vpop.xlane.xlu0 %1692
  %v1694 = vmul.f32 %v1693, %v215
  %v1695 = vmul.f32 %v1689, %v1689
  %v1696 = vsub.f32 %v1694, %v1695
  %v1697 = vmax.f32 %v1696, 0.0
  %v1698 = vsub.f32 %v1685, %v1689
  %v1699 = vadd.f32 %v1697, 1e-05
  %v1700 = vrsqrt.pop %v1699
  %v1701 = vmul.f32 %v1698, %v1700
  %v1702 = vlaneseq
  %v1703 = vshrl.u32 %v1702, 7
  %v1704 = vsub.s32 5, %v1703
  %v1705 = vrot.slane %v1411, %v1704
  %v1706 = vmul.f32 %v1701, %v1705
  %v1707 = vlaneseq
  %v1708 = vshrl.u32 %v1707, 7
  %v1709 = vsub.s32 6, %v1708
  %v1710 = vrot.slane %v1411, %v1709
  %v1711 = vadd.f32 %v1706, %v1710
  %v1712 = vmax.f32 %v1711, -100.0
  %v1713 = vmin.f32 %v1712, 100.0
  %v1714 = vmax.f32 %v1713, -10.0
  %v1715 = vmin.f32 %v1714, 10.0
  %v1716 = vsel %vm135, %v1715, 0.0
  %1717 = vadd.xlane.f32.xlu0 %v1716
  %v1718 = vpop.xlane.xlu0 %1717
  %v1719 = vmul.f32 %v1718, %v215
  %v1720 = vmul.f32 %v1715, %v1715
  %v1721 = vsel %vm135, %v1720, 0.0
  %1722 = vadd.xlane.f32.xlu0 %v1721
  %v1723 = vpop.xlane.xlu0 %1722
  %v1724 = vmul.f32 %v1723, %v215
  %v1725 = vmul.f32 %v1719, %v1719
  %v1726 = vsub.f32 %v1724, %v1725
  %v1727 = vmax.f32 %v1726, 0.0
  %v1728 = vsub.f32 %v1715, %v1719
  %v1729 = vadd.f32 %v1727, 1e-05
  %v1730 = vrsqrt.pop %v1729
  %v1731 = vmul.f32 %v1728, %v1730
  %v1732 = vlaneseq
  %v1733 = vshrl.u32 %v1732, 7
  %v1734 = vsub.s32 1, %v1733
  %v1735 = vrot.slane %v32, %v1734
  %v1736 = vmul.f32 %v1731, %v1735
  %v1737 = vlaneseq
  %v1738 = vshrl.u32 %v1737, 7
  %v1739 = vsub.s32 2, %v1738
  %v1740 = vrot.slane %v32, %v1739
  %v1741 = vadd.f32 %v1736, %v1740
  %v1742 = vlaneseq
  %v1743 = vshrl.u32 %v1742, 7
  %v1744 = vsub.s32 3, %v1743
  %v1745 = vrot.slane %v32, %v1744
  %v1747 = vsel %vm135, %v1741, 0
  %1749 = vmatprep.subr.mxu0 0.0
  %1750 = vmatpush1.msra.mxu0 0.0
  %1751 = vmatprep.subr.mxu0 0.0
  %1752 = vmatpush1.msra.mxu0 0.0
  %1753 = vmatprep.subr.mxu0 0.0
  %1754 = vmatpush1.msra.mxu0 0.0
  %1755 = vmatprep.subr.mxu0 0.0
  %1756 = vmatpush1.msra.mxu0 0.0
  %1757 = vmatprep.subr.mxu0 0.0
  %1758 = vmatpush1.msra.mxu0 0.0
  %1759 = vmatprep.subr.mxu0 0.0
  %1760 = vmatpush1.msra.mxu0 0.0
  %1761 = vmatprep.subr.mxu0 0.0
  %1762 = vmatpush1.msra.mxu0 0.0
  %1763 = vmatprep.subr.mxu0 0.0
  %1764 = vmatpush1.msra.mxu0 0.0
  %1765 = vmatprep.subr.mxu0 0.0
  %1766 = vmatpush1.msra.mxu0 0.0
  %1767 = vmatprep.subr.mxu0 0.0
  %1768 = vmatpush1.msra.mxu0 0.0
  %1769 = vmatprep.subr.mxu0 0.0
  %1770 = vmatpush1.msra.mxu0 0.0
  %1771 = vmatprep.subr.mxu0 0.0
  %1772 = vmatpush1.msra.mxu0 0.0
  %1773 = vmatprep.subr.mxu0 0.0
  %1774 = vmatpush1.msra.mxu0 %v23
  %1775 = vmatprep.subr.mxu0 0.0
  %1776 = vmatpush1.msra.mxu0 %v22
  %1777 = vmatprep.subr.mxu0 0.0
  %1778 = vmatpush1.msra.mxu0 %v21
  %1779 = vmatprep.subr.mxu0 0.0
  %1780 = vmatpush1.msra.mxu0 %v20
  %1781 = vmatprep.subr.mxu0 0.0
  %1782 = vmatpush2.msra.mxu0 0.0
  %1783 = vmatprep.subr.mxu0 0.0
  %1784 = vmatpush2.msra.mxu0 0.0
  %1785 = vmatprep.subr.mxu0 0.0
  %1786 = vmatpush2.msra.mxu0 0.0
  %1787 = vmatprep.subr.mxu0 0.0
  %1788 = vmatpush2.msra.mxu0 0.0
  %1789 = vmatprep.subr.mxu0 0.0
  %1790 = vmatpush2.msra.mxu0 0.0
  %1791 = vmatprep.subr.mxu0 0.0
  %1792 = vmatpush2.msra.mxu0 0.0
  %1793 = vmatprep.subr.mxu0 0.0
  %1794 = vmatpush2.msra.mxu0 0.0
  %1795 = vmatprep.subr.mxu0 0.0
  %1796 = vmatpush2.msra.mxu0 0.0
  %1797 = vmatprep.subr.mxu0 0.0
  %1798 = vmatpush2.msra.mxu0 0.0
  %1799 = vmatprep.subr.mxu0 0.0
  %1800 = vmatpush2.msra.mxu0 0.0
  %1801 = vmatprep.subr.mxu0 0.0
  %1802 = vmatpush2.msra.mxu0 0.0
  %1803 = vmatprep.subr.mxu0 0.0
  %1804 = vmatpush2.msra.mxu0 0.0
  %1805 = vmatprep.subr.mxu0 0.0
  %1806 = vmatpush2.msra.mxu0 0.0
  %1807 = vmatprep.subr.mxu0 0.0
  %1808 = vmatpush2.msra.mxu0 0.0
  %1809 = vmatprep.subr.mxu0 0.0
  %1810 = vmatpush2.msra.mxu0 0.0
  %1811 = vmatprep.subr.mxu0 0.0
  %1812 = vmatpush2.msra.mxu0 0.0
  %1813 = vmatprep.mubr.f32.mxu0 0.0
  %1814 = vmatmul.mubr.f32.gmra.mxu0 %v1747
  %v1815 = vpop.f32.mrf.mxu0
  %v1816 = vadd.f32 %v1745, %v1815
  %v1817 = vpop.f32.mrf.mxu0
  %1818 = vdwg.mxu0
  %v1819 = vsel %vm329, %v1816, 0.0
  %1820 = vadd.xlane.f32.xlu0 %v1819
  %v1821 = vpop.xlane.xlu0 %1820
  %v1822 = vrcp.pop 64.0
  %v1823 = vmul.f32 %v1821, %v1822
  %v1824 = vmul.f32 %v1816, %v1816
  %v1825 = vsel %vm329, %v1824, 0.0
  %1826 = vadd.xlane.f32.xlu0 %v1825
  %v1827 = vpop.xlane.xlu0 %1826
  %v1828 = vmul.f32 %v1827, %v1822
  %v1829 = vmul.f32 %v1823, %v1823
  %v1830 = vsub.f32 %v1828, %v1829
  %v1831 = vmax.f32 %v1830, 0.0
  %v1832 = vsub.f32 %v1816, %v1823
  %v1833 = vadd.f32 %v1831, 1e-05
  %v1834 = vrsqrt.pop %v1833
  %v1835 = vmul.f32 %v1832, %v1834
  %v1836 = vlaneseq
  %v1837 = vshrl.u32 %v1836, 7
  %v1838 = vsub.s32 4, %v1837
  %v1839 = vrot.slane %v32, %v1838
  %v1840 = vmul.f32 %v1835, %v1839
  %v1841 = vlaneseq
  %v1842 = vshrl.u32 %v1841, 7
  %v1843 = vsub.s32 5, %v1842
  %v1844 = vrot.slane %v32, %v1843
  %v1845 = vadd.f32 %v1840, %v1844
  %v1846 = vmul.f32 %v1845, %v1845
  %v1847 = vmul.f32 %v1845, %v1846
  %v1848 = vmul.f32 %v1847, 0.044715
  %v1849 = vadd.f32 %v1845, %v1848
  %v1850 = vmul.f32 %v1849, 0.7978846
  %v1851 = vtanh.pop %v1850
  %v1852 = vadd.f32 %v1851, 1.0
  %v1853 = vmul.f32 %v1852, 0.5
  %v1854 = vmul.f32 %v1845, %v1853
  %v1855 = vlaneseq
  %v1856 = vshrl.u32 %v1855, 7
  %v1857 = vsub.s32 6, %v1856
  %v1858 = vrot.slane %v32, %v1857
  %v1860 = vsel %vm329, %v1854, 0
  %1862 = vmatprep.subr.mxu0 0.0
  %1863 = vmatpush1.msra.mxu0 0.0
  %1864 = vmatprep.subr.mxu0 0.0
  %1865 = vmatpush1.msra.mxu0 0.0
  %1866 = vmatprep.subr.mxu0 0.0
  %1867 = vmatpush1.msra.mxu0 0.0
  %1868 = vmatprep.subr.mxu0 0.0
  %1869 = vmatpush1.msra.mxu0 0.0
  %1870 = vmatprep.subr.mxu0 0.0
  %1871 = vmatpush1.msra.mxu0 0.0
  %1872 = vmatprep.subr.mxu0 0.0
  %1873 = vmatpush1.msra.mxu0 0.0
  %1874 = vmatprep.subr.mxu0 0.0
  %1875 = vmatpush1.msra.mxu0 0.0
  %1876 = vmatprep.subr.mxu0 0.0
  %1877 = vmatpush1.msra.mxu0 0.0
  %1878 = vmatprep.subr.mxu0 0.0
  %1879 = vmatpush1.msra.mxu0 %v31
  %1880 = vmatprep.subr.mxu0 0.0
  %1881 = vmatpush1.msra.mxu0 %v30
  %1882 = vmatprep.subr.mxu0 0.0
  %1883 = vmatpush1.msra.mxu0 %v29
  %1884 = vmatprep.subr.mxu0 0.0
  %1885 = vmatpush1.msra.mxu0 %v28
  %1886 = vmatprep.subr.mxu0 0.0
  %1887 = vmatpush1.msra.mxu0 %v27
  %1888 = vmatprep.subr.mxu0 0.0
  %1889 = vmatpush1.msra.mxu0 %v26
  %1890 = vmatprep.subr.mxu0 0.0
  %1891 = vmatpush1.msra.mxu0 %v25
  %1892 = vmatprep.subr.mxu0 0.0
  %1893 = vmatpush1.msra.mxu0 %v24
  %1894 = vmatprep.subr.mxu0 0.0
  %1895 = vmatpush2.msra.mxu0 0.0
  %1896 = vmatprep.subr.mxu0 0.0
  %1897 = vmatpush2.msra.mxu0 0.0
  %1898 = vmatprep.subr.mxu0 0.0
  %1899 = vmatpush2.msra.mxu0 0.0
  %1900 = vmatprep.subr.mxu0 0.0
  %1901 = vmatpush2.msra.mxu0 0.0
  %1902 = vmatprep.subr.mxu0 0.0
  %1903 = vmatpush2.msra.mxu0 0.0
  %1904 = vmatprep.subr.mxu0 0.0
  %1905 = vmatpush2.msra.mxu0 0.0
  %1906 = vmatprep.subr.mxu0 0.0
  %1907 = vmatpush2.msra.mxu0 0.0
  %1908 = vmatprep.subr.mxu0 0.0
  %1909 = vmatpush2.msra.mxu0 0.0
  %1910 = vmatprep.subr.mxu0 0.0
  %1911 = vmatpush2.msra.mxu0 0.0
  %1912 = vmatprep.subr.mxu0 0.0
  %1913 = vmatpush2.msra.mxu0 0.0
  %1914 = vmatprep.subr.mxu0 0.0
  %1915 = vmatpush2.msra.mxu0 0.0
  %1916 = vmatprep.subr.mxu0 0.0
  %1917 = vmatpush2.msra.mxu0 0.0
  %1918 = vmatprep.subr.mxu0 0.0
  %1919 = vmatpush2.msra.mxu0 0.0
  %1920 = vmatprep.subr.mxu0 0.0
  %1921 = vmatpush2.msra.mxu0 0.0
  %1922 = vmatprep.subr.mxu0 0.0
  %1923 = vmatpush2.msra.mxu0 0.0
  %1924 = vmatprep.subr.mxu0 0.0
  %1925 = vmatpush2.msra.mxu0 0.0
  %1926 = vmatprep.mubr.f32.mxu0 0.0
  %1927 = vmatmul.mubr.f32.gmra.mxu0 %v1860
  %v1928 = vpop.f32.mrf.mxu0
  %v1929 = vadd.f32 %v1858, %v1928
  %v1930 = vpop.f32.mrf.mxu0
  %1931 = vdwg.mxu0
  %v1932 = vmax.f32 %v1929, -10.0
  %v1933 = vmin.f32 %v1932, 10.0
  %s1934 = scalar_lea.vmem %s1, 680
  %v1935 = vld [vmem:[%s1934] sm:$0xff]
  %v1936 = vld [vmem:[%s1934 + $0x8] sm:$0xff]
  %v1937 = vld [vmem:[%s1934 + $0x10] sm:$0xff]
  %v1938 = vld [vmem:[%s1934 + $0x18] sm:$0xff]
  %v1939 = vld [vmem:[%s1934 + $0x20] sm:$0xff]
  %v1940 = vld [vmem:[%s1934 + $0x28] sm:$0xff]
  %v1941 = vld [vmem:[%s1934 + $0x30] sm:$0xff]
  %v1942 = vld [vmem:[%s1934 + $0x38] sm:$0xff]
  %v1943 = vld [vmem:[%s1934 + $0x40] sm:$0xff]
  %v1944 = vld [vmem:[%s1934 + $0x48] sm:$0xff]
  %v1945 = vld [vmem:[%s1934 + $0x50] sm:$0xff]
  %v1946 = vld [vmem:[%s1934 + $0x58] sm:$0xff]
  %v1947 = vld [vmem:[%s1934 + $0x60] sm:$0xff]
  %v1948 = vld [vmem:[%s1934 + $0x68] sm:$0xff]
  %v1949 = vld [vmem:[%s1934 + $0x70] sm:$0xff]
  %v1950 = vld [vmem:[%s1934 + $0x78] sm:$0xff]
  %v1951 = vld [vmem:[%s1934 + $0x80] sm:$0xff]
  %v1952 = vlaneseq
  %v1953 = vshrl.u32 %v1952, 7
  %v1954 = vsub.s32 0, %v1953
  %v1955 = vrot.slane %v1951, %v1954
  %1956 = vmatprep.subr.mxu0 0.0
  %1957 = vmatpush1.msra.mxu0 0.0
  %1958 = vmatprep.subr.mxu0 0.0
  %1959 = vmatpush1.msra.mxu0 0.0
  %1960 = vmatprep.subr.mxu0 0.0
  %1961 = vmatpush1.msra.mxu0 0.0
  %1962 = vmatprep.subr.mxu0 0.0
  %1963 = vmatpush1.msra.mxu0 0.0
  %1964 = vmatprep.subr.mxu0 0.0
  %1965 = vmatpush1.msra.mxu0 0.0
  %1966 = vmatprep.subr.mxu0 0.0
  %1967 = vmatpush1.msra.mxu0 0.0
  %1968 = vmatprep.subr.mxu0 0.0
  %1969 = vmatpush1.msra.mxu0 0.0
  %1970 = vmatprep.subr.mxu0 0.0
  %1971 = vmatpush1.msra.mxu0 0.0
  %1972 = vmatprep.subr.mxu0 0.0
  %1973 = vmatpush1.msra.mxu0 0.0
  %1974 = vmatprep.subr.mxu0 0.0
  %1975 = vmatpush1.msra.mxu0 0.0
  %1976 = vmatprep.subr.mxu0 0.0
  %1977 = vmatpush1.msra.mxu0 0.0
  %1978 = vmatprep.subr.mxu0 0.0
  %1979 = vmatpush1.msra.mxu0 0.0
  %1980 = vmatprep.subr.mxu0 0.0
  %1981 = vmatpush1.msra.mxu0 %v1938
  %1982 = vmatprep.subr.mxu0 0.0
  %1983 = vmatpush1.msra.mxu0 %v1937
  %1984 = vmatprep.subr.mxu0 0.0
  %1985 = vmatpush1.msra.mxu0 %v1936
  %1986 = vmatprep.subr.mxu0 0.0
  %1987 = vmatpush1.msra.mxu0 %v1935
  %1988 = vmatprep.subr.mxu0 0.0
  %1989 = vmatpush2.msra.mxu0 0.0
  %1990 = vmatprep.subr.mxu0 0.0
  %1991 = vmatpush2.msra.mxu0 0.0
  %1992 = vmatprep.subr.mxu0 0.0
  %1993 = vmatpush2.msra.mxu0 0.0
  %1994 = vmatprep.subr.mxu0 0.0
  %1995 = vmatpush2.msra.mxu0 0.0
  %1996 = vmatprep.subr.mxu0 0.0
  %1997 = vmatpush2.msra.mxu0 0.0
  %1998 = vmatprep.subr.mxu0 0.0
  %1999 = vmatpush2.msra.mxu0 0.0
  %2000 = vmatprep.subr.mxu0 0.0
  %2001 = vmatpush2.msra.mxu0 0.0
  %2002 = vmatprep.subr.mxu0 0.0
  %2003 = vmatpush2.msra.mxu0 0.0
  %2004 = vmatprep.subr.mxu0 0.0
  %2005 = vmatpush2.msra.mxu0 0.0
  %2006 = vmatprep.subr.mxu0 0.0
  %2007 = vmatpush2.msra.mxu0 0.0
  %2008 = vmatprep.subr.mxu0 0.0
  %2009 = vmatpush2.msra.mxu0 0.0
  %2010 = vmatprep.subr.mxu0 0.0
  %2011 = vmatpush2.msra.mxu0 0.0
  %2012 = vmatprep.subr.mxu0 0.0
  %2013 = vmatpush2.msra.mxu0 0.0
  %2014 = vmatprep.subr.mxu0 0.0
  %2015 = vmatpush2.msra.mxu0 0.0
  %2016 = vmatprep.subr.mxu0 0.0
  %2017 = vmatpush2.msra.mxu0 0.0
  %2018 = vmatprep.subr.mxu0 0.0
  %2019 = vmatpush2.msra.mxu0 0.0
  %2020 = vmatprep.mubr.f32.mxu0 0.0
  %2021 = vmatmul.mubr.f32.gmra.mxu0 %v779
  %v2022 = vpop.f32.mrf.mxu0
  %v2023 = vadd.f32 %v1955, %v2022
  %v2024 = vpop.f32.mrf.mxu0
  %2025 = vdwg.mxu0
  %v2026 = vmax.f32 %v2023, -100.0
  %v2027 = vmin.f32 %v2026, 100.0
  %v2028 = vadd.f32 %v773, %v2027
  %v2029 = vsel %vm135, %v2028, 0.0
  %2030 = vadd.xlane.f32.xlu0 %v2029
  %v2031 = vpop.xlane.xlu0 %2030
  %v2032 = vmul.f32 %v2031, %v215
  %v2033 = vmul.f32 %v2028, %v2028
  %v2034 = vsel %vm135, %v2033, 0.0
  %2035 = vadd.xlane.f32.xlu0 %v2034
  %v2036 = vpop.xlane.xlu0 %2035
  %v2037 = vmul.f32 %v2036, %v215
  %v2038 = vmul.f32 %v2032, %v2032
  %v2039 = vsub.f32 %v2037, %v2038
  %v2040 = vmax.f32 %v2039, 0.0
  %v2041 = vsub.f32 %v2028, %v2032
  %v2042 = vadd.f32 %v2040, 1e-05
  %v2043 = vrsqrt.pop %v2042
  %v2044 = vmul.f32 %v2041, %v2043
  %v2045 = vlaneseq
  %v2046 = vshrl.u32 %v2045, 7
  %v2047 = vsub.s32 1, %v2046
  %v2048 = vrot.slane %v1951, %v2047
  %v2049 = vmul.f32 %v2044, %v2048
  %v2050 = vlaneseq
  %v2051 = vshrl.u32 %v2050, 7
  %v2052 = vsub.s32 2, %v2051
  %v2053 = vrot.slane %v1951, %v2052
  %v2054 = vadd.f32 %v2049, %v2053
  %v2055 = vlaneseq
  %v2056 = vshrl.u32 %v2055, 7
  %v2057 = vsub.s32 3, %v2056
  %v2058 = vrot.slane %v1951, %v2057
  %v2060 = vsel %vm135, %v2054, 0
  %2062 = vmatprep.subr.mxu0 0.0
  %2063 = vmatpush1.msra.mxu0 0.0
  %2064 = vmatprep.subr.mxu0 0.0
  %2065 = vmatpush1.msra.mxu0 0.0
  %2066 = vmatprep.subr.mxu0 0.0
  %2067 = vmatpush1.msra.mxu0 0.0
  %2068 = vmatprep.subr.mxu0 0.0
  %2069 = vmatpush1.msra.mxu0 0.0
  %2070 = vmatprep.subr.mxu0 0.0
  %2071 = vmatpush1.msra.mxu0 0.0
  %2072 = vmatprep.subr.mxu0 0.0
  %2073 = vmatpush1.msra.mxu0 0.0
  %2074 = vmatprep.subr.mxu0 0.0
  %2075 = vmatpush1.msra.mxu0 0.0
  %2076 = vmatprep.subr.mxu0 0.0
  %2077 = vmatpush1.msra.mxu0 0.0
  %2078 = vmatprep.subr.mxu0 0.0
  %2079 = vmatpush1.msra.mxu0 0.0
  %2080 = vmatprep.subr.mxu0 0.0
  %2081 = vmatpush1.msra.mxu0 0.0
  %2082 = vmatprep.subr.mxu0 0.0
  %2083 = vmatpush1.msra.mxu0 0.0
  %2084 = vmatprep.subr.mxu0 0.0
  %2085 = vmatpush1.msra.mxu0 0.0
  %2086 = vmatprep.subr.mxu0 0.0
  %2087 = vmatpush1.msra.mxu0 %v1942
  %2088 = vmatprep.subr.mxu0 0.0
  %2089 = vmatpush1.msra.mxu0 %v1941
  %2090 = vmatprep.subr.mxu0 0.0
  %2091 = vmatpush1.msra.mxu0 %v1940
  %2092 = vmatprep.subr.mxu0 0.0
  %2093 = vmatpush1.msra.mxu0 %v1939
  %2094 = vmatprep.subr.mxu0 0.0
  %2095 = vmatpush2.msra.mxu0 0.0
  %2096 = vmatprep.subr.mxu0 0.0
  %2097 = vmatpush2.msra.mxu0 0.0
  %2098 = vmatprep.subr.mxu0 0.0
  %2099 = vmatpush2.msra.mxu0 0.0
  %2100 = vmatprep.subr.mxu0 0.0
  %2101 = vmatpush2.msra.mxu0 0.0
  %2102 = vmatprep.subr.mxu0 0.0
  %2103 = vmatpush2.msra.mxu0 0.0
  %2104 = vmatprep.subr.mxu0 0.0
  %2105 = vmatpush2.msra.mxu0 0.0
  %2106 = vmatprep.subr.mxu0 0.0
  %2107 = vmatpush2.msra.mxu0 0.0
  %2108 = vmatprep.subr.mxu0 0.0
  %2109 = vmatpush2.msra.mxu0 0.0
  %2110 = vmatprep.subr.mxu0 0.0
  %2111 = vmatpush2.msra.mxu0 0.0
  %2112 = vmatprep.subr.mxu0 0.0
  %2113 = vmatpush2.msra.mxu0 0.0
  %2114 = vmatprep.subr.mxu0 0.0
  %2115 = vmatpush2.msra.mxu0 0.0
  %2116 = vmatprep.subr.mxu0 0.0
  %2117 = vmatpush2.msra.mxu0 0.0
  %2118 = vmatprep.subr.mxu0 0.0
  %2119 = vmatpush2.msra.mxu0 0.0
  %2120 = vmatprep.subr.mxu0 0.0
  %2121 = vmatpush2.msra.mxu0 0.0
  %2122 = vmatprep.subr.mxu0 0.0
  %2123 = vmatpush2.msra.mxu0 0.0
  %2124 = vmatprep.subr.mxu0 0.0
  %2125 = vmatpush2.msra.mxu0 0.0
  %2126 = vmatprep.mubr.f32.mxu0 0.0
  %2127 = vmatmul.mubr.f32.gmra.mxu0 %v2060
  %v2128 = vpop.f32.mrf.mxu0
  %v2129 = vadd.f32 %v2058, %v2128
  %v2130 = vpop.f32.mrf.mxu0
  %2131 = vdwg.mxu0
  %v2132 = vmul.f32 %v2129, %v2129
  %v2133 = vmul.f32 %v2129, %v2132
  %v2134 = vmul.f32 %v2133, 0.044715
  %v2135 = vadd.f32 %v2129, %v2134
  %v2136 = vmul.f32 %v2135, 0.7978846
  %v2137 = vtanh.pop %v2136
  %v2138 = vadd.f32 %v2137, 1.0
  %v2139 = vmul.f32 %v2138, 0.5
  %v2140 = vmul.f32 %v2129, %v2139
  %v2141 = vlaneseq
  %v2142 = vshrl.u32 %v2141, 7
  %v2143 = vsub.s32 4, %v2142
  %v2144 = vrot.slane %v1951, %v2143
  %v2146 = vsel %vm329, %v2140, 0
  %2148 = vmatprep.subr.mxu0 0.0
  %2149 = vmatpush1.msra.mxu0 0.0
  %2150 = vmatprep.subr.mxu0 0.0
  %2151 = vmatpush1.msra.mxu0 0.0
  %2152 = vmatprep.subr.mxu0 0.0
  %2153 = vmatpush1.msra.mxu0 0.0
  %2154 = vmatprep.subr.mxu0 0.0
  %2155 = vmatpush1.msra.mxu0 0.0
  %2156 = vmatprep.subr.mxu0 0.0
  %2157 = vmatpush1.msra.mxu0 0.0
  %2158 = vmatprep.subr.mxu0 0.0
  %2159 = vmatpush1.msra.mxu0 0.0
  %2160 = vmatprep.subr.mxu0 0.0
  %2161 = vmatpush1.msra.mxu0 0.0
  %2162 = vmatprep.subr.mxu0 0.0
  %2163 = vmatpush1.msra.mxu0 0.0
  %2164 = vmatprep.subr.mxu0 0.0
  %2165 = vmatpush1.msra.mxu0 %v1950
  %2166 = vmatprep.subr.mxu0 0.0
  %2167 = vmatpush1.msra.mxu0 %v1949
  %2168 = vmatprep.subr.mxu0 0.0
  %2169 = vmatpush1.msra.mxu0 %v1948
  %2170 = vmatprep.subr.mxu0 0.0
  %2171 = vmatpush1.msra.mxu0 %v1947
  %2172 = vmatprep.subr.mxu0 0.0
  %2173 = vmatpush1.msra.mxu0 %v1946
  %2174 = vmatprep.subr.mxu0 0.0
  %2175 = vmatpush1.msra.mxu0 %v1945
  %2176 = vmatprep.subr.mxu0 0.0
  %2177 = vmatpush1.msra.mxu0 %v1944
  %2178 = vmatprep.subr.mxu0 0.0
  %2179 = vmatpush1.msra.mxu0 %v1943
  %2180 = vmatprep.subr.mxu0 0.0
  %2181 = vmatpush2.msra.mxu0 0.0
  %2182 = vmatprep.subr.mxu0 0.0
  %2183 = vmatpush2.msra.mxu0 0.0
  %2184 = vmatprep.subr.mxu0 0.0
  %2185 = vmatpush2.msra.mxu0 0.0
  %2186 = vmatprep.subr.mxu0 0.0
  %2187 = vmatpush2.msra.mxu0 0.0
  %2188 = vmatprep.subr.mxu0 0.0
  %2189 = vmatpush2.msra.mxu0 0.0
  %2190 = vmatprep.subr.mxu0 0.0
  %2191 = vmatpush2.msra.mxu0 0.0
  %2192 = vmatprep.subr.mxu0 0.0
  %2193 = vmatpush2.msra.mxu0 0.0
  %2194 = vmatprep.subr.mxu0 0.0
  %2195 = vmatpush2.msra.mxu0 0.0
  %2196 = vmatprep.subr.mxu0 0.0
  %2197 = vmatpush2.msra.mxu0 0.0
  %2198 = vmatprep.subr.mxu0 0.0
  %2199 = vmatpush2.msra.mxu0 0.0
  %2200 = vmatprep.subr.mxu0 0.0
  %2201 = vmatpush2.msra.mxu0 0.0
  %2202 = vmatprep.subr.mxu0 0.0
  %2203 = vmatpush2.msra.mxu0 0.0
  %2204 = vmatprep.subr.mxu0 0.0
  %2205 = vmatpush2.msra.mxu0 0.0
  %2206 = vmatprep.subr.mxu0 0.0
  %2207 = vmatpush2.msra.mxu0 0.0
  %2208 = vmatprep.subr.mxu0 0.0
  %2209 = vmatpush2.msra.mxu0 0.0
  %2210 = vmatprep.subr.mxu0 0.0
  %2211 = vmatpush2.msra.mxu0 0.0
  %2212 = vmatprep.mubr.f32.mxu0 0.0
  %2213 = vmatmul.mubr.f32.gmra.mxu0 %v2146
  %v2214 = vpop.f32.mrf.mxu0
  %v2215 = vadd.f32 %v2144, %v2214
  %v2216 = vpop.f32.mrf.mxu0
  %2217 = vdwg.mxu0
  %v2218 = vmax.f32 %v2215, -100.0
  %v2219 = vmin.f32 %v2218, 100.0
  %v2220 = vadd.f32 %v2054, %v2219
  %v2221 = vsel %vm135, %v2220, 0.0
  %2222 = vadd.xlane.f32.xlu0 %v2221
  %v2223 = vpop.xlane.xlu0 %2222
  %v2224 = vmul.f32 %v2223, %v215
  %v2225 = vmul.f32 %v2220, %v2220
  %v2226 = vsel %vm135, %v2225, 0.0
  %2227 = vadd.xlane.f32.xlu0 %v2226
  %v2228 = vpop.xlane.xlu0 %2227
  %v2229 = vmul.f32 %v2228, %v215
  %v2230 = vmul.f32 %v2224, %v2224
  %v2231 = vsub.f32 %v2229, %v2230
  %v2232 = vmax.f32 %v2231, 0.0
  %v2233 = vsub.f32 %v2220, %v2224
  %v2234 = vadd.f32 %v2232, 1e-05
  %v2235 = vrsqrt.pop %v2234
  %v2236 = vmul.f32 %v2233, %v2235
  %v2237 = vlaneseq
  %v2238 = vshrl.u32 %v2237, 7
  %v2239 = vsub.s32 5, %v2238
  %v2240 = vrot.slane %v1951, %v2239
  %v2241 = vmul.f32 %v2236, %v2240
  %v2242 = vlaneseq
  %v2243 = vshrl.u32 %v2242, 7
  %v2244 = vsub.s32 6, %v2243
  %v2245 = vrot.slane %v1951, %v2244
  %v2246 = vadd.f32 %v2241, %v2245
  %v2247 = vmax.f32 %v2246, -100.0
  %v2248 = vmin.f32 %v2247, 100.0
  %s2249 = scalar_lea.vmem %s1, 816
  %v2250 = vld [vmem:[%s2249] sm:$0xff]
  %v2251 = vld [vmem:[%s2249 + $0x8] sm:$0xff]
  %v2252 = vld [vmem:[%s2249 + $0x10] sm:$0xff]
  %v2253 = vld [vmem:[%s2249 + $0x18] sm:$0xff]
  %v2254 = vld [vmem:[%s2249 + $0x20] sm:$0xff]
  %v2255 = vld [vmem:[%s2249 + $0x28] sm:$0xff]
  %v2256 = vld [vmem:[%s2249 + $0x30] sm:$0xff]
  %v2257 = vld [vmem:[%s2249 + $0x38] sm:$0xff]
  %v2258 = vld [vmem:[%s2249 + $0x40] sm:$0xff]
  %v2259 = vld [vmem:[%s2249 + $0x48] sm:$0xff]
  %v2260 = vld [vmem:[%s2249 + $0x50] sm:$0xff]
  %v2261 = vld [vmem:[%s2249 + $0x58] sm:$0xff]
  %v2262 = vld [vmem:[%s2249 + $0x60] sm:$0xff]
  %v2263 = vld [vmem:[%s2249 + $0x68] sm:$0xff]
  %v2264 = vld [vmem:[%s2249 + $0x70] sm:$0xff]
  %v2265 = vld [vmem:[%s2249 + $0x78] sm:$0xff]
  %v2266 = vld [vmem:[%s2249 + $0x80] sm:$0xff]
  %v2267 = vmax.f32 %v2248, -100.0
  %v2268 = vmin.f32 %v2267, 100.0
  %v2269 = vlaneseq
  %v2270 = vshrl.u32 %v2269, 7
  %v2271 = vsub.s32 0, %v2270
  %v2272 = vrot.slane %v2266, %v2271
  %v2274 = vsel %vm135, %v2268, 0
  %2276 = vmatprep.subr.mxu0 0.0
  %2277 = vmatpush1.msra.mxu0 0.0
  %2278 = vmatprep.subr.mxu0 0.0
  %2279 = vmatpush1.msra.mxu0 0.0
  %2280 = vmatprep.subr.mxu0 0.0
  %2281 = vmatpush1.msra.mxu0 0.0
  %2282 = vmatprep.subr.mxu0 0.0
  %2283 = vmatpush1.msra.mxu0 0.0
  %2284 = vmatprep.subr.mxu0 0.0
  %2285 = vmatpush1.msra.mxu0 0.0
  %2286 = vmatprep.subr.mxu0 0.0
  %2287 = vmatpush1.msra.mxu0 0.0
  %2288 = vmatprep.subr.mxu0 0.0
  %2289 = vmatpush1.msra.mxu0 0.0
  %2290 = vmatprep.subr.mxu0 0.0
  %2291 = vmatpush1.msra.mxu0 0.0
  %2292 = vmatprep.subr.mxu0 0.0
  %2293 = vmatpush1.msra.mxu0 0.0
  %2294 = vmatprep.subr.mxu0 0.0
  %2295 = vmatpush1.msra.mxu0 0.0
  %2296 = vmatprep.subr.mxu0 0.0
  %2297 = vmatpush1.msra.mxu0 0.0
  %2298 = vmatprep.subr.mxu0 0.0
  %2299 = vmatpush1.msra.mxu0 0.0
  %2300 = vmatprep.subr.mxu0 0.0
  %2301 = vmatpush1.msra.mxu0 %v2253
  %2302 = vmatprep.subr.mxu0 0.0
  %2303 = vmatpush1.msra.mxu0 %v2252
  %2304 = vmatprep.subr.mxu0 0.0
  %2305 = vmatpush1.msra.mxu0 %v2251
  %2306 = vmatprep.subr.mxu0 0.0
  %2307 = vmatpush1.msra.mxu0 %v2250
  %2308 = vmatprep.subr.mxu0 0.0
  %2309 = vmatpush2.msra.mxu0 0.0
  %2310 = vmatprep.subr.mxu0 0.0
  %2311 = vmatpush2.msra.mxu0 0.0
  %2312 = vmatprep.subr.mxu0 0.0
  %2313 = vmatpush2.msra.mxu0 0.0
  %2314 = vmatprep.subr.mxu0 0.0
  %2315 = vmatpush2.msra.mxu0 0.0
  %2316 = vmatprep.subr.mxu0 0.0
  %2317 = vmatpush2.msra.mxu0 0.0
  %2318 = vmatprep.subr.mxu0 0.0
  %2319 = vmatpush2.msra.mxu0 0.0
  %2320 = vmatprep.subr.mxu0 0.0
  %2321 = vmatpush2.msra.mxu0 0.0
  %2322 = vmatprep.subr.mxu0 0.0
  %2323 = vmatpush2.msra.mxu0 0.0
  %2324 = vmatprep.subr.mxu0 0.0
  %2325 = vmatpush2.msra.mxu0 0.0
  %2326 = vmatprep.subr.mxu0 0.0
  %2327 = vmatpush2.msra.mxu0 0.0
  %2328 = vmatprep.subr.mxu0 0.0
  %2329 = vmatpush2.msra.mxu0 0.0
  %2330 = vmatprep.subr.mxu0 0.0
  %2331 = vmatpush2.msra.mxu0 0.0
  %2332 = vmatprep.subr.mxu0 0.0
  %2333 = vmatpush2.msra.mxu0 0.0
  %2334 = vmatprep.subr.mxu0 0.0
  %2335 = vmatpush2.msra.mxu0 0.0
  %2336 = vmatprep.subr.mxu0 0.0
  %2337 = vmatpush2.msra.mxu0 0.0
  %2338 = vmatprep.subr.mxu0 0.0
  %2339 = vmatpush2.msra.mxu0 0.0
  %2340 = vmatprep.mubr.f32.mxu0 0.0
  %2341 = vmatmul.mubr.f32.gmra.mxu0 %v2274
  %v2342 = vpop.f32.mrf.mxu0
  %v2343 = vadd.f32 %v2272, %v2342
  %v2344 = vpop.f32.mrf.mxu0
  %2345 = vdwg.mxu0
  %v2346 = vmax.f32 %v2343, -100.0
  %v2347 = vmin.f32 %v2346, 100.0
  %v2348 = vadd.f32 %v2268, %v2347
  %v2349 = vsel %vm135, %v2348, 0.0
  %2350 = vadd.xlane.f32.xlu0 %v2349
  %v2351 = vpop.xlane.xlu0 %2350
  %v2352 = vmul.f32 %v2351, %v215
  %v2353 = vmul.f32 %v2348, %v2348
  %v2354 = vsel %vm135, %v2353, 0.0
  %2355 = vadd.xlane.f32.xlu0 %v2354
  %v2356 = vpop.xlane.xlu0 %2355
  %v2357 = vmul.f32 %v2356, %v215
  %v2358 = vmul.f32 %v2352, %v2352
  %v2359 = vsub.f32 %v2357, %v2358
  %v2360 = vmax.f32 %v2359, 0.0
  %v2361 = vsub.f32 %v2348, %v2352
  %v2362 = vadd.f32 %v2360, 1e-05
  %v2363 = vrsqrt.pop %v2362
  %v2364 = vmul.f32 %v2361, %v2363
  %v2365 = vlaneseq
  %v2366 = vshrl.u32 %v2365, 7
  %v2367 = vsub.s32 1, %v2366
  %v2368 = vrot.slane %v2266, %v2367
  %v2369 = vmul.f32 %v2364, %v2368
  %v2370 = vlaneseq
  %v2371 = vshrl.u32 %v2370, 7
  %v2372 = vsub.s32 2, %v2371
  %v2373 = vrot.slane %v2266, %v2372
  %v2374 = vadd.f32 %v2369, %v2373
  %v2375 = vlaneseq
  %v2376 = vshrl.u32 %v2375, 7
  %v2377 = vsub.s32 3, %v2376
  %v2378 = vrot.slane %v2266, %v2377
  %v2380 = vsel %vm135, %v2374, 0
  %2382 = vmatprep.subr.mxu0 0.0
  %2383 = vmatpush1.msra.mxu0 0.0
  %2384 = vmatprep.subr.mxu0 0.0
  %2385 = vmatpush1.msra.mxu0 0.0
  %2386 = vmatprep.subr.mxu0 0.0
  %2387 = vmatpush1.msra.mxu0 0.0
  %2388 = vmatprep.subr.mxu0 0.0
  %2389 = vmatpush1.msra.mxu0 0.0
  %2390 = vmatprep.subr.mxu0 0.0
  %2391 = vmatpush1.msra.mxu0 0.0
  %2392 = vmatprep.subr.mxu0 0.0
  %2393 = vmatpush1.msra.mxu0 0.0
  %2394 = vmatprep.subr.mxu0 0.0
  %2395 = vmatpush1.msra.mxu0 0.0
  %2396 = vmatprep.subr.mxu0 0.0
  %2397 = vmatpush1.msra.mxu0 0.0
  %2398 = vmatprep.subr.mxu0 0.0
  %2399 = vmatpush1.msra.mxu0 0.0
  %2400 = vmatprep.subr.mxu0 0.0
  %2401 = vmatpush1.msra.mxu0 0.0
  %2402 = vmatprep.subr.mxu0 0.0
  %2403 = vmatpush1.msra.mxu0 0.0
  %2404 = vmatprep.subr.mxu0 0.0
  %2405 = vmatpush1.msra.mxu0 0.0
  %2406 = vmatprep.subr.mxu0 0.0
  %2407 = vmatpush1.msra.mxu0 %v2257
  %2408 = vmatprep.subr.mxu0 0.0
  %2409 = vmatpush1.msra.mxu0 %v2256
  %2410 = vmatprep.subr.mxu0 0.0
  %2411 = vmatpush1.msra.mxu0 %v2255
  %2412 = vmatprep.subr.mxu0 0.0
  %2413 = vmatpush1.msra.mxu0 %v2254
  %2414 = vmatprep.subr.mxu0 0.0
  %2415 = vmatpush2.msra.mxu0 0.0
  %2416 = vmatprep.subr.mxu0 0.0
  %2417 = vmatpush2.msra.mxu0 0.0
  %2418 = vmatprep.subr.mxu0 0.0
  %2419 = vmatpush2.msra.mxu0 0.0
  %2420 = vmatprep.subr.mxu0 0.0
  %2421 = vmatpush2.msra.mxu0 0.0
  %2422 = vmatprep.subr.mxu0 0.0
  %2423 = vmatpush2.msra.mxu0 0.0
  %2424 = vmatprep.subr.mxu0 0.0
  %2425 = vmatpush2.msra.mxu0 0.0
  %2426 = vmatprep.subr.mxu0 0.0
  %2427 = vmatpush2.msra.mxu0 0.0
  %2428 = vmatprep.subr.mxu0 0.0
  %2429 = vmatpush2.msra.mxu0 0.0
  %2430 = vmatprep.subr.mxu0 0.0
  %2431 = vmatpush2.msra.mxu0 0.0
  %2432 = vmatprep.subr.mxu0 0.0
  %2433 = vmatpush2.msra.mxu0 0.0
  %2434 = vmatprep.subr.mxu0 0.0
  %2435 = vmatpush2.msra.mxu0 0.0
  %2436 = vmatprep.subr.mxu0 0.0
  %2437 = vmatpush2.msra.mxu0 0.0
  %2438 = vmatprep.subr.mxu0 0.0
  %2439 = vmatpush2.msra.mxu0 0.0
  %2440 = vmatprep.subr.mxu0 0.0
  %2441 = vmatpush2.msra.mxu0 0.0
  %2442 = vmatprep.subr.mxu0 0.0
  %2443 = vmatpush2.msra.mxu0 0.0
  %2444 = vmatprep.subr.mxu0 0.0
  %2445 = vmatpush2.msra.mxu0 0.0
  %2446 = vmatprep.mubr.f32.mxu0 0.0
  %2447 = vmatmul.mubr.f32.gmra.mxu0 %v2380
  %v2448 = vpop.f32.mrf.mxu0
  %v2449 = vadd.f32 %v2378, %v2448
  %v2450 = vpop.f32.mrf.mxu0
  %2451 = vdwg.mxu0
  %v2452 = vmul.f32 %v2449, %v2449
  %v2453 = vmul.f32 %v2449, %v2452
  %v2454 = vmul.f32 %v2453, 0.044715
  %v2455 = vadd.f32 %v2449, %v2454
  %v2456 = vmul.f32 %v2455, 0.7978846
  %v2457 = vtanh.pop %v2456
  %v2458 = vadd.f32 %v2457, 1.0
  %v2459 = vmul.f32 %v2458, 0.5
  %v2460 = vmul.f32 %v2449, %v2459
  %v2461 = vlaneseq
  %v2462 = vshrl.u32 %v2461, 7
  %v2463 = vsub.s32 4, %v2462
  %v2464 = vrot.slane %v2266, %v2463
  %v2466 = vsel %vm329, %v2460, 0
  %2468 = vmatprep.subr.mxu0 0.0
  %2469 = vmatpush1.msra.mxu0 0.0
  %2470 = vmatprep.subr.mxu0 0.0
  %2471 = vmatpush1.msra.mxu0 0.0
  %2472 = vmatprep.subr.mxu0 0.0
  %2473 = vmatpush1.msra.mxu0 0.0
  %2474 = vmatprep.subr.mxu0 0.0
  %2475 = vmatpush1.msra.mxu0 0.0
  %2476 = vmatprep.subr.mxu0 0.0
  %2477 = vmatpush1.msra.mxu0 0.0
  %2478 = vmatprep.subr.mxu0 0.0
  %2479 = vmatpush1.msra.mxu0 0.0
  %2480 = vmatprep.subr.mxu0 0.0
  %2481 = vmatpush1.msra.mxu0 0.0
  %2482 = vmatprep.subr.mxu0 0.0
  %2483 = vmatpush1.msra.mxu0 0.0
  %2484 = vmatprep.subr.mxu0 0.0
  %2485 = vmatpush1.msra.mxu0 %v2265
  %2486 = vmatprep.subr.mxu0 0.0
  %2487 = vmatpush1.msra.mxu0 %v2264
  %2488 = vmatprep.subr.mxu0 0.0
  %2489 = vmatpush1.msra.mxu0 %v2263
  %2490 = vmatprep.subr.mxu0 0.0
  %2491 = vmatpush1.msra.mxu0 %v2262
  %2492 = vmatprep.subr.mxu0 0.0
  %2493 = vmatpush1.msra.mxu0 %v2261
  %2494 = vmatprep.subr.mxu0 0.0
  %2495 = vmatpush1.msra.mxu0 %v2260
  %2496 = vmatprep.subr.mxu0 0.0
  %2497 = vmatpush1.msra.mxu0 %v2259
  %2498 = vmatprep.subr.mxu0 0.0
  %2499 = vmatpush1.msra.mxu0 %v2258
  %2500 = vmatprep.subr.mxu0 0.0
  %2501 = vmatpush2.msra.mxu0 0.0
  %2502 = vmatprep.subr.mxu0 0.0
  %2503 = vmatpush2.msra.mxu0 0.0
  %2504 = vmatprep.subr.mxu0 0.0
  %2505 = vmatpush2.msra.mxu0 0.0
  %2506 = vmatprep.subr.mxu0 0.0
  %2507 = vmatpush2.msra.mxu0 0.0
  %2508 = vmatprep.subr.mxu0 0.0
  %2509 = vmatpush2.msra.mxu0 0.0
  %2510 = vmatprep.subr.mxu0 0.0
  %2511 = vmatpush2.msra.mxu0 0.0
  %2512 = vmatprep.subr.mxu0 0.0
  %2513 = vmatpush2.msra.mxu0 0.0
  %2514 = vmatprep.subr.mxu0 0.0
  %2515 = vmatpush2.msra.mxu0 0.0
  %2516 = vmatprep.subr.mxu0 0.0
  %2517 = vmatpush2.msra.mxu0 0.0
  %2518 = vmatprep.subr.mxu0 0.0
  %2519 = vmatpush2.msra.mxu0 0.0
  %2520 = vmatprep.subr.mxu0 0.0
  %2521 = vmatpush2.msra.mxu0 0.0
  %2522 = vmatprep.subr.mxu0 0.0
  %2523 = vmatpush2.msra.mxu0 0.0
  %2524 = vmatprep.subr.mxu0 0.0
  %2525 = vmatpush2.msra.mxu0 0.0
  %2526 = vmatprep.subr.mxu0 0.0
  %2527 = vmatpush2.msra.mxu0 0.0
  %2528 = vmatprep.subr.mxu0 0.0
  %2529 = vmatpush2.msra.mxu0 0.0
  %2530 = vmatprep.subr.mxu0 0.0
  %2531 = vmatpush2.msra.mxu0 0.0
  %2532 = vmatprep.mubr.f32.mxu0 0.0
  %2533 = vmatmul.mubr.f32.gmra.mxu0 %v2466
  %v2534 = vpop.f32.mrf.mxu0
  %v2535 = vadd.f32 %v2464, %v2534
  %v2536 = vpop.f32.mrf.mxu0
  %2537 = vdwg.mxu0
  %v2538 = vmax.f32 %v2535, -100.0
  %v2539 = vmin.f32 %v2538, 100.0
  %v2540 = vadd.f32 %v2374, %v2539
  %v2541 = vsel %vm135, %v2540, 0.0
  %2542 = vadd.xlane.f32.xlu0 %v2541
  %v2543 = vpop.xlane.xlu0 %2542
  %v2544 = vmul.f32 %v2543, %v215
  %v2545 = vmul.f32 %v2540, %v2540
  %v2546 = vsel %vm135, %v2545, 0.0
  %2547 = vadd.xlane.f32.xlu0 %v2546
  %v2548 = vpop.xlane.xlu0 %2547
  %v2549 = vmul.f32 %v2548, %v215
  %v2550 = vmul.f32 %v2544, %v2544
  %v2551 = vsub.f32 %v2549, %v2550
  %v2552 = vmax.f32 %v2551, 0.0
  %v2553 = vsub.f32 %v2540, %v2544
  %v2554 = vadd.f32 %v2552, 1e-05
  %v2555 = vrsqrt.pop %v2554
  %v2556 = vmul.f32 %v2553, %v2555
  %v2557 = vlaneseq
  %v2558 = vshrl.u32 %v2557, 7
  %v2559 = vsub.s32 5, %v2558
  %v2560 = vrot.slane %v2266, %v2559
  %v2561 = vmul.f32 %v2556, %v2560
  %v2562 = vlaneseq
  %v2563 = vshrl.u32 %v2562, 7
  %v2564 = vsub.s32 6, %v2563
  %v2565 = vrot.slane %v2266, %v2564
  %v2566 = vadd.f32 %v2561, %v2565
  %v2567 = vmax.f32 %v2566, -100.0
  %v2568 = vmin.f32 %v2567, 100.0
  %s2569 = scalar_lea.vmem %s1, 952
  %v2570 = vld [vmem:[%s2569] sm:$0xff]
  %v2571 = vld [vmem:[%s2569 + $0x8] sm:$0xff]
  %v2572 = vld [vmem:[%s2569 + $0x10] sm:$0xff]
  %v2573 = vld [vmem:[%s2569 + $0x18] sm:$0xff]
  %v2574 = vld [vmem:[%s2569 + $0x20] sm:$0xff]
  %v2575 = vld [vmem:[%s2569 + $0x28] sm:$0xff]
  %v2576 = vld [vmem:[%s2569 + $0x30] sm:$0xff]
  %v2577 = vld [vmem:[%s2569 + $0x38] sm:$0xff]
  %v2578 = vld [vmem:[%s2569 + $0x40] sm:$0xff]
  %v2579 = vld [vmem:[%s2569 + $0x48] sm:$0xff]
  %v2580 = vld [vmem:[%s2569 + $0x50] sm:$0xff]
  %v2581 = vld [vmem:[%s2569 + $0x58] sm:$0xff]
  %v2582 = vld [vmem:[%s2569 + $0x60] sm:$0xff]
  %v2583 = vld [vmem:[%s2569 + $0x68] sm:$0xff]
  %v2584 = vld [vmem:[%s2569 + $0x70] sm:$0xff]
  %v2585 = vld [vmem:[%s2569 + $0x78] sm:$0xff]
  %v2586 = vld [vmem:[%s2569 + $0x80] sm:$0xff]
  %v2587 = vlaneseq
  %v2588 = vshrl.u32 %v2587, 7
  %v2589 = vsub.s32 0, %v2588
  %v2590 = vrot.slane %v2586, %v2589
  %2591 = vmatprep.subr.mxu0 0.0
  %2592 = vmatpush1.msra.mxu0 0.0
  %2593 = vmatprep.subr.mxu0 0.0
  %2594 = vmatpush1.msra.mxu0 0.0
  %2595 = vmatprep.subr.mxu0 0.0
  %2596 = vmatpush1.msra.mxu0 0.0
  %2597 = vmatprep.subr.mxu0 0.0
  %2598 = vmatpush1.msra.mxu0 0.0
  %2599 = vmatprep.subr.mxu0 0.0
  %2600 = vmatpush1.msra.mxu0 0.0
  %2601 = vmatprep.subr.mxu0 0.0
  %2602 = vmatpush1.msra.mxu0 0.0
  %2603 = vmatprep.subr.mxu0 0.0
  %2604 = vmatpush1.msra.mxu0 0.0
  %2605 = vmatprep.subr.mxu0 0.0
  %2606 = vmatpush1.msra.mxu0 0.0
  %2607 = vmatprep.subr.mxu0 0.0
  %2608 = vmatpush1.msra.mxu0 0.0
  %2609 = vmatprep.subr.mxu0 0.0
  %2610 = vmatpush1.msra.mxu0 0.0
  %2611 = vmatprep.subr.mxu0 0.0
  %2612 = vmatpush1.msra.mxu0 0.0
  %2613 = vmatprep.subr.mxu0 0.0
  %2614 = vmatpush1.msra.mxu0 0.0
  %2615 = vmatprep.subr.mxu0 0.0
  %2616 = vmatpush1.msra.mxu0 %v2573
  %2617 = vmatprep.subr.mxu0 0.0
  %2618 = vmatpush1.msra.mxu0 %v2572
  %2619 = vmatprep.subr.mxu0 0.0
  %2620 = vmatpush1.msra.mxu0 %v2571
  %2621 = vmatprep.subr.mxu0 0.0
  %2622 = vmatpush1.msra.mxu0 %v2570
  %2623 = vmatprep.subr.mxu0 0.0
  %2624 = vmatpush2.msra.mxu0 0.0
  %2625 = vmatprep.subr.mxu0 0.0
  %2626 = vmatpush2.msra.mxu0 0.0
  %2627 = vmatprep.subr.mxu0 0.0
  %2628 = vmatpush2.msra.mxu0 0.0
  %2629 = vmatprep.subr.mxu0 0.0
  %2630 = vmatpush2.msra.mxu0 0.0
  %2631 = vmatprep.subr.mxu0 0.0
  %2632 = vmatpush2.msra.mxu0 0.0
  %2633 = vmatprep.subr.mxu0 0.0
  %2634 = vmatpush2.msra.mxu0 0.0
  %2635 = vmatprep.subr.mxu0 0.0
  %2636 = vmatpush2.msra.mxu0 0.0
  %2637 = vmatprep.subr.mxu0 0.0
  %2638 = vmatpush2.msra.mxu0 0.0
  %2639 = vmatprep.subr.mxu0 0.0
  %2640 = vmatpush2.msra.mxu0 0.0
  %2641 = vmatprep.subr.mxu0 0.0
  %2642 = vmatpush2.msra.mxu0 0.0
  %2643 = vmatprep.subr.mxu0 0.0
  %2644 = vmatpush2.msra.mxu0 0.0
  %2645 = vmatprep.subr.mxu0 0.0
  %2646 = vmatpush2.msra.mxu0 0.0
  %2647 = vmatprep.subr.mxu0 0.0
  %2648 = vmatpush2.msra.mxu0 0.0
  %2649 = vmatprep.subr.mxu0 0.0
  %2650 = vmatpush2.msra.mxu0 0.0
  %2651 = vmatprep.subr.mxu0 0.0
  %2652 = vmatpush2.msra.mxu0 0.0
  %2653 = vmatprep.subr.mxu0 0.0
  %2654 = vmatpush2.msra.mxu0 0.0
  %2655 = vmatprep.mubr.f32.mxu0 0.0
  %2656 = vmatmul.mubr.f32.gmra.mxu0 %v779
  %v2657 = vpop.f32.mrf.mxu0
  %v2658 = vadd.f32 %v2590, %v2657
  %v2659 = vpop.f32.mrf.mxu0
  %2660 = vdwg.mxu0
  %v2661 = vmax.f32 %v2658, -100.0
  %v2662 = vmin.f32 %v2661, 100.0
  %v2663 = vadd.f32 %v773, %v2662
  %v2664 = vsel %vm135, %v2663, 0.0
  %2665 = vadd.xlane.f32.xlu0 %v2664
  %v2666 = vpop.xlane.xlu0 %2665
  %v2667 = vmul.f32 %v2666, %v215
  %v2668 = vmul.f32 %v2663, %v2663
  %v2669 = vsel %vm135, %v2668, 0.0
  %2670 = vadd.xlane.f32.xlu0 %v2669
  %v2671 = vpop.xlane.xlu0 %2670
  %v2672 = vmul.f32 %v2671, %v215
  %v2673 = vmul.f32 %v2667, %v2667
  %v2674 = vsub.f32 %v2672, %v2673
  %v2675 = vmax.f32 %v2674, 0.0
  %v2676 = vsub.f32 %v2663, %v2667
  %v2677 = vadd.f32 %v2675, 1e-05
  %v2678 = vrsqrt.pop %v2677
  %v2679 = vmul.f32 %v2676, %v2678
  %v2680 = vlaneseq
  %v2681 = vshrl.u32 %v2680, 7
  %v2682 = vsub.s32 1, %v2681
  %v2683 = vrot.slane %v2586, %v2682
  %v2684 = vmul.f32 %v2679, %v2683
  %v2685 = vlaneseq
  %v2686 = vshrl.u32 %v2685, 7
  %v2687 = vsub.s32 2, %v2686
  %v2688 = vrot.slane %v2586, %v2687
  %v2689 = vadd.f32 %v2684, %v2688
  %v2690 = vlaneseq
  %v2691 = vshrl.u32 %v2690, 7
  %v2692 = vsub.s32 3, %v2691
  %v2693 = vrot.slane %v2586, %v2692
  %v2695 = vsel %vm135, %v2689, 0
  %2697 = vmatprep.subr.mxu0 0.0
  %2698 = vmatpush1.msra.mxu0 0.0
  %2699 = vmatprep.subr.mxu0 0.0
  %2700 = vmatpush1.msra.mxu0 0.0
  %2701 = vmatprep.subr.mxu0 0.0
  %2702 = vmatpush1.msra.mxu0 0.0
  %2703 = vmatprep.subr.mxu0 0.0
  %2704 = vmatpush1.msra.mxu0 0.0
  %2705 = vmatprep.subr.mxu0 0.0
  %2706 = vmatpush1.msra.mxu0 0.0
  %2707 = vmatprep.subr.mxu0 0.0
  %2708 = vmatpush1.msra.mxu0 0.0
  %2709 = vmatprep.subr.mxu0 0.0
  %2710 = vmatpush1.msra.mxu0 0.0
  %2711 = vmatprep.subr.mxu0 0.0
  %2712 = vmatpush1.msra.mxu0 0.0
  %2713 = vmatprep.subr.mxu0 0.0
  %2714 = vmatpush1.msra.mxu0 0.0
  %2715 = vmatprep.subr.mxu0 0.0
  %2716 = vmatpush1.msra.mxu0 0.0
  %2717 = vmatprep.subr.mxu0 0.0
  %2718 = vmatpush1.msra.mxu0 0.0
  %2719 = vmatprep.subr.mxu0 0.0
  %2720 = vmatpush1.msra.mxu0 0.0
  %2721 = vmatprep.subr.mxu0 0.0
  %2722 = vmatpush1.msra.mxu0 %v2577
  %2723 = vmatprep.subr.mxu0 0.0
  %2724 = vmatpush1.msra.mxu0 %v2576
  %2725 = vmatprep.subr.mxu0 0.0
  %2726 = vmatpush1.msra.mxu0 %v2575
  %2727 = vmatprep.subr.mxu0 0.0
  %2728 = vmatpush1.msra.mxu0 %v2574
  %2729 = vmatprep.subr.mxu0 0.0
  %2730 = vmatpush2.msra.mxu0 0.0
  %2731 = vmatprep.subr.mxu0 0.0
  %2732 = vmatpush2.msra.mxu0 0.0
  %2733 = vmatprep.subr.mxu0 0.0
  %2734 = vmatpush2.msra.mxu0 0.0
  %2735 = vmatprep.subr.mxu0 0.0
  %2736 = vmatpush2.msra.mxu0 0.0
  %2737 = vmatprep.subr.mxu0 0.0
  %2738 = vmatpush2.msra.mxu0 0.0
  %2739 = vmatprep.subr.mxu0 0.0
  %2740 = vmatpush2.msra.mxu0 0.0
  %2741 = vmatprep.subr.mxu0 0.0
  %2742 = vmatpush2.msra.mxu0 0.0
  %2743 = vmatprep.subr.mxu0 0.0
  %2744 = vmatpush2.msra.mxu0 0.0
  %2745 = vmatprep.subr.mxu0 0.0
  %2746 = vmatpush2.msra.mxu0 0.0
  %2747 = vmatprep.subr.mxu0 0.0
  %2748 = vmatpush2.msra.mxu0 0.0
  %2749 = vmatprep.subr.mxu0 0.0
  %2750 = vmatpush2.msra.mxu0 0.0
  %2751 = vmatprep.subr.mxu0 0.0
  %2752 = vmatpush2.msra.mxu0 0.0
  %2753 = vmatprep.subr.mxu0 0.0
  %2754 = vmatpush2.msra.mxu0 0.0
  %2755 = vmatprep.subr.mxu0 0.0
  %2756 = vmatpush2.msra.mxu0 0.0
  %2757 = vmatprep.subr.mxu0 0.0
  %2758 = vmatpush2.msra.mxu0 0.0
  %2759 = vmatprep.subr.mxu0 0.0
  %2760 = vmatpush2.msra.mxu0 0.0
  %2761 = vmatprep.mubr.f32.mxu0 0.0
  %2762 = vmatmul.mubr.f32.gmra.mxu0 %v2695
  %v2763 = vpop.f32.mrf.mxu0
  %v2764 = vadd.f32 %v2693, %v2763
  %v2765 = vpop.f32.mrf.mxu0
  %2766 = vdwg.mxu0
  %v2767 = vmul.f32 %v2764, %v2764
  %v2768 = vmul.f32 %v2764, %v2767
  %v2769 = vmul.f32 %v2768, 0.044715
  %v2770 = vadd.f32 %v2764, %v2769
  %v2771 = vmul.f32 %v2770, 0.7978846
  %v2772 = vtanh.pop %v2771
  %v2773 = vadd.f32 %v2772, 1.0
  %v2774 = vmul.f32 %v2773, 0.5
  %v2775 = vmul.f32 %v2764, %v2774
  %v2776 = vlaneseq
  %v2777 = vshrl.u32 %v2776, 7
  %v2778 = vsub.s32 4, %v2777
  %v2779 = vrot.slane %v2586, %v2778
  %v2781 = vsel %vm329, %v2775, 0
  %2783 = vmatprep.subr.mxu0 0.0
  %2784 = vmatpush1.msra.mxu0 0.0
  %2785 = vmatprep.subr.mxu0 0.0
  %2786 = vmatpush1.msra.mxu0 0.0
  %2787 = vmatprep.subr.mxu0 0.0
  %2788 = vmatpush1.msra.mxu0 0.0
  %2789 = vmatprep.subr.mxu0 0.0
  %2790 = vmatpush1.msra.mxu0 0.0
  %2791 = vmatprep.subr.mxu0 0.0
  %2792 = vmatpush1.msra.mxu0 0.0
  %2793 = vmatprep.subr.mxu0 0.0
  %2794 = vmatpush1.msra.mxu0 0.0
  %2795 = vmatprep.subr.mxu0 0.0
  %2796 = vmatpush1.msra.mxu0 0.0
  %2797 = vmatprep.subr.mxu0 0.0
  %2798 = vmatpush1.msra.mxu0 0.0
  %2799 = vmatprep.subr.mxu0 0.0
  %2800 = vmatpush1.msra.mxu0 %v2585
  %2801 = vmatprep.subr.mxu0 0.0
  %2802 = vmatpush1.msra.mxu0 %v2584
  %2803 = vmatprep.subr.mxu0 0.0
  %2804 = vmatpush1.msra.mxu0 %v2583
  %2805 = vmatprep.subr.mxu0 0.0
  %2806 = vmatpush1.msra.mxu0 %v2582
  %2807 = vmatprep.subr.mxu0 0.0
  %2808 = vmatpush1.msra.mxu0 %v2581
  %2809 = vmatprep.subr.mxu0 0.0
  %2810 = vmatpush1.msra.mxu0 %v2580
  %2811 = vmatprep.subr.mxu0 0.0
  %2812 = vmatpush1.msra.mxu0 %v2579
  %2813 = vmatprep.subr.mxu0 0.0
  %2814 = vmatpush1.msra.mxu0 %v2578
  %2815 = vmatprep.subr.mxu0 0.0
  %2816 = vmatpush2.msra.mxu0 0.0
  %2817 = vmatprep.subr.mxu0 0.0
  %2818 = vmatpush2.msra.mxu0 0.0
  %2819 = vmatprep.subr.mxu0 0.0
  %2820 = vmatpush2.msra.mxu0 0.0
  %2821 = vmatprep.subr.mxu0 0.0
  %2822 = vmatpush2.msra.mxu0 0.0
  %2823 = vmatprep.subr.mxu0 0.0
  %2824 = vmatpush2.msra.mxu0 0.0
  %2825 = vmatprep.subr.mxu0 0.0
  %2826 = vmatpush2.msra.mxu0 0.0
  %2827 = vmatprep.subr.mxu0 0.0
  %2828 = vmatpush2.msra.mxu0 0.0
  %2829 = vmatprep.subr.mxu0 0.0
  %2830 = vmatpush2.msra.mxu0 0.0
  %2831 = vmatprep.subr.mxu0 0.0
  %2832 = vmatpush2.msra.mxu0 0.0
  %2833 = vmatprep.subr.mxu0 0.0
  %2834 = vmatpush2.msra.mxu0 0.0
  %2835 = vmatprep.subr.mxu0 0.0
  %2836 = vmatpush2.msra.mxu0 0.0
  %2837 = vmatprep.subr.mxu0 0.0
  %2838 = vmatpush2.msra.mxu0 0.0
  %2839 = vmatprep.subr.mxu0 0.0
  %2840 = vmatpush2.msra.mxu0 0.0
  %2841 = vmatprep.subr.mxu0 0.0
  %2842 = vmatpush2.msra.mxu0 0.0
  %2843 = vmatprep.subr.mxu0 0.0
  %2844 = vmatpush2.msra.mxu0 0.0
  %2845 = vmatprep.subr.mxu0 0.0
  %2846 = vmatpush2.msra.mxu0 0.0
  %2847 = vmatprep.mubr.f32.mxu0 0.0
  %2848 = vmatmul.mubr.f32.gmra.mxu0 %v2781
  %v2849 = vpop.f32.mrf.mxu0
  %v2850 = vadd.f32 %v2779, %v2849
  %v2851 = vpop.f32.mrf.mxu0
  %2852 = vdwg.mxu0
  %v2853 = vmax.f32 %v2850, -100.0
  %v2854 = vmin.f32 %v2853, 100.0
  %v2855 = vadd.f32 %v2689, %v2854
  %v2856 = vsel %vm135, %v2855, 0.0
  %2857 = vadd.xlane.f32.xlu0 %v2856
  %v2858 = vpop.xlane.xlu0 %2857
  %v2859 = vmul.f32 %v2858, %v215
  %v2860 = vmul.f32 %v2855, %v2855
  %v2861 = vsel %vm135, %v2860, 0.0
  %2862 = vadd.xlane.f32.xlu0 %v2861
  %v2863 = vpop.xlane.xlu0 %2862
  %v2864 = vmul.f32 %v2863, %v215
  %v2865 = vmul.f32 %v2859, %v2859
  %v2866 = vsub.f32 %v2864, %v2865
  %v2867 = vmax.f32 %v2866, 0.0
  %v2868 = vsub.f32 %v2855, %v2859
  %v2869 = vadd.f32 %v2867, 1e-05
  %v2870 = vrsqrt.pop %v2869
  %v2871 = vmul.f32 %v2868, %v2870
  %v2872 = vlaneseq
  %v2873 = vshrl.u32 %v2872, 7
  %v2874 = vsub.s32 5, %v2873
  %v2875 = vrot.slane %v2586, %v2874
  %v2876 = vmul.f32 %v2871, %v2875
  %v2877 = vlaneseq
  %v2878 = vshrl.u32 %v2877, 7
  %v2879 = vsub.s32 6, %v2878
  %v2880 = vrot.slane %v2586, %v2879
  %v2881 = vadd.f32 %v2876, %v2880
  %v2882 = vmax.f32 %v2881, -100.0
  %v2883 = vmin.f32 %v2882, 100.0
  %s2884 = scalar_lea.vmem %s1, 1088
  %v2885 = vld [vmem:[%s2884] sm:$0xff]
  %v2886 = vld [vmem:[%s2884 + $0x8] sm:$0xff]
  %v2887 = vld [vmem:[%s2884 + $0x10] sm:$0xff]
  %v2888 = vld [vmem:[%s2884 + $0x18] sm:$0xff]
  %v2889 = vld [vmem:[%s2884 + $0x20] sm:$0xff]
  %v2890 = vld [vmem:[%s2884 + $0x28] sm:$0xff]
  %v2891 = vld [vmem:[%s2884 + $0x30] sm:$0xff]
  %v2892 = vld [vmem:[%s2884 + $0x38] sm:$0xff]
  %v2893 = vld [vmem:[%s2884 + $0x40] sm:$0xff]
  %v2894 = vld [vmem:[%s2884 + $0x48] sm:$0xff]
  %v2895 = vld [vmem:[%s2884 + $0x50] sm:$0xff]
  %v2896 = vld [vmem:[%s2884 + $0x58] sm:$0xff]
  %v2897 = vld [vmem:[%s2884 + $0x60] sm:$0xff]
  %v2898 = vld [vmem:[%s2884 + $0x68] sm:$0xff]
  %v2899 = vld [vmem:[%s2884 + $0x70] sm:$0xff]
  %v2900 = vld [vmem:[%s2884 + $0x78] sm:$0xff]
  %v2901 = vld [vmem:[%s2884 + $0x80] sm:$0xff]
  %v2902 = vmax.f32 %v2883, -100.0
  %v2903 = vmin.f32 %v2902, 100.0
  %v2904 = vlaneseq
  %v2905 = vshrl.u32 %v2904, 7
  %v2906 = vsub.s32 0, %v2905
  %v2907 = vrot.slane %v2901, %v2906
  %v2909 = vsel %vm135, %v2903, 0
  %2911 = vmatprep.subr.mxu0 0.0
  %2912 = vmatpush1.msra.mxu0 0.0
  %2913 = vmatprep.subr.mxu0 0.0
  %2914 = vmatpush1.msra.mxu0 0.0
  %2915 = vmatprep.subr.mxu0 0.0
  %2916 = vmatpush1.msra.mxu0 0.0
  %2917 = vmatprep.subr.mxu0 0.0
  %2918 = vmatpush1.msra.mxu0 0.0
  %2919 = vmatprep.subr.mxu0 0.0
  %2920 = vmatpush1.msra.mxu0 0.0
  %2921 = vmatprep.subr.mxu0 0.0
  %2922 = vmatpush1.msra.mxu0 0.0
  %2923 = vmatprep.subr.mxu0 0.0
  %2924 = vmatpush1.msra.mxu0 0.0
  %2925 = vmatprep.subr.mxu0 0.0
  %2926 = vmatpush1.msra.mxu0 0.0
  %2927 = vmatprep.subr.mxu0 0.0
  %2928 = vmatpush1.msra.mxu0 0.0
  %2929 = vmatprep.subr.mxu0 0.0
  %2930 = vmatpush1.msra.mxu0 0.0
  %2931 = vmatprep.subr.mxu0 0.0
  %2932 = vmatpush1.msra.mxu0 0.0
  %2933 = vmatprep.subr.mxu0 0.0
  %2934 = vmatpush1.msra.mxu0 0.0
  %2935 = vmatprep.subr.mxu0 0.0
  %2936 = vmatpush1.msra.mxu0 %v2888
  %2937 = vmatprep.subr.mxu0 0.0
  %2938 = vmatpush1.msra.mxu0 %v2887
  %2939 = vmatprep.subr.mxu0 0.0
  %2940 = vmatpush1.msra.mxu0 %v2886
  %2941 = vmatprep.subr.mxu0 0.0
  %2942 = vmatpush1.msra.mxu0 %v2885
  %2943 = vmatprep.subr.mxu0 0.0
  %2944 = vmatpush2.msra.mxu0 0.0
  %2945 = vmatprep.subr.mxu0 0.0
  %2946 = vmatpush2.msra.mxu0 0.0
  %2947 = vmatprep.subr.mxu0 0.0
  %2948 = vmatpush2.msra.mxu0 0.0
  %2949 = vmatprep.subr.mxu0 0.0
  %2950 = vmatpush2.msra.mxu0 0.0
  %2951 = vmatprep.subr.mxu0 0.0
  %2952 = vmatpush2.msra.mxu0 0.0
  %2953 = vmatprep.subr.mxu0 0.0
  %2954 = vmatpush2.msra.mxu0 0.0
  %2955 = vmatprep.subr.mxu0 0.0
  %2956 = vmatpush2.msra.mxu0 0.0
  %2957 = vmatprep.subr.mxu0 0.0
  %2958 = vmatpush2.msra.mxu0 0.0
  %2959 = vmatprep.subr.mxu0 0.0
  %2960 = vmatpush2.msra.mxu0 0.0
  %2961 = vmatprep.subr.mxu0 0.0
  %2962 = vmatpush2.msra.mxu0 0.0
  %2963 = vmatprep.subr.mxu0 0.0
  %2964 = vmatpush2.msra.mxu0 0.0
  %2965 = vmatprep.subr.mxu0 0.0
  %2966 = vmatpush2.msra.mxu0 0.0
  %2967 = vmatprep.subr.mxu0 0.0
  %2968 = vmatpush2.msra.mxu0 0.0
  %2969 = vmatprep.subr.mxu0 0.0
  %2970 = vmatpush2.msra.mxu0 0.0
  %2971 = vmatprep.subr.mxu0 0.0
  %2972 = vmatpush2.msra.mxu0 0.0
  %2973 = vmatprep.subr.mxu0 0.0
  %2974 = vmatpush2.msra.mxu0 0.0
  %2975 = vmatprep.mubr.f32.mxu0 0.0
  %2976 = vmatmul.mubr.f32.gmra.mxu0 %v2909
  %v2977 = vpop.f32.mrf.mxu0
  %v2978 = vadd.f32 %v2907, %v2977
  %v2979 = vpop.f32.mrf.mxu0
  %2980 = vdwg.mxu0
  %v2981 = vmax.f32 %v2978, -100.0
  %v2982 = vmin.f32 %v2981, 100.0
  %v2983 = vadd.f32 %v2903, %v2982
  %v2984 = vsel %vm135, %v2983, 0.0
  %2985 = vadd.xlane.f32.xlu0 %v2984
  %v2986 = vpop.xlane.xlu0 %2985
  %v2987 = vmul.f32 %v2986, %v215
  %v2988 = vmul.f32 %v2983, %v2983
  %v2989 = vsel %vm135, %v2988, 0.0
  %2990 = vadd.xlane.f32.xlu0 %v2989
  %v2991 = vpop.xlane.xlu0 %2990
  %v2992 = vmul.f32 %v2991, %v215
  %v2993 = vmul.f32 %v2987, %v2987
  %v2994 = vsub.f32 %v2992, %v2993
  %v2995 = vmax.f32 %v2994, 0.0
  %v2996 = vsub.f32 %v2983, %v2987
  %v2997 = vadd.f32 %v2995, 1e-05
  %v2998 = vrsqrt.pop %v2997
  %v2999 = vmul.f32 %v2996, %v2998
  %v3000 = vlaneseq
  %v3001 = vshrl.u32 %v3000, 7
  %v3002 = vsub.s32 1, %v3001
  %v3003 = vrot.slane %v2901, %v3002
  %v3004 = vmul.f32 %v2999, %v3003
  %v3005 = vlaneseq
  %v3006 = vshrl.u32 %v3005, 7
  %v3007 = vsub.s32 2, %v3006
  %v3008 = vrot.slane %v2901, %v3007
  %v3009 = vadd.f32 %v3004, %v3008
  %v3010 = vlaneseq
  %v3011 = vshrl.u32 %v3010, 7
  %v3012 = vsub.s32 3, %v3011
  %v3013 = vrot.slane %v2901, %v3012
  %v3015 = vsel %vm135, %v3009, 0
  %3017 = vmatprep.subr.mxu0 0.0
  %3018 = vmatpush1.msra.mxu0 0.0
  %3019 = vmatprep.subr.mxu0 0.0
  %3020 = vmatpush1.msra.mxu0 0.0
  %3021 = vmatprep.subr.mxu0 0.0
  %3022 = vmatpush1.msra.mxu0 0.0
  %3023 = vmatprep.subr.mxu0 0.0
  %3024 = vmatpush1.msra.mxu0 0.0
  %3025 = vmatprep.subr.mxu0 0.0
  %3026 = vmatpush1.msra.mxu0 0.0
  %3027 = vmatprep.subr.mxu0 0.0
  %3028 = vmatpush1.msra.mxu0 0.0
  %3029 = vmatprep.subr.mxu0 0.0
  %3030 = vmatpush1.msra.mxu0 0.0
  %3031 = vmatprep.subr.mxu0 0.0
  %3032 = vmatpush1.msra.mxu0 0.0
  %3033 = vmatprep.subr.mxu0 0.0
  %3034 = vmatpush1.msra.mxu0 0.0
  %3035 = vmatprep.subr.mxu0 0.0
  %3036 = vmatpush1.msra.mxu0 0.0
  %3037 = vmatprep.subr.mxu0 0.0
  %3038 = vmatpush1.msra.mxu0 0.0
  %3039 = vmatprep.subr.mxu0 0.0
  %3040 = vmatpush1.msra.mxu0 0.0
  %3041 = vmatprep.subr.mxu0 0.0
  %3042 = vmatpush1.msra.mxu0 %v2892
  %3043 = vmatprep.subr.mxu0 0.0
  %3044 = vmatpush1.msra.mxu0 %v2891
  %3045 = vmatprep.subr.mxu0 0.0
  %3046 = vmatpush1.msra.mxu0 %v2890
  %3047 = vmatprep.subr.mxu0 0.0
  %3048 = vmatpush1.msra.mxu0 %v2889
  %3049 = vmatprep.subr.mxu0 0.0
  %3050 = vmatpush2.msra.mxu0 0.0
  %3051 = vmatprep.subr.mxu0 0.0
  %3052 = vmatpush2.msra.mxu0 0.0
  %3053 = vmatprep.subr.mxu0 0.0
  %3054 = vmatpush2.msra.mxu0 0.0
  %3055 = vmatprep.subr.mxu0 0.0
  %3056 = vmatpush2.msra.mxu0 0.0
  %3057 = vmatprep.subr.mxu0 0.0
  %3058 = vmatpush2.msra.mxu0 0.0
  %3059 = vmatprep.subr.mxu0 0.0
  %3060 = vmatpush2.msra.mxu0 0.0
  %3061 = vmatprep.subr.mxu0 0.0
  %3062 = vmatpush2.msra.mxu0 0.0
  %3063 = vmatprep.subr.mxu0 0.0
  %3064 = vmatpush2.msra.mxu0 0.0
  %3065 = vmatprep.subr.mxu0 0.0
  %3066 = vmatpush2.msra.mxu0 0.0
  %3067 = vmatprep.subr.mxu0 0.0
  %3068 = vmatpush2.msra.mxu0 0.0
  %3069 = vmatprep.subr.mxu0 0.0
  %3070 = vmatpush2.msra.mxu0 0.0
  %3071 = vmatprep.subr.mxu0 0.0
  %3072 = vmatpush2.msra.mxu0 0.0
  %3073 = vmatprep.subr.mxu0 0.0
  %3074 = vmatpush2.msra.mxu0 0.0
  %3075 = vmatprep.subr.mxu0 0.0
  %3076 = vmatpush2.msra.mxu0 0.0
  %3077 = vmatprep.subr.mxu0 0.0
  %3078 = vmatpush2.msra.mxu0 0.0
  %3079 = vmatprep.subr.mxu0 0.0
  %3080 = vmatpush2.msra.mxu0 0.0
  %3081 = vmatprep.mubr.f32.mxu0 0.0
  %3082 = vmatmul.mubr.f32.gmra.mxu0 %v3015
  %v3083 = vpop.f32.mrf.mxu0
  %v3084 = vadd.f32 %v3013, %v3083
  %v3085 = vpop.f32.mrf.mxu0
  %3086 = vdwg.mxu0
  %v3087 = vmul.f32 %v3084, %v3084
  %v3088 = vmul.f32 %v3084, %v3087
  %v3089 = vmul.f32 %v3088, 0.044715
  %v3090 = vadd.f32 %v3084, %v3089
  %v3091 = vmul.f32 %v3090, 0.7978846
  %v3092 = vtanh.pop %v3091
  %v3093 = vadd.f32 %v3092, 1.0
  %v3094 = vmul.f32 %v3093, 0.5
  %v3095 = vmul.f32 %v3084, %v3094
  %v3096 = vlaneseq
  %v3097 = vshrl.u32 %v3096, 7
  %v3098 = vsub.s32 4, %v3097
  %v3099 = vrot.slane %v2901, %v3098
  %v3101 = vsel %vm329, %v3095, 0
  %3103 = vmatprep.subr.mxu0 0.0
  %3104 = vmatpush1.msra.mxu0 0.0
  %3105 = vmatprep.subr.mxu0 0.0
  %3106 = vmatpush1.msra.mxu0 0.0
  %3107 = vmatprep.subr.mxu0 0.0
  %3108 = vmatpush1.msra.mxu0 0.0
  %3109 = vmatprep.subr.mxu0 0.0
  %3110 = vmatpush1.msra.mxu0 0.0
  %3111 = vmatprep.subr.mxu0 0.0
  %3112 = vmatpush1.msra.mxu0 0.0
  %3113 = vmatprep.subr.mxu0 0.0
  %3114 = vmatpush1.msra.mxu0 0.0
  %3115 = vmatprep.subr.mxu0 0.0
  %3116 = vmatpush1.msra.mxu0 0.0
  %3117 = vmatprep.subr.mxu0 0.0
  %3118 = vmatpush1.msra.mxu0 0.0
  %3119 = vmatprep.subr.mxu0 0.0
  %3120 = vmatpush1.msra.mxu0 %v2900
  %3121 = vmatprep.subr.mxu0 0.0
  %3122 = vmatpush1.msra.mxu0 %v2899
  %3123 = vmatprep.subr.mxu0 0.0
  %3124 = vmatpush1.msra.mxu0 %v2898
  %3125 = vmatprep.subr.mxu0 0.0
  %3126 = vmatpush1.msra.mxu0 %v2897
  %3127 = vmatprep.subr.mxu0 0.0
  %3128 = vmatpush1.msra.mxu0 %v2896
  %3129 = vmatprep.subr.mxu0 0.0
  %3130 = vmatpush1.msra.mxu0 %v2895
  %3131 = vmatprep.subr.mxu0 0.0
  %3132 = vmatpush1.msra.mxu0 %v2894
  %3133 = vmatprep.subr.mxu0 0.0
  %3134 = vmatpush1.msra.mxu0 %v2893
  %3135 = vmatprep.subr.mxu0 0.0
  %3136 = vmatpush2.msra.mxu0 0.0
  %3137 = vmatprep.subr.mxu0 0.0
  %3138 = vmatpush2.msra.mxu0 0.0
  %3139 = vmatprep.subr.mxu0 0.0
  %3140 = vmatpush2.msra.mxu0 0.0
  %3141 = vmatprep.subr.mxu0 0.0
  %3142 = vmatpush2.msra.mxu0 0.0
  %3143 = vmatprep.subr.mxu0 0.0
  %3144 = vmatpush2.msra.mxu0 0.0
  %3145 = vmatprep.subr.mxu0 0.0
  %3146 = vmatpush2.msra.mxu0 0.0
  %3147 = vmatprep.subr.mxu0 0.0
  %3148 = vmatpush2.msra.mxu0 0.0
  %3149 = vmatprep.subr.mxu0 0.0
  %3150 = vmatpush2.msra.mxu0 0.0
  %3151 = vmatprep.subr.mxu0 0.0
  %3152 = vmatpush2.msra.mxu0 0.0
  %3153 = vmatprep.subr.mxu0 0.0
  %3154 = vmatpush2.msra.mxu0 0.0
  %3155 = vmatprep.subr.mxu0 0.0
  %3156 = vmatpush2.msra.mxu0 0.0
  %3157 = vmatprep.subr.mxu0 0.0
  %3158 = vmatpush2.msra.mxu0 0.0
  %3159 = vmatprep.subr.mxu0 0.0
  %3160 = vmatpush2.msra.mxu0 0.0
  %3161 = vmatprep.subr.mxu0 0.0
  %3162 = vmatpush2.msra.mxu0 0.0
  %3163 = vmatprep.subr.mxu0 0.0
  %3164 = vmatpush2.msra.mxu0 0.0
  %3165 = vmatprep.subr.mxu0 0.0
  %3166 = vmatpush2.msra.mxu0 0.0
  %3167 = vmatprep.mubr.f32.mxu0 0.0
  %3168 = vmatmul.mubr.f32.gmra.mxu0 %v3101
  %v3169 = vpop.f32.mrf.mxu0
  %v3170 = vadd.f32 %v3099, %v3169
  %v3171 = vpop.f32.mrf.mxu0
  %3172 = vdwg.mxu0
  %v3173 = vmax.f32 %v3170, -100.0
  %v3174 = vmin.f32 %v3173, 100.0
  %v3175 = vadd.f32 %v3009, %v3174
  %v3176 = vsel %vm135, %v3175, 0.0
  %3177 = vadd.xlane.f32.xlu0 %v3176
  %v3178 = vpop.xlane.xlu0 %3177
  %v3179 = vmul.f32 %v3178, %v215
  %v3180 = vmul.f32 %v3175, %v3175
  %v3181 = vsel %vm135, %v3180, 0.0
  %3182 = vadd.xlane.f32.xlu0 %v3181
  %v3183 = vpop.xlane.xlu0 %3182
  %v3184 = vmul.f32 %v3183, %v215
  %v3185 = vmul.f32 %v3179, %v3179
  %v3186 = vsub.f32 %v3184, %v3185
  %v3187 = vmax.f32 %v3186, 0.0
  %v3188 = vsub.f32 %v3175, %v3179
  %v3189 = vadd.f32 %v3187, 1e-05
  %v3190 = vrsqrt.pop %v3189
  %v3191 = vmul.f32 %v3188, %v3190
  %v3192 = vlaneseq
  %v3193 = vshrl.u32 %v3192, 7
  %v3194 = vsub.s32 5, %v3193
  %v3195 = vrot.slane %v2901, %v3194
  %v3196 = vmul.f32 %v3191, %v3195
  %v3197 = vlaneseq
  %v3198 = vshrl.u32 %v3197, 7
  %v3199 = vsub.s32 6, %v3198
  %v3200 = vrot.slane %v2901, %v3199
  %v3201 = vadd.f32 %v3196, %v3200
  %v3202 = vmax.f32 %v3201, -100.0
  %v3203 = vmin.f32 %v3202, 100.0
  %v3204 = vld [vmem:[%s3] sm:$0xff]
  %v3205 = vld [vmem:[%s3 + $0x8] sm:$0xff]
  %v3206 = vld [vmem:[%s3 + $0x10] sm:$0xff]
  %v3207 = vld [vmem:[%s3 + $0x18] sm:$0xff]
  %v3208 = vld [vmem:[%s3 + $0x20] sm:$0xff]
  %v3209 = vld [vmem:[%s3 + $0x28] sm:$0xff]
  %v3210 = vld [vmem:[%s3 + $0x30] sm:$0xff]
  %v3211 = vld [vmem:[%s3 + $0x38] sm:$0xff]
  %v3212 = vld [vmem:[%s3 + $0x40] sm:$0xff]
  %v3213 = vld [vmem:[%s3 + $0x48] sm:$0xff]
  %v3214 = vld [vmem:[%s3 + $0x50] sm:$0xff]
  %v3215 = vld [vmem:[%s3 + $0x58] sm:$0xff]
  %v3216 = vld [vmem:[%s3 + $0x60] sm:$0xff]
  %v3217 = vld [vmem:[%s3 + $0x68] sm:$0xff]
  %v3218 = vld [vmem:[%s3 + $0x70] sm:$0xff]
  %v3219 = vld [vmem:[%s3 + $0x78] sm:$0xff]
  %v3220 = vld [vmem:[%s3 + $0x80] sm:$0xff]
  %v3221 = vld [vmem:[%s3 + $0x88] sm:$0xff]
  %v3222 = vld [vmem:[%s3 + $0x90] sm:$0xff]
  %v3223 = vld [vmem:[%s3 + $0x98] sm:$0xff]
  %v3224 = vld [vmem:[%s3 + $0xa0] sm:$0xff]
  %v3225 = vld [vmem:[%s3 + $0xa8] sm:$0xff]
  %v3226 = vld [vmem:[%s3 + $0xb0] sm:$0xff]
  %v3227 = vld [vmem:[%s3 + $0xb8] sm:$0xff]
  %v3228 = vld [vmem:[%s3 + $0xc0] sm:$0xff]
  %v3229 = vld [vmem:[%s3 + $0xc8] sm:$0xff]
  %v3230 = vld [vmem:[%s3 + $0xd0] sm:$0xff]
  %v3231 = vld [vmem:[%s3 + $0xd8] sm:$0xff]
  %v3232 = vld [vmem:[%s3 + $0xe0] sm:$0xff]
  %v3233 = vld [vmem:[%s3 + $0xe8] sm:$0xff]
  %v3234 = vld [vmem:[%s3 + $0xf0] sm:$0xff]
  %v3235 = vld [vmem:[%s3 + $0xf8] sm:$0xff]
  %v3236 = vld [vmem:[%s3 + $0x100] sm:$0xff]
  %v3237 = vld [vmem:[%s3 + $0x108] sm:$0xff]
  %v3238 = vld [vmem:[%s3 + $0x110] sm:$0xff]
  %v3239 = vld [vmem:[%s3 + $0x118] sm:$0xff]
  %v3240 = vld [vmem:[%s3 + $0x120] sm:$0xff]
  %3242 = vrot.lane.b32.xlu0 %v2568, 32
  %v3243 = vpop.permute.xlu0 %3242
  %3246 = vrot.lane.b32.xlu0 %v3203, 64
  %v3247 = vpop.permute.xlu0 %3246
  %v3249 = vsel %vm135, %v1933, %v3243
  %v3250 = vsel %vm329, %v3249, %v3247
  %v3251 = vlaneseq
  %v3252 = vshrl.u32 %v3251, 7
  %v3253 = vsub.s32 0, %v3252
  %v3254 = vrot.slane %v3240, %v3253
  %vm3255 = vcmask 785408
  %v3257 = vsel %vm3255, %v3250, 0
  %3259 = vmatprep.subr.mxu0 0.0
  %3260 = vmatpush1.msra.mxu0 0.0
  %3261 = vmatprep.subr.mxu0 0.0
  %3262 = vmatpush1.msra.mxu0 0.0
  %3263 = vmatprep.subr.mxu0 0.0
  %3264 = vmatpush1.msra.mxu0 0.0
  %3265 = vmatprep.subr.mxu0 0.0
  %3266 = vmatpush1.msra.mxu0 0.0
  %3267 = vmatprep.subr.mxu0 0.0
  %3268 = vmatpush1.msra.mxu0 %v3215
  %3269 = vmatprep.subr.mxu0 0.0
  %3270 = vmatpush1.msra.mxu0 %v3214
  %3271 = vmatprep.subr.mxu0 0.0
  %3272 = vmatpush1.msra.mxu0 %v3213
  %3273 = vmatprep.subr.mxu0 0.0
  %3274 = vmatpush1.msra.mxu0 %v3212
  %3275 = vmatprep.subr.mxu0 0.0
  %3276 = vmatpush1.msra.mxu0 %v3211
  %3277 = vmatprep.subr.mxu0 0.0
  %3278 = vmatpush1.msra.mxu0 %v3210
  %3279 = vmatprep.subr.mxu0 0.0
  %3280 = vmatpush1.msra.mxu0 %v3209
  %3281 = vmatprep.subr.mxu0 0.0
  %3282 = vmatpush1.msra.mxu0 %v3208
  %3283 = vmatprep.subr.mxu0 0.0
  %3284 = vmatpush1.msra.mxu0 %v3207
  %3285 = vmatprep.subr.mxu0 0.0
  %3286 = vmatpush1.msra.mxu0 %v3206
  %3287 = vmatprep.subr.mxu0 0.0
  %3288 = vmatpush1.msra.mxu0 %v3205
  %3289 = vmatprep.subr.mxu0 0.0
  %3290 = vmatpush1.msra.mxu0 %v3204
  %3291 = vmatprep.subr.mxu0 0.0
  %3292 = vmatpush2.msra.mxu0 0.0
  %3293 = vmatprep.subr.mxu0 0.0
  %3294 = vmatpush2.msra.mxu0 0.0
  %3295 = vmatprep.subr.mxu0 0.0
  %3296 = vmatpush2.msra.mxu0 0.0
  %3297 = vmatprep.subr.mxu0 0.0
  %3298 = vmatpush2.msra.mxu0 0.0
  %3299 = vmatprep.subr.mxu0 0.0
  %3300 = vmatpush2.msra.mxu0 0.0
  %3301 = vmatprep.subr.mxu0 0.0
  %3302 = vmatpush2.msra.mxu0 0.0
  %3303 = vmatprep.subr.mxu0 0.0
  %3304 = vmatpush2.msra.mxu0 0.0
  %3305 = vmatprep.subr.mxu0 0.0
  %3306 = vmatpush2.msra.mxu0 0.0
  %3307 = vmatprep.subr.mxu0 0.0
  %3308 = vmatpush2.msra.mxu0 0.0
  %3309 = vmatprep.subr.mxu0 0.0
  %3310 = vmatpush2.msra.mxu0 0.0
  %3311 = vmatprep.subr.mxu0 0.0
  %3312 = vmatpush2.msra.mxu0 0.0
  %3313 = vmatprep.subr.mxu0 0.0
  %3314 = vmatpush2.msra.mxu0 0.0
  %3315 = vmatprep.subr.mxu0 0.0
  %3316 = vmatpush2.msra.mxu0 0.0
  %3317 = vmatprep.subr.mxu0 0.0
  %3318 = vmatpush2.msra.mxu0 0.0
  %3319 = vmatprep.subr.mxu0 0.0
  %3320 = vmatpush2.msra.mxu0 0.0
  %3321 = vmatprep.subr.mxu0 0.0
  %3322 = vmatpush2.msra.mxu0 0.0
  %3323 = vmatprep.mubr.f32.mxu0 0.0
  %3324 = vmatmul.mubr.f32.gmra.mxu0 %v3257
  %v3325 = vpop.f32.mrf.mxu0
  %v3326 = vadd.f32 %v3254, %v3325
  %v3327 = vpop.f32.mrf.mxu0
  %3328 = vdwg.mxu0
  %v3329 = vmax.f32 %v3326, 0.0
  %v3330 = vlaneseq
  %v3331 = vshrl.u32 %v3330, 7
  %v3332 = vsub.s32 1, %v3331
  %v3333 = vrot.slane %v3240, %v3332
  %v3335 = vsel %vm3255, %v3329, 0
  %3337 = vmatprep.subr.mxu0 0.0
  %3338 = vmatpush1.msra.mxu0 0.0
  %3339 = vmatprep.subr.mxu0 0.0
  %3340 = vmatpush1.msra.mxu0 0.0
  %3341 = vmatprep.subr.mxu0 0.0
  %3342 = vmatpush1.msra.mxu0 0.0
  %3343 = vmatprep.subr.mxu0 0.0
  %3344 = vmatpush1.msra.mxu0 0.0
  %3345 = vmatprep.subr.mxu0 0.0
  %3346 = vmatpush1.msra.mxu0 %v3227
  %3347 = vmatprep.subr.mxu0 0.0
  %3348 = vmatpush1.msra.mxu0 %v3226
  %3349 = vmatprep.subr.mxu0 0.0
  %3350 = vmatpush1.msra.mxu0 %v3225
  %3351 = vmatprep.subr.mxu0 0.0
  %3352 = vmatpush1.msra.mxu0 %v3224
  %3353 = vmatprep.subr.mxu0 0.0
  %3354 = vmatpush1.msra.mxu0 %v3223
  %3355 = vmatprep.subr.mxu0 0.0
  %3356 = vmatpush1.msra.mxu0 %v3222
  %3357 = vmatprep.subr.mxu0 0.0
  %3358 = vmatpush1.msra.mxu0 %v3221
  %3359 = vmatprep.subr.mxu0 0.0
  %3360 = vmatpush1.msra.mxu0 %v3220
  %3361 = vmatprep.subr.mxu0 0.0
  %3362 = vmatpush1.msra.mxu0 %v3219
  %3363 = vmatprep.subr.mxu0 0.0
  %3364 = vmatpush1.msra.mxu0 %v3218
  %3365 = vmatprep.subr.mxu0 0.0
  %3366 = vmatpush1.msra.mxu0 %v3217
  %3367 = vmatprep.subr.mxu0 0.0
  %3368 = vmatpush1.msra.mxu0 %v3216
  %3369 = vmatprep.subr.mxu0 0.0
  %3370 = vmatpush2.msra.mxu0 0.0
  %3371 = vmatprep.subr.mxu0 0.0
  %3372 = vmatpush2.msra.mxu0 0.0
  %3373 = vmatprep.subr.mxu0 0.0
  %3374 = vmatpush2.msra.mxu0 0.0
  %3375 = vmatprep.subr.mxu0 0.0
  %3376 = vmatpush2.msra.mxu0 0.0
  %3377 = vmatprep.subr.mxu0 0.0
  %3378 = vmatpush2.msra.mxu0 0.0
  %3379 = vmatprep.subr.mxu0 0.0
  %3380 = vmatpush2.msra.mxu0 0.0
  %3381 = vmatprep.subr.mxu0 0.0
  %3382 = vmatpush2.msra.mxu0 0.0
  %3383 = vmatprep.subr.mxu0 0.0
  %3384 = vmatpush2.msra.mxu0 0.0
  %3385 = vmatprep.subr.mxu0 0.0
  %3386 = vmatpush2.msra.mxu0 0.0
  %3387 = vmatprep.subr.mxu0 0.0
  %3388 = vmatpush2.msra.mxu0 0.0
  %3389 = vmatprep.subr.mxu0 0.0
  %3390 = vmatpush2.msra.mxu0 0.0
  %3391 = vmatprep.subr.mxu0 0.0
  %3392 = vmatpush2.msra.mxu0 0.0
  %3393 = vmatprep.subr.mxu0 0.0
  %3394 = vmatpush2.msra.mxu0 0.0
  %3395 = vmatprep.subr.mxu0 0.0
  %3396 = vmatpush2.msra.mxu0 0.0
  %3397 = vmatprep.subr.mxu0 0.0
  %3398 = vmatpush2.msra.mxu0 0.0
  %3399 = vmatprep.subr.mxu0 0.0
  %3400 = vmatpush2.msra.mxu0 0.0
  %3401 = vmatprep.mubr.f32.mxu0 0.0
  %3402 = vmatmul.mubr.f32.gmra.mxu0 %v3335
  %v3403 = vpop.f32.mrf.mxu0
  %v3404 = vadd.f32 %v3333, %v3403
  %v3405 = vpop.f32.mrf.mxu0
  %3406 = vdwg.mxu0
  %v3407 = vmax.f32 %v3404, 0.0
  %v3408 = vlaneseq
  %v3409 = vshrl.u32 %v3408, 7
  %v3410 = vsub.s32 2, %v3409
  %v3411 = vrot.slane %v3240, %v3410
  %v3413 = vsel %vm3255, %v3407, 0
  %3415 = vmatprep.subr.mxu0 0.0
  %3416 = vmatpush1.msra.mxu0 0.0
  %3417 = vmatprep.subr.mxu0 0.0
  %3418 = vmatpush1.msra.mxu0 0.0
  %3419 = vmatprep.subr.mxu0 0.0
  %3420 = vmatpush1.msra.mxu0 0.0
  %3421 = vmatprep.subr.mxu0 0.0
  %3422 = vmatpush1.msra.mxu0 0.0
  %3423 = vmatprep.subr.mxu0 0.0
  %3424 = vmatpush1.msra.mxu0 %v3239
  %3425 = vmatprep.subr.mxu0 0.0
  %3426 = vmatpush1.msra.mxu0 %v3238
  %3427 = vmatprep.subr.mxu0 0.0
  %3428 = vmatpush1.msra.mxu0 %v3237
  %3429 = vmatprep.subr.mxu0 0.0
  %3430 = vmatpush1.msra.mxu0 %v3236
  %3431 = vmatprep.subr.mxu0 0.0
  %3432 = vmatpush1.msra.mxu0 %v3235
  %3433 = vmatprep.subr.mxu0 0.0
  %3434 = vmatpush1.msra.mxu0 %v3234
  %3435 = vmatprep.subr.mxu0 0.0
  %3436 = vmatpush1.msra.mxu0 %v3233
  %3437 = vmatprep.subr.mxu0 0.0
  %3438 = vmatpush1.msra.mxu0 %v3232
  %3439 = vmatprep.subr.mxu0 0.0
  %3440 = vmatpush1.msra.mxu0 %v3231
  %3441 = vmatprep.subr.mxu0 0.0
  %3442 = vmatpush1.msra.mxu0 %v3230
  %3443 = vmatprep.subr.mxu0 0.0
  %3444 = vmatpush1.msra.mxu0 %v3229
  %3445 = vmatprep.subr.mxu0 0.0
  %3446 = vmatpush1.msra.mxu0 %v3228
  %3447 = vmatprep.subr.mxu0 0.0
  %3448 = vmatpush2.msra.mxu0 0.0
  %3449 = vmatprep.subr.mxu0 0.0
  %3450 = vmatpush2.msra.mxu0 0.0
  %3451 = vmatprep.subr.mxu0 0.0
  %3452 = vmatpush2.msra.mxu0 0.0
  %3453 = vmatprep.subr.mxu0 0.0
  %3454 = vmatpush2.msra.mxu0 0.0
  %3455 = vmatprep.subr.mxu0 0.0
  %3456 = vmatpush2.msra.mxu0 0.0
  %3457 = vmatprep.subr.mxu0 0.0
  %3458 = vmatpush2.msra.mxu0 0.0
  %3459 = vmatprep.subr.mxu0 0.0
  %3460 = vmatpush2.msra.mxu0 0.0
  %3461 = vmatprep.subr.mxu0 0.0
  %3462 = vmatpush2.msra.mxu0 0.0
  %3463 = vmatprep.subr.mxu0 0.0
  %3464 = vmatpush2.msra.mxu0 0.0
  %3465 = vmatprep.subr.mxu0 0.0
  %3466 = vmatpush2.msra.mxu0 0.0
  %3467 = vmatprep.subr.mxu0 0.0
  %3468 = vmatpush2.msra.mxu0 0.0
  %3469 = vmatprep.subr.mxu0 0.0
  %3470 = vmatpush2.msra.mxu0 0.0
  %3471 = vmatprep.subr.mxu0 0.0
  %3472 = vmatpush2.msra.mxu0 0.0
  %3473 = vmatprep.subr.mxu0 0.0
  %3474 = vmatpush2.msra.mxu0 0.0
  %3475 = vmatprep.subr.mxu0 0.0
  %3476 = vmatpush2.msra.mxu0 0.0
  %3477 = vmatprep.subr.mxu0 0.0
  %3478 = vmatpush2.msra.mxu0 0.0
  %3479 = vmatprep.mubr.f32.mxu0 0.0
  %3480 = vmatmul.mubr.f32.gmra.mxu0 %v3413
  %v3481 = vpop.f32.mrf.mxu0
  %v3482 = vadd.f32 %v3411, %v3481
  %v3483 = vpop.f32.mrf.mxu0
  %3484 = vdwg.mxu0
  %v3485 = vxor.u32 %v3482, 2147483648
  %v3486 = vmul.f32 %v3485, 1.442695
  %v3487 = vpow.pop %v3486
  %v3488 = vadd.f32 %v3487, 1.0
  %v3489 = vrcp.pop %v3488
  %v3490 = vmul.f32 1.0, %v3489
  %v3491 = vmax.f32 %v3490, 1e-06
  %v3492 = vmin.f32 %v3491, 0.999999
  %3493 = vst [vmem:[%s4] sm:$0xff] %v3492
  // Predicated region
  $region18: #{forward.1} parent=0 // pred_check
    _
  $region19: #{forward.1} parent=0 // pred_check_branch
    %3495 = sbr.rel (0) target = $region21
  $region20: #{forward.1} parent=0 // pred_region
    _
  $region21: #{forward.1} parent=0 // pred_fallthru
    _
  // Predicated region
  $region22: #{forward.1} parent=0 // pred_check
    _
  $region23: #{forward.1} parent=0 // pred_check_branch
    %3497 = sbr.rel (0) target = $region25
  $region24: #{forward.1} parent=0 // pred_region
    _
  $region25: #{forward.1} parent=0 // pred_fallthru
    _

</llo_original>
